<compile_context>
chip_gen: v7x
topology: tpu7x:2x2x1
jax: 0.10.0
libtpu: 0.0.40
codegen_flags: <defaults>
</compile_context>

<pallas_src>
import numpy as np
import jax
import jax.numpy as jnp
from jax.experimental import pallas as pl
from jax.experimental.pallas import tpu as pltpu

# ----- small config consistent with the module structure (defaults scaled down) -----
MEL_BINS = 8        # vae input_dim / policy mel_bins
OUTPUT_DIM = 8      # policy output_dim
HIDDEN = 32         # hidden_dim
LATENT = 8          # latent_dim
LAYERS = 2          # number of down/up conv blocks
MIN_INPUT_SIZE = 40
KSIZE = 7
BN_EPS = 1e-5


# ===================== static (host / trace-time) helpers =====================

def _enc_out_len(lin):
    return (lin + 2 - KSIZE) // 2 + 1


def encoded_length(L):
    L = max(L, MIN_INPUT_SIZE)
    for _ in range(LAYERS):
        L = _enc_out_len(L)
    return L


def _interp_phase_mats(lsrc, ltarget, lkeep):
    """F.interpolate(mode='linear', align_corners=False) lsrc->ltarget, keeping the first
    lkeep rows (drops the min_input_size pad tail).  Columns are split into even / odd
    source positions to match the decoder's polyphase output layout."""
    dst = np.arange(ltarget, dtype=np.float64)
    scale = lsrc / ltarget
    src = np.maximum(scale * (dst + 0.5) - 0.5, 0.0)
    i0 = np.clip(np.floor(src).astype(np.int64), 0, lsrc - 1)
    i1 = np.minimum(i0 + 1, lsrc - 1)
    w1 = (src - i0).astype(np.float32)
    w0 = (1.0 - w1).astype(np.float32)
    A = np.zeros((ltarget, lsrc), np.float32)
    A[np.arange(ltarget), i0] += w0
    A[np.arange(ltarget), i1] += w1
    A = A[:lkeep]
    return np.ascontiguousarray(A[:, 0::2]), np.ascontiguousarray(A[:, 1::2])


# ============================= parameters =============================

def init_params(key):
    ks = iter(jax.random.split(key, 64))

    def nrm(shape, s=0.05):
        return s * jax.random.normal(next(ks), shape, jnp.float32)

    p = {'enc_in_w': nrm((MEL_BINS, HIDDEN)), 'enc_in_b': nrm((HIDDEN,))}
    for l in range(LAYERS):
        # tap-major conv weight: w[k] is the (Cin, Cout) matrix of tap k
        # (to load a real checkpoint: w[k] = torch_conv_weight[:, :, k].T)
        p[f'enc_{l}_w'] = nrm((KSIZE, HIDDEN, HIDDEN))
        p[f'enc_{l}_b'] = nrm((HIDDEN,))
        p[f'enc_{l}_g'] = jnp.ones((HIDDEN,), jnp.float32)       # BN gamma
        p[f'enc_{l}_beta'] = jnp.zeros((HIDDEN,), jnp.float32)   # BN beta
    p['enc_out_w'] = nrm((HIDDEN, HIDDEN)); p['enc_out_b'] = nrm((HIDDEN,))
    p['mu_w'] = nrm((HIDDEN, LATENT)); p['mu_b'] = nrm((LATENT,))
    p['lv_w'] = nrm((HIDDEN, LATENT)); p['lv_b'] = nrm((LATENT,))
    p['dec_in_w'] = nrm((LATENT, HIDDEN)); p['dec_in_b'] = nrm((HIDDEN,))
    for l in range(LAYERS):
        # ConvTranspose taps: wt[k] = torch_convT_weight[:, :, k]  (shape Cin, Cout)
        p[f'dec_{l}_wt'] = nrm((KSIZE, HIDDEN, HIDDEN))
        p[f'dec_{l}_b'] = nrm((HIDDEN,))
        p[f'dec_{l}_g'] = jnp.ones((HIDDEN,), jnp.float32)
        p[f'dec_{l}_beta'] = jnp.zeros((HIDDEN,), jnp.float32)
    p['out_w'] = nrm((HIDDEN, OUTPUT_DIM)); p['out_b'] = nrm((OUTPUT_DIM,))
    return p


# ============================= fused forward =============================

@jax.jit
def generative_policy_forward(params, x_ncl, lengths, eps_ncl):
    """x_ncl: (N, MEL_BINS, L) NCL; lengths: (N,) int; eps_ncl: (N, LATENT, L_enc)."""
    N, _, L = x_ncl.shape
    pad = max(0, MIN_INPUT_SIZE - L)
    Lp = L + pad
    H = HIDDEN

    # ---- static per-layer lengths ----
    enc_out_lens = []
    lcur = Lp
    for _ in range(LAYERS):
        lcur = _enc_out_len(lcur)
        enc_out_lens.append(lcur)
    Lo = lcur
    dec_in_lens = []
    lcur = Lo
    for _ in range(LAYERS):
        dec_in_lens.append(lcur)
        lcur = 2 * lcur + 3
    Ld = lcur
    se_last, so_last = dec_in_lens[-1] + 2, dec_in_lens[-1] + 1

    # ---- layout glue (a few cheap XLA ops): NCL -> time-rows, channels-last ----
    x = jnp.transpose(x_ncl, (0, 2, 1)).astype(jnp.float32)
    if pad > 0:
        x = jnp.pad(x, ((0, 0), (0, pad), (0, 0)))
    x2 = x.reshape(N * Lp, MEL_BINS)
    eps2 = jnp.transpose(eps_ncl, (0, 2, 1)).astype(jnp.float32).reshape(N * Lo, LATENT)

    # exact PyTorch formula: (lengths * out_length + in_length - 1) // in_length
    ds_lengths = ((lengths.astype(jnp.int32) * Lo + Lp - 1) // Lp).astype(jnp.int32)

    # ---- pack EVERY matmul weight into ONE bf16 slab of shape (rows, HIDDEN) ----
    woff, wpieces = {}, []
    _off = [0]

    def addw(name, w):
        wpieces.append(w.astype(jnp.float32))
        woff[name] = _off[0]
        _off[0] += w.shape[0]

    addw('enc_in', params['enc_in_w'])                                     # (MEL_BINS, H)
    for l in range(LAYERS):
        addw(f'enc{l}', params[f'enc_{l}_w'].reshape(KSIZE * H, H))        # 7 taps stacked
    # fold the trailing enc_out 1x1 into the mu/logvar heads (all affine, no nonlinearity)
    muw = params['enc_out_w'] @ params['mu_w']
    lvw = params['enc_out_w'] @ params['lv_w']
    mub = params['enc_out_b'] @ params['mu_w'] + params['mu_b']
    lvb = params['enc_out_b'] @ params['lv_w'] + params['lv_b']
    head_w = jnp.zeros((H, H), jnp.float32)
    head_w = head_w.at[:, :LATENT].set(muw).at[:, LATENT:2 * LATENT].set(lvw)
    addw('head', head_w)
    addw('dec_in', params['dec_in_w'])                                     # (LATENT, H)
    for l in range(LAYERS):
        wt = params[f'dec_{l}_wt']
        # polyphase ConvT taps: even outputs use (Wt5, Wt3, Wt1); odd use (Wt6, Wt4, Wt2, Wt0)
        addw(f'dece{l}', jnp.concatenate([wt[5], wt[3], wt[1]], axis=0))            # (3H, H)
        addw(f'deco{l}', jnp.concatenate([wt[6], wt[4], wt[2], wt[0]], axis=0))     # (4H, H)
    out_w_pad = jnp.zeros((H, H), jnp.float32).at[:, :OUTPUT_DIM].set(params['out_w'])
    addw('out', out_w_pad)
    wslab = jnp.concatenate(wpieces, axis=0).astype(jnp.bfloat16)

    # ---- pack every bias / BN parameter into ONE f32 slab of shape (rows, HIDDEN) ----
    pidx, prows = {}, []

    def addp(name, v):
        pidx[name] = len(prows)
        v = jnp.asarray(v, jnp.float32).reshape(-1)
        prows.append(jnp.pad(v, (0, H - v.shape[0])))

    addp('enc_in_b', params['enc_in_b'])
    for l in range(LAYERS):
        addp(f'enc{l}_b', params[f'enc_{l}_b'])
        addp(f'enc{l}_g', params[f'enc_{l}_g'])
        addp(f'enc{l}_bt', params[f'enc_{l}_beta'])
    addp('head_b', jnp.concatenate([mub, lvb]))
    addp('dec_in_b', params['dec_in_b'])
    for l in range(LAYERS):
        addp(f'dec{l}_b', params[f'dec_{l}_b'])
        addp(f'dec{l}_g', params[f'dec_{l}_g'])
        addp(f'dec{l}_bt', params[f'dec_{l}_beta'])
    addp('out_b', params['out_b'])
    pslab = jnp.stack(prows, axis=0)

    Ae_np, Ao_np = _interp_phase_mats(Ld, Lp, L)
    Ae = jnp.asarray(Ae_np, jnp.bfloat16)
    Ao = jnp.asarray(Ao_np, jnp.bfloat16)

    # ============================ the fused kernel ============================
    def kernel(dslen_ref, x_ref, eps_ref, w_ref, p_ref, ae_ref, ao_ref, out_ref,
               xpad, ecol, xq, cole, colo):
        f32, bf16 = jnp.float32, jnp.bfloat16

        def Wb(name, rows):
            o = woff[name]
            return w_ref[o:o + rows, :]

        def Pb(name):
            i = pidx[name]
            return p_ref[i:i + 1, :]

        def mm(a, w):  # bf16 MXU operands, f32 accumulation
            return jnp.dot(a.astype(bf16), w, preferred_element_type=f32)

        def bn_silu(parts, gamma, beta, count):
            # single-pass BatchNorm1d (training-mode batch stats, biased var) + SiLU
            inv = 1.0 / float(count)
            s = sum(jnp.sum(v, axis=0, keepdims=True) for v in parts)
            sq = sum(jnp.sum(v * v, axis=0, keepdims=True) for v in parts)
            mean = s * inv
            var = sq * inv - mean * mean
            scale = gamma * jax.lax.rsqrt(var + BN_EPS)
            shift = beta - mean * scale
            outs = []
            for v in parts:
                y = v * scale + shift
                outs.append(y * jax.nn.sigmoid(y))
            return outs

        zrow = jnp.zeros((1, H), f32)
        zrow2 = jnp.zeros((2, H), f32)

        # ---------------- VAE encoder (frozen / no_grad in the reference) ----------------
        # 1x1 input conv, batched over all samples and time steps in one MXU call.
        h = mm(x_ref[...], Wb('enc_in', MEL_BINS)) + Pb('enc_in_b')

        # Conv1d(k=7, s=2, p=1) blocks: pad into scratch, stride-2 im2col loads,
        # ONE wide-K (7*H) MXU dot per layer, single-pass BN + SiLU.
        lin = Lp
        for l in range(LAYERS):
            lout = enc_out_lens[l]
            for n in range(N):
                xpad[0:1, :] = zrow
                xpad[1:1 + lin, :] = h[n * lin:(n + 1) * lin, :]
                xpad[1 + lin:2 + lin, :] = zrow
                for k in range(KSIZE):
                    ecol[n * lout:(n + 1) * lout, k * H:(k + 1) * H] = \
                        xpad[pl.ds(k, lout, stride=2), :]
            conv = mm(ecol[0:N * lout, :], Wb(f'enc{l}', KSIZE * H)) + Pb(f'enc{l}_b')
            (h,) = bn_silu([conv], Pb(f'enc{l}_g'), Pb(f'enc{l}_bt'), N * lout)
            lin = lout

        # ---- folded enc_out + mu/logvar heads, reparameterize, in-kernel z mask ----
        hd = mm(h, Wb('head', H))
        hb = Pb('head_b')
        mu = hd[:, 0:LATENT] + hb[:, 0:LATENT]
        lv = hd[:, LATENT:2 * LATENT] + hb[:, LATENT:2 * LATENT]
        z = mu + eps_ref[...] * jnp.exp(0.5 * lv)
        ridx = jax.lax.broadcasted_iota(jnp.int32, (N * Lo, LATENT), 0)
        keep = ridx < 0
        for n in range(N):
            keep = keep | ((ridx >= n * Lo) & (ridx < n * Lo + dslen_ref[n]))
        z = jnp.where(keep, z, 0.0)
        # TODO(synk): the reference `z, mu, logvar, eps = self.vae.encode(...)` unpacks 4 of the
        # 5 returned values (spec bug) and the counts!=None repeat_interleave path is not
        # exercised here (counts=None); mu/logvar are not returned by GenerativePolicy.forward.

        # ---------------- VAE decoder: polyphase ConvTranspose1d(k=7, s=2, p=1) ----------------
        d = mm(z, Wb('dec_in', LATENT)) + Pb('dec_in_b')
        lc = Lo
        prev_lc = None
        act_e = act_o = None
        for l in range(LAYERS):
            se, so = lc + 2, lc + 1
            for n in range(N):
                xq[0:2, :] = zrow2
                xq[lc + 2:lc + 4, :] = zrow2
                if l == 0:
                    xq[2:2 + lc, :] = d[n * lc:(n + 1) * lc, :]
                else:
                    pse, pso = prev_lc + 2, prev_lc + 1
                    # interleave previous even/odd output phases back into positional
                    # order with stride-2 stores (replaces the old 0/1 matmul recombine)
                    xq[pl.ds(2, pse, stride=2), :] = act_e[n * pse:(n + 1) * pse, :]
                    xq[pl.ds(3, pso, stride=2), :] = act_o[n * pso:(n + 1) * pso, :]
                for m in range(3):      # even-output taps (Wt5, Wt3, Wt1)
                    cole[n * se:(n + 1) * se, m * H:(m + 1) * H] = xq[m:m + se, :]
                for m in range(4):      # odd-output taps (Wt6, Wt4, Wt2, Wt0)
                    colo[n * so:(n + 1) * so, m * H:(m + 1) * H] = xq[m:m + so, :]
            ye = mm(cole[0:N * se, :], Wb(f'dece{l}', 3 * H)) + Pb(f'dec{l}_b')
            yo = mm(colo[0:N * so, :], Wb(f'deco{l}', 4 * H)) + Pb(f'dec{l}_b')
            act_e, act_o = bn_silu([ye, yo], Pb(f'dec{l}_g'), Pb(f'dec{l}_bt'),
                                   N * (se + so))
            prev_lc = lc
            lc = 2 * lc + 3

        # ---- output 1x1 conv BEFORE interpolation (commutes: interp rows sum to 1),
        #      fused linear interpolation + pad-tail crop ----
        ob = Pb('out_b')[:, 0:OUTPUT_DIM]
        oe = mm(act_e, Wb('out', H))[:, 0:OUTPUT_DIM] + ob
        oo = mm(act_o, Wb('out', H))[:, 0:OUTPUT_DIM] + ob
        for n in range(N):
            out_ref[n * L:(n + 1) * L, :] = (
                jnp.dot(ae_ref[...], oe[n * se_last:(n + 1) * se_last, :].astype(bf16),
                        preferred_element_type=f32)
                + jnp.dot(ao_ref[...], oo[n * so_last:(n + 1) * so_last, :].astype(bf16),
                          preferred_element_type=f32))
        # TODO(synk): a fully lane-dense layout (channels on sublanes, L on lanes, W^T @ X)
        # would also make this final store (OUTPUT_DIM, N*L) instead of a narrow (N*L, 8) one.

    out2 = pl.pallas_call(
        kernel,
        out_shape=jax.ShapeDtypeStruct((N * L, OUTPUT_DIM), jnp.float32),
        in_specs=[
            pl.BlockSpec(memory_space=pltpu.MemorySpace.SMEM),   # downsampled lengths
            pl.BlockSpec(memory_space=pltpu.MemorySpace.VMEM),   # x (time-rows, channels)
            pl.BlockSpec(memory_space=pltpu.MemorySpace.VMEM),   # eps
            pl.BlockSpec(memory_space=pltpu.MemorySpace.VMEM),   # packed bf16 weight slab
            pl.BlockSpec(memory_space=pltpu.MemorySpace.VMEM),   # packed f32 bias/BN slab
            pl.BlockSpec(memory_space=pltpu.MemorySpace.VMEM),   # interp (even source cols)
            pl.BlockSpec(memory_space=pltpu.MemorySpace.VMEM),   # interp (odd source cols)
        ],
        out_specs=pl.BlockSpec(memory_space=pltpu.MemorySpace.VMEM),
        scratch_shapes=[
            pltpu.VMEM((Lp + 2, H), jnp.float32),                       # padded conv input
            pltpu.VMEM((N * enc_out_lens[0], KSIZE * H), jnp.float32),  # encoder im2col
            pltpu.VMEM((dec_in_lens[-1] + 4, H), jnp.float32),          # padded ConvT input
            pltpu.VMEM((N * se_last, 3 * H), jnp.float32),              # ConvT even-phase im2col
            pltpu.VMEM((N * so_last, 4 * H), jnp.float32),              # ConvT odd-phase im2col
        ],
        compiler_params=pltpu.CompilerParams(vmem_limit_bytes=32 * 1024 * 1024),
    )(ds_lengths, x2, eps2, wslab, pslab, Ae, Ao)

    out = jnp.transpose(out2.reshape(N, L, OUTPUT_DIM), (0, 2, 1))  # back to NCL
    return out, eps_ncl


# ============================= main =============================

if __name__ == "__main__":
    key = jax.random.PRNGKey(0)
    kp, kx, ke = jax.random.split(key, 3)
    params = init_params(kp)

    N, L = 2, 24                                  # L < MIN_INPUT_SIZE exercises the pad path
    x = jax.random.normal(kx, (N, MEL_BINS, L), jnp.float32)
    lengths = jnp.array([24, 16], dtype=jnp.int32)

    L_enc = encoded_length(L)
    eps = jax.random.normal(ke, (N, LATENT, L_enc), jnp.float32)

    out, eps_out = generative_policy_forward(params, x, lengths, eps)
    jax.block_until_ready((out, eps_out))
    assert out.shape == (N, OUTPUT_DIM, L), out.shape
    assert eps_out.shape == (N, LATENT, L_enc), eps_out.shape
    print("KERNEL_OK")
</pallas_src>

<mosaic_0001>
module attributes {stable_mosaic.version = 11 : i64} {
  func.func @kernel(%arg0: memref<2xi32, #tpu.memory_space<smem>>, %arg1: memref<80x8xf32, #tpu.memory_space<vmem>>, %arg2: memref<14x8xf32, #tpu.memory_space<vmem>>, %arg3: memref<976x32xbf16, #tpu.memory_space<vmem>>, %arg4: memref<16x32xf32, #tpu.memory_space<vmem>>, %arg5: memref<24x19xbf16, #tpu.memory_space<vmem>>, %arg6: memref<24x18xbf16, #tpu.memory_space<vmem>>, %arg7: memref<48x8xf32, #tpu.memory_space<vmem>>, %arg8: memref<42x32xf32, #tpu.memory_space<vmem>>, %arg9: memref<36x224xf32, #tpu.memory_space<vmem>>, %arg10: memref<21x32xf32, #tpu.memory_space<vmem>>, %arg11: memref<38x96xf32, #tpu.memory_space<vmem>>, %arg12: memref<36x128xf32, #tpu.memory_space<vmem>>) attributes {dimension_semantics = [], scalar_prefetch = 0 : i64, scratch_operands = 5 : i64, tpu.core_type = #tpu.core_type<tc>} {
    %cst = arith.constant 0.000000e+00 : f32
    %0 = vector.broadcast %cst : f32 to vector<1x32xf32>
    %cst_0 = arith.constant 0.000000e+00 : f32
    %1 = vector.broadcast %cst_0 : f32 to vector<2x32xf32>
    %c0 = arith.constant 0 : index
    %c0_1 = arith.constant 0 : index
    %2 = vector.load %arg1[%c0, %c0_1] : memref<80x8xf32, #tpu.memory_space<vmem>>, vector<80x8xf32>
    %c0_2 = arith.constant 0 : index
    %c0_3 = arith.constant 0 : index
    %3 = vector.load %arg3[%c0_2, %c0_3] : memref<976x32xbf16, #tpu.memory_space<vmem>>, vector<8x32xbf16>
    %4 = arith.truncf %2 : vector<80x8xf32> to vector<80x8xbf16>
    %cst_4 = arith.constant dense<0.000000e+00> : vector<80x32xf32>
    %5 = tpu.matmul %4, %3, %cst_4 {dimension_numbers = #tpu.dot_dimension_numbers<[1], [0], [0], [1], [0, 0, 1, 1], [], []>} : vector<80x8xbf16>, vector<8x32xbf16>, vector<80x32xf32> -> vector<80x32xf32>
    %c0_5 = arith.constant 0 : index
    %c0_6 = arith.constant 0 : index
    %6 = vector.load %arg4[%c0_5, %c0_6] : memref<16x32xf32, #tpu.memory_space<vmem>>, vector<1x32xf32>
    %7 = vector.broadcast %6 : vector<1x32xf32> to vector<80x32xf32>
    %8 = arith.addf %5, %7 : vector<80x32xf32>
    %c0_7 = arith.constant 0 : index
    %c0_8 = arith.constant 0 : index
    %9 = vector.load %arg8[%c0_7, %c0_8] : memref<42x32xf32, #tpu.memory_space<vmem>>, vector<1x32xf32>
    tpu.vector_store %arg8[%c0_7, %c0_8], %0 {strides = array<i32>} : memref<42x32xf32, #tpu.memory_space<vmem>>, vector<1x32xf32>,
    %10 = vector.extract_strided_slice %8 {offsets = [0, 0], sizes = [40, 32], strides = [1, 1]} : vector<80x32xf32> to vector<40x32xf32>
    %c1 = arith.constant 1 : index
    %c0_9 = arith.constant 0 : index
    %11 = vector.load %arg8[%c1, %c0_9] : memref<42x32xf32, #tpu.memory_space<vmem>>, vector<40x32xf32>
    tpu.vector_store %arg8[%c1, %c0_9], %10 {strides = array<i32>} : memref<42x32xf32, #tpu.memory_space<vmem>>, vector<40x32xf32>,
    %c41 = arith.constant 41 : index
    %c0_10 = arith.constant 0 : index
    %12 = vector.load %arg8[%c41, %c0_10] : memref<42x32xf32, #tpu.memory_space<vmem>>, vector<1x32xf32>
    tpu.vector_store %arg8[%c41, %c0_10], %0 {strides = array<i32>} : memref<42x32xf32, #tpu.memory_space<vmem>>, vector<1x32xf32>,
    %c0_11 = arith.constant 0 : index
    %c0_12 = arith.constant 0 : index
    %13 = tpu.strided_load %arg8[%c0_11, %c0_12] {strides = array<i32: 2, 1>} : memref<42x32xf32, #tpu.memory_space<vmem>>, vector<18x32xf32>
    %c0_13 = arith.constant 0 : index
    %c0_14 = arith.constant 0 : index
    %14 = vector.load %arg9[%c0_13, %c0_14] : memref<36x224xf32, #tpu.memory_space<vmem>>, vector<18x32xf32>
    tpu.vector_store %arg9[%c0_13, %c0_14], %13 {strides = array<i32>} : memref<36x224xf32, #tpu.memory_space<vmem>>, vector<18x32xf32>,
    %c1_15 = arith.constant 1 : index
    %c0_16 = arith.constant 0 : index
    %15 = tpu.strided_load %arg8[%c1_15, %c0_16] {strides = array<i32: 2, 1>} : memref<42x32xf32, #tpu.memory_space<vmem>>, vector<18x32xf32>
    %c0_17 = arith.constant 0 : index
    %c32 = arith.constant 32 : index
    %16 = vector.load %arg9[%c0_17, %c32] : memref<36x224xf32, #tpu.memory_space<vmem>>, vector<18x32xf32>
    tpu.vector_store %arg9[%c0_17, %c32], %15 {strides = array<i32>} : memref<36x224xf32, #tpu.memory_space<vmem>>, vector<18x32xf32>,
    %c2 = arith.constant 2 : index
    %c0_18 = arith.constant 0 : index
    %17 = tpu.strided_load %arg8[%c2, %c0_18] {strides = array<i32: 2, 1>} : memref<42x32xf32, #tpu.memory_space<vmem>>, vector<18x32xf32>
    %c0_19 = arith.constant 0 : index
    %c64 = arith.constant 64 : index
    %18 = vector.load %arg9[%c0_19, %c64] : memref<36x224xf32, #tpu.memory_space<vmem>>, vector<18x32xf32>
    tpu.vector_store %arg9[%c0_19, %c64], %17 {strides = array<i32>} : memref<36x224xf32, #tpu.memory_space<vmem>>, vector<18x32xf32>,
    %c3 = arith.constant 3 : index
    %c0_20 = arith.constant 0 : index
    %19 = tpu.strided_load %arg8[%c3, %c0_20] {strides = array<i32: 2, 1>} : memref<42x32xf32, #tpu.memory_space<vmem>>, vector<18x32xf32>
    %c0_21 = arith.constant 0 : index
    %c96 = arith.constant 96 : index
    %20 = vector.load %arg9[%c0_21, %c96] : memref<36x224xf32, #tpu.memory_space<vmem>>, vector<18x32xf32>
    tpu.vector_store %arg9[%c0_21, %c96], %19 {strides = array<i32>} : memref<36x224xf32, #tpu.memory_space<vmem>>, vector<18x32xf32>,
    %c4 = arith.constant 4 : index
    %c0_22 = arith.constant 0 : index
    %21 = tpu.strided_load %arg8[%c4, %c0_22] {strides = array<i32: 2, 1>} : memref<42x32xf32, #tpu.memory_space<vmem>>, vector<18x32xf32>
    %c0_23 = arith.constant 0 : index
    %c128 = arith.constant 128 : index
    %22 = vector.load %arg9[%c0_23, %c128] : memref<36x224xf32, #tpu.memory_space<vmem>>, vector<18x32xf32>
    tpu.vector_store %arg9[%c0_23, %c128], %21 {strides = array<i32>} : memref<36x224xf32, #tpu.memory_space<vmem>>, vector<18x32xf32>,
    %c5 = arith.constant 5 : index
    %c0_24 = arith.constant 0 : index
    %23 = tpu.strided_load %arg8[%c5, %c0_24] {strides = array<i32: 2, 1>} : memref<42x32xf32, #tpu.memory_space<vmem>>, vector<18x32xf32>
    %c0_25 = arith.constant 0 : index
    %c160 = arith.constant 160 : index
    %24 = vector.load %arg9[%c0_25, %c160] : memref<36x224xf32, #tpu.memory_space<vmem>>, vector<18x32xf32>
    tpu.vector_store %arg9[%c0_25, %c160], %23 {strides = array<i32>} : memref<36x224xf32, #tpu.memory_space<vmem>>, vector<18x32xf32>,
    %c6 = arith.constant 6 : index
    %c0_26 = arith.constant 0 : index
    %25 = tpu.strided_load %arg8[%c6, %c0_26] {strides = array<i32: 2, 1>} : memref<42x32xf32, #tpu.memory_space<vmem>>, vector<18x32xf32>
    %c0_27 = arith.constant 0 : index
    %c192 = arith.constant 192 : index
    %26 = vector.load %arg9[%c0_27, %c192] : memref<36x224xf32, #tpu.memory_space<vmem>>, vector<18x32xf32>
    tpu.vector_store %arg9[%c0_27, %c192], %25 {strides = array<i32>} : memref<36x224xf32, #tpu.memory_space<vmem>>, vector<18x32xf32>,
    %c0_28 = arith.constant 0 : index
    %c0_29 = arith.constant 0 : index
    %27 = vector.load %arg8[%c0_28, %c0_29] : memref<42x32xf32, #tpu.memory_space<vmem>>, vector<1x32xf32>
    tpu.vector_store %arg8[%c0_28, %c0_29], %0 {strides = array<i32>} : memref<42x32xf32, #tpu.memory_space<vmem>>, vector<1x32xf32>,
    %28 = vector.extract_strided_slice %8 {offsets = [40, 0], sizes = [40, 32], strides = [1, 1]} : vector<80x32xf32> to vector<40x32xf32>
    %c1_30 = arith.constant 1 : index
    %c0_31 = arith.constant 0 : index
    %29 = vector.load %arg8[%c1_30, %c0_31] : memref<42x32xf32, #tpu.memory_space<vmem>>, vector<40x32xf32>
    tpu.vector_store %arg8[%c1_30, %c0_31], %28 {strides = array<i32>} : memref<42x32xf32, #tpu.memory_space<vmem>>, vector<40x32xf32>,
    %c41_32 = arith.constant 41 : index
    %c0_33 = arith.constant 0 : index
    %30 = vector.load %arg8[%c41_32, %c0_33] : memref<42x32xf32, #tpu.memory_space<vmem>>, vector<1x32xf32>
    tpu.vector_store %arg8[%c41_32, %c0_33], %0 {strides = array<i32>} : memref<42x32xf32, #tpu.memory_space<vmem>>, vector<1x32xf32>,
    %c0_34 = arith.constant 0 : index
    %c0_35 = arith.constant 0 : index
    %31 = tpu.strided_load %arg8[%c0_34, %c0_35] {strides = array<i32: 2, 1>} : memref<42x32xf32, #tpu.memory_space<vmem>>, vector<18x32xf32>
    %c18 = arith.constant 18 : index
    %c0_36 = arith.constant 0 : index
    %32 = vector.load %arg9[%c18, %c0_36] : memref<36x224xf32, #tpu.memory_space<vmem>>, vector<18x32xf32>
    tpu.vector_store %arg9[%c18, %c0_36], %31 {strides = array<i32>} : memref<36x224xf32, #tpu.memory_space<vmem>>, vector<18x32xf32>,
    %c1_37 = arith.constant 1 : index
    %c0_38 = arith.constant 0 : index
    %33 = tpu.strided_load %arg8[%c1_37, %c0_38] {strides = array<i32: 2, 1>} : memref<42x32xf32, #tpu.memory_space<vmem>>, vector<18x32xf32>
    %c18_39 = arith.constant 18 : index
    %c32_40 = arith.constant 32 : index
    %34 = vector.load %arg9[%c18_39, %c32_40] : memref<36x224xf32, #tpu.memory_space<vmem>>, vector<18x32xf32>
    tpu.vector_store %arg9[%c18_39, %c32_40], %33 {strides = array<i32>} : memref<36x224xf32, #tpu.memory_space<vmem>>, vector<18x32xf32>,
    %c2_41 = arith.constant 2 : index
    %c0_42 = arith.constant 0 : index
    %35 = tpu.strided_load %arg8[%c2_41, %c0_42] {strides = array<i32: 2, 1>} : memref<42x32xf32, #tpu.memory_space<vmem>>, vector<18x32xf32>
    %c18_43 = arith.constant 18 : index
    %c64_44 = arith.constant 64 : index
    %36 = vector.load %arg9[%c18_43, %c64_44] : memref<36x224xf32, #tpu.memory_space<vmem>>, vector<18x32xf32>
    tpu.vector_store %arg9[%c18_43, %c64_44], %35 {strides = array<i32>} : memref<36x224xf32, #tpu.memory_space<vmem>>, vector<18x32xf32>,
    %c3_45 = arith.constant 3 : index
    %c0_46 = arith.constant 0 : index
    %37 = tpu.strided_load %arg8[%c3_45, %c0_46] {strides = array<i32: 2, 1>} : memref<42x32xf32, #tpu.memory_space<vmem>>, vector<18x32xf32>
    %c18_47 = arith.constant 18 : index
    %c96_48 = arith.constant 96 : index
    %38 = vector.load %arg9[%c18_47, %c96_48] : memref<36x224xf32, #tpu.memory_space<vmem>>, vector<18x32xf32>
    tpu.vector_store %arg9[%c18_47, %c96_48], %37 {strides = array<i32>} : memref<36x224xf32, #tpu.memory_space<vmem>>, vector<18x32xf32>,
    %c4_49 = arith.constant 4 : index
    %c0_50 = arith.constant 0 : index
    %39 = tpu.strided_load %arg8[%c4_49, %c0_50] {strides = array<i32: 2, 1>} : memref<42x32xf32, #tpu.memory_space<vmem>>, vector<18x32xf32>
    %c18_51 = arith.constant 18 : index
    %c128_52 = arith.constant 128 : index
    %40 = vector.load %arg9[%c18_51, %c128_52] : memref<36x224xf32, #tpu.memory_space<vmem>>, vector<18x32xf32>
    tpu.vector_store %arg9[%c18_51, %c128_52], %39 {strides = array<i32>} : memref<36x224xf32, #tpu.memory_space<vmem>>, vector<18x32xf32>,
    %c5_53 = arith.constant 5 : index
    %c0_54 = arith.constant 0 : index
    %41 = tpu.strided_load %arg8[%c5_53, %c0_54] {strides = array<i32: 2, 1>} : memref<42x32xf32, #tpu.memory_space<vmem>>, vector<18x32xf32>
    %c18_55 = arith.constant 18 : index
    %c160_56 = arith.constant 160 : index
    %42 = vector.load %arg9[%c18_55, %c160_56] : memref<36x224xf32, #tpu.memory_space<vmem>>, vector<18x32xf32>
    tpu.vector_store %arg9[%c18_55, %c160_56], %41 {strides = array<i32>} : memref<36x224xf32, #tpu.memory_space<vmem>>, vector<18x32xf32>,
    %c6_57 = arith.constant 6 : index
    %c0_58 = arith.constant 0 : index
    %43 = tpu.strided_load %arg8[%c6_57, %c0_58] {strides = array<i32: 2, 1>} : memref<42x32xf32, #tpu.memory_space<vmem>>, vector<18x32xf32>
    %c18_59 = arith.constant 18 : index
    %c192_60 = arith.constant 192 : index
    %44 = vector.load %arg9[%c18_59, %c192_60] : memref<36x224xf32, #tpu.memory_space<vmem>>, vector<18x32xf32>
    tpu.vector_store %arg9[%c18_59, %c192_60], %43 {strides = array<i32>} : memref<36x224xf32, #tpu.memory_space<vmem>>, vector<18x32xf32>,
    %c0_61 = arith.constant 0 : index
    %c0_62 = arith.constant 0 : index
    %45 = vector.load %arg9[%c0_61, %c0_62] : memref<36x224xf32, #tpu.memory_space<vmem>>, vector<36x224xf32>
    %c8 = arith.constant 8 : index
    %c0_63 = arith.constant 0 : index
    %46 = vector.load %arg3[%c8, %c0_63] : memref<976x32xbf16, #tpu.memory_space<vmem>>, vector<224x32xbf16>
    %47 = arith.truncf %45 : vector<36x224xf32> to vector<36x224xbf16>
    %cst_64 = arith.constant dense<0.000000e+00> : vector<36x32xf32>
    %48 = tpu.matmul %47, %46, %cst_64 {dimension_numbers = #tpu.dot_dimension_numbers<[1], [0], [0], [1], [0, 0, 1, 1], [], []>} : vector<36x224xbf16>, vector<224x32xbf16>, vector<36x32xf32> -> vector<36x32xf32>
    %c1_65 = arith.constant 1 : index
    %c0_66 = arith.constant 0 : index
    %49 = vector.load %arg4[%c1_65, %c0_66] : memref<16x32xf32, #tpu.memory_space<vmem>>, vector<1x32xf32>
    %50 = vector.broadcast %49 : vector<1x32xf32> to vector<36x32xf32>
    %51 = arith.addf %48, %50 : vector<36x32xf32>
    %c2_67 = arith.constant 2 : index
    %c0_68 = arith.constant 0 : index
    %52 = vector.load %arg4[%c2_67, %c0_68] : memref<16x32xf32, #tpu.memory_space<vmem>>, vector<1x32xf32>
    %c3_69 = arith.constant 3 : index
    %c0_70 = arith.constant 0 : index
    %53 = vector.load %arg4[%c3_69, %c0_70] : memref<16x32xf32, #tpu.memory_space<vmem>>, vector<1x32xf32>
    %cst_71 = arith.constant dense<0.000000e+00> : vector<32xf32>
    %54 = vector.multi_reduction <add>, %51, %cst_71 [0] : vector<36x32xf32> to vector<32xf32>
    %55 = vector.shape_cast %54 : vector<32xf32> to vector<1x32xf32>
    %cst_72 = arith.constant 0.000000e+00 : f32
    %56 = vector.broadcast %cst_72 : f32 to vector<1x32xf32>
    %57 = arith.addf %56, %55 : vector<1x32xf32>
    %58 = arith.mulf %51, %51 : vector<36x32xf32>
    %cst_73 = arith.constant dense<0.000000e+00> : vector<32xf32>
    %59 = vector.multi_reduction <add>, %58, %cst_73 [0] : vector<36x32xf32> to vector<32xf32>
    %60 = vector.shape_cast %59 : vector<32xf32> to vector<1x32xf32>
    %cst_74 = arith.constant 0.000000e+00 : f32
    %61 = vector.broadcast %cst_74 : f32 to vector<1x32xf32>
    %62 = arith.addf %61, %60 : vector<1x32xf32>
    %cst_75 = arith.constant 0.027777778 : f32
    %63 = vector.broadcast %cst_75 : f32 to vector<1x32xf32>
    %64 = arith.mulf %57, %63 : vector<1x32xf32>
    %cst_76 = arith.constant 0.027777778 : f32
    %65 = vector.broadcast %cst_76 : f32 to vector<1x32xf32>
    %66 = arith.mulf %62, %65 : vector<1x32xf32>
    %67 = arith.mulf %64, %64 : vector<1x32xf32>
    %68 = arith.subf %66, %67 : vector<1x32xf32>
    %cst_77 = arith.constant 9.99999974E-6 : f32
    %69 = vector.broadcast %cst_77 : f32 to vector<1x32xf32>
    %70 = arith.addf %68, %69 : vector<1x32xf32>
    %71 = math.rsqrt %70 : vector<1x32xf32>
    %72 = arith.mulf %52, %71 : vector<1x32xf32>
    %73 = arith.mulf %64, %72 : vector<1x32xf32>
    %74 = arith.subf %53, %73 : vector<1x32xf32>
    %75 = vector.broadcast %72 : vector<1x32xf32> to vector<36x32xf32>
    %76 = arith.mulf %51, %75 : vector<36x32xf32>
    %77 = vector.broadcast %74 : vector<1x32xf32> to vector<36x32xf32>
    %78 = arith.addf %76, %77 : vector<36x32xf32>
    %79 = arith.negf %78 : vector<36x32xf32>
    %80 = math.exp %79 : vector<36x32xf32>
    %cst_78 = arith.constant 1.000000e+00 : f32
    %81 = vector.broadcast %cst_78 : f32 to vector<36x32xf32>
    %82 = arith.addf %81, %80 : vector<36x32xf32>
    %83 = arith.divf %81, %82 : vector<36x32xf32>
    %84 = arith.mulf %78, %83 : vector<36x32xf32>
    %c0_79 = arith.constant 0 : index
    %c0_80 = arith.constant 0 : index
    %85 = vector.load %arg8[%c0_79, %c0_80] : memref<42x32xf32, #tpu.memory_space<vmem>>, vector<1x32xf32>
    tpu.vector_store %arg8[%c0_79, %c0_80], %0 {strides = array<i32>} : memref<42x32xf32, #tpu.memory_space<vmem>>, vector<1x32xf32>,
    %86 = vector.extract_strided_slice %84 {offsets = [0, 0], sizes = [18, 32], strides = [1, 1]} : vector<36x32xf32> to vector<18x32xf32>
    %c1_81 = arith.constant 1 : index
    %c0_82 = arith.constant 0 : index
    %87 = vector.load %arg8[%c1_81, %c0_82] : memref<42x32xf32, #tpu.memory_space<vmem>>, vector<18x32xf32>
    tpu.vector_store %arg8[%c1_81, %c0_82], %86 {strides = array<i32>} : memref<42x32xf32, #tpu.memory_space<vmem>>, vector<18x32xf32>,
    %c19 = arith.constant 19 : index
    %c0_83 = arith.constant 0 : index
    %88 = vector.load %arg8[%c19, %c0_83] : memref<42x32xf32, #tpu.memory_space<vmem>>, vector<1x32xf32>
    tpu.vector_store %arg8[%c19, %c0_83], %0 {strides = array<i32>} : memref<42x32xf32, #tpu.memory_space<vmem>>, vector<1x32xf32>,
    %c0_84 = arith.constant 0 : index
    %c0_85 = arith.constant 0 : index
    %89 = tpu.strided_load %arg8[%c0_84, %c0_85] {strides = array<i32: 2, 1>} : memref<42x32xf32, #tpu.memory_space<vmem>>, vector<7x32xf32>
    %c0_86 = arith.constant 0 : index
    %c0_87 = arith.constant 0 : index
    %90 = vector.load %arg9[%c0_86, %c0_87] : memref<36x224xf32, #tpu.memory_space<vmem>>, vector<7x32xf32>
    tpu.vector_store %arg9[%c0_86, %c0_87], %89 {strides = array<i32>} : memref<36x224xf32, #tpu.memory_space<vmem>>, vector<7x32xf32>,
    %c1_88 = arith.constant 1 : index
    %c0_89 = arith.constant 0 : index
    %91 = tpu.strided_load %arg8[%c1_88, %c0_89] {strides = array<i32: 2, 1>} : memref<42x32xf32, #tpu.memory_space<vmem>>, vector<7x32xf32>
    %c0_90 = arith.constant 0 : index
    %c32_91 = arith.constant 32 : index
    %92 = vector.load %arg9[%c0_90, %c32_91] : memref<36x224xf32, #tpu.memory_space<vmem>>, vector<7x32xf32>
    tpu.vector_store %arg9[%c0_90, %c32_91], %91 {strides = array<i32>} : memref<36x224xf32, #tpu.memory_space<vmem>>, vector<7x32xf32>,
    %c2_92 = arith.constant 2 : index
    %c0_93 = arith.constant 0 : index
    %93 = tpu.strided_load %arg8[%c2_92, %c0_93] {strides = array<i32: 2, 1>} : memref<42x32xf32, #tpu.memory_space<vmem>>, vector<7x32xf32>
    %c0_94 = arith.constant 0 : index
    %c64_95 = arith.constant 64 : index
    %94 = vector.load %arg9[%c0_94, %c64_95] : memref<36x224xf32, #tpu.memory_space<vmem>>, vector<7x32xf32>
    tpu.vector_store %arg9[%c0_94, %c64_95], %93 {strides = array<i32>} : memref<36x224xf32, #tpu.memory_space<vmem>>, vector<7x32xf32>,
    %c3_96 = arith.constant 3 : index
    %c0_97 = arith.constant 0 : index
    %95 = tpu.strided_load %arg8[%c3_96, %c0_97] {strides = array<i32: 2, 1>} : memref<42x32xf32, #tpu.memory_space<vmem>>, vector<7x32xf32>
    %c0_98 = arith.constant 0 : index
    %c96_99 = arith.constant 96 : index
    %96 = vector.load %arg9[%c0_98, %c96_99] : memref<36x224xf32, #tpu.memory_space<vmem>>, vector<7x32xf32>
    tpu.vector_store %arg9[%c0_98, %c96_99], %95 {strides = array<i32>} : memref<36x224xf32, #tpu.memory_space<vmem>>, vector<7x32xf32>,
    %c4_100 = arith.constant 4 : index
    %c0_101 = arith.constant 0 : index
    %97 = tpu.strided_load %arg8[%c4_100, %c0_101] {strides = array<i32: 2, 1>} : memref<42x32xf32, #tpu.memory_space<vmem>>, vector<7x32xf32>
    %c0_102 = arith.constant 0 : index
    %c128_103 = arith.constant 128 : index
    %98 = vector.load %arg9[%c0_102, %c128_103] : memref<36x224xf32, #tpu.memory_space<vmem>>, vector<7x32xf32>
    tpu.vector_store %arg9[%c0_102, %c128_103], %97 {strides = array<i32>} : memref<36x224xf32, #tpu.memory_space<vmem>>, vector<7x32xf32>,
    %c5_104 = arith.constant 5 : index
    %c0_105 = arith.constant 0 : index
    %99 = tpu.strided_load %arg8[%c5_104, %c0_105] {strides = array<i32: 2, 1>} : memref<42x32xf32, #tpu.memory_space<vmem>>, vector<7x32xf32>
    %c0_106 = arith.constant 0 : index
    %c160_107 = arith.constant 160 : index
    %100 = vector.load %arg9[%c0_106, %c160_107] : memref<36x224xf32, #tpu.memory_space<vmem>>, vector<7x32xf32>
    tpu.vector_store %arg9[%c0_106, %c160_107], %99 {strides = array<i32>} : memref<36x224xf32, #tpu.memory_space<vmem>>, vector<7x32xf32>,
    %c6_108 = arith.constant 6 : index
    %c0_109 = arith.constant 0 : index
    %101 = tpu.strided_load %arg8[%c6_108, %c0_109] {strides = array<i32: 2, 1>} : memref<42x32xf32, #tpu.memory_space<vmem>>, vector<7x32xf32>
    %c0_110 = arith.constant 0 : index
    %c192_111 = arith.constant 192 : index
    %102 = vector.load %arg9[%c0_110, %c192_111] : memref<36x224xf32, #tpu.memory_space<vmem>>, vector<7x32xf32>
    tpu.vector_store %arg9[%c0_110, %c192_111], %101 {strides = array<i32>} : memref<36x224xf32, #tpu.memory_space<vmem>>, vector<7x32xf32>,
    %c0_112 = arith.constant 0 : index
    %c0_113 = arith.constant 0 : index
    %103 = vector.load %arg8[%c0_112, %c0_113] : memref<42x32xf32, #tpu.memory_space<vmem>>, vector<1x32xf32>
    tpu.vector_store %arg8[%c0_112, %c0_113], %0 {strides = array<i32>} : memref<42x32xf32, #tpu.memory_space<vmem>>, vector<1x32xf32>,
    %104 = vector.extract_strided_slice %84 {offsets = [18, 0], sizes = [18, 32], strides = [1, 1]} : vector<36x32xf32> to vector<18x32xf32>
    %c1_114 = arith.constant 1 : index
    %c0_115 = arith.constant 0 : index
    %105 = vector.load %arg8[%c1_114, %c0_115] : memref<42x32xf32, #tpu.memory_space<vmem>>, vector<18x32xf32>
    tpu.vector_store %arg8[%c1_114, %c0_115], %104 {strides = array<i32>} : memref<42x32xf32, #tpu.memory_space<vmem>>, vector<18x32xf32>,
    %c19_116 = arith.constant 19 : index
    %c0_117 = arith.constant 0 : index
    %106 = vector.load %arg8[%c19_116, %c0_117] : memref<42x32xf32, #tpu.memory_space<vmem>>, vector<1x32xf32>
    tpu.vector_store %arg8[%c19_116, %c0_117], %0 {strides = array<i32>} : memref<42x32xf32, #tpu.memory_space<vmem>>, vector<1x32xf32>,
    %c0_118 = arith.constant 0 : index
    %c0_119 = arith.constant 0 : index
    %107 = tpu.strided_load %arg8[%c0_118, %c0_119] {strides = array<i32: 2, 1>} : memref<42x32xf32, #tpu.memory_space<vmem>>, vector<7x32xf32>
    %c7 = arith.constant 7 : index
    %c0_120 = arith.constant 0 : index
    %108 = vector.load %arg9[%c7, %c0_120] : memref<36x224xf32, #tpu.memory_space<vmem>>, vector<7x32xf32>
    tpu.vector_store %arg9[%c7, %c0_120], %107 {strides = array<i32>} : memref<36x224xf32, #tpu.memory_space<vmem>>, vector<7x32xf32>,
    %c1_121 = arith.constant 1 : index
    %c0_122 = arith.constant 0 : index
    %109 = tpu.strided_load %arg8[%c1_121, %c0_122] {strides = array<i32: 2, 1>} : memref<42x32xf32, #tpu.memory_space<vmem>>, vector<7x32xf32>
    %c7_123 = arith.constant 7 : index
    %c32_124 = arith.constant 32 : index
    %110 = vector.load %arg9[%c7_123, %c32_124] : memref<36x224xf32, #tpu.memory_space<vmem>>, vector<7x32xf32>
    tpu.vector_store %arg9[%c7_123, %c32_124], %109 {strides = array<i32>} : memref<36x224xf32, #tpu.memory_space<vmem>>, vector<7x32xf32>,
    %c2_125 = arith.constant 2 : index
    %c0_126 = arith.constant 0 : index
    %111 = tpu.strided_load %arg8[%c2_125, %c0_126] {strides = array<i32: 2, 1>} : memref<42x32xf32, #tpu.memory_space<vmem>>, vector<7x32xf32>
    %c7_127 = arith.constant 7 : index
    %c64_128 = arith.constant 64 : index
    %112 = vector.load %arg9[%c7_127, %c64_128] : memref<36x224xf32, #tpu.memory_space<vmem>>, vector<7x32xf32>
    tpu.vector_store %arg9[%c7_127, %c64_128], %111 {strides = array<i32>} : memref<36x224xf32, #tpu.memory_space<vmem>>, vector<7x32xf32>,
    %c3_129 = arith.constant 3 : index
    %c0_130 = arith.constant 0 : index
    %113 = tpu.strided_load %arg8[%c3_129, %c0_130] {strides = array<i32: 2, 1>} : memref<42x32xf32, #tpu.memory_space<vmem>>, vector<7x32xf32>
    %c7_131 = arith.constant 7 : index
    %c96_132 = arith.constant 96 : index
    %114 = vector.load %arg9[%c7_131, %c96_132] : memref<36x224xf32, #tpu.memory_space<vmem>>, vector<7x32xf32>
    tpu.vector_store %arg9[%c7_131, %c96_132], %113 {strides = array<i32>} : memref<36x224xf32, #tpu.memory_space<vmem>>, vector<7x32xf32>,
    %c4_133 = arith.constant 4 : index
    %c0_134 = arith.constant 0 : index
    %115 = tpu.strided_load %arg8[%c4_133, %c0_134] {strides = array<i32: 2, 1>} : memref<42x32xf32, #tpu.memory_space<vmem>>, vector<7x32xf32>
    %c7_135 = arith.constant 7 : index
    %c128_136 = arith.constant 128 : index
    %116 = vector.load %arg9[%c7_135, %c128_136] : memref<36x224xf32, #tpu.memory_space<vmem>>, vector<7x32xf32>
    tpu.vector_store %arg9[%c7_135, %c128_136], %115 {strides = array<i32>} : memref<36x224xf32, #tpu.memory_space<vmem>>, vector<7x32xf32>,
    %c5_137 = arith.constant 5 : index
    %c0_138 = arith.constant 0 : index
    %117 = tpu.strided_load %arg8[%c5_137, %c0_138] {strides = array<i32: 2, 1>} : memref<42x32xf32, #tpu.memory_space<vmem>>, vector<7x32xf32>
    %c7_139 = arith.constant 7 : index
    %c160_140 = arith.constant 160 : index
    %118 = vector.load %arg9[%c7_139, %c160_140] : memref<36x224xf32, #tpu.memory_space<vmem>>, vector<7x32xf32>
    tpu.vector_store %arg9[%c7_139, %c160_140], %117 {strides = array<i32>} : memref<36x224xf32, #tpu.memory_space<vmem>>, vector<7x32xf32>,
    %c6_141 = arith.constant 6 : index
    %c0_142 = arith.constant 0 : index
    %119 = tpu.strided_load %arg8[%c6_141, %c0_142] {strides = array<i32: 2, 1>} : memref<42x32xf32, #tpu.memory_space<vmem>>, vector<7x32xf32>
    %c7_143 = arith.constant 7 : index
    %c192_144 = arith.constant 192 : index
    %120 = vector.load %arg9[%c7_143, %c192_144] : memref<36x224xf32, #tpu.memory_space<vmem>>, vector<7x32xf32>
    tpu.vector_store %arg9[%c7_143, %c192_144], %119 {strides = array<i32>} : memref<36x224xf32, #tpu.memory_space<vmem>>, vector<7x32xf32>,
    %c0_145 = arith.constant 0 : index
    %c0_146 = arith.constant 0 : index
    %121 = vector.load %arg9[%c0_145, %c0_146] : memref<36x224xf32, #tpu.memory_space<vmem>>, vector<14x224xf32>
    %c232 = arith.constant 232 : index
    %c0_147 = arith.constant 0 : index
    %122 = vector.load %arg3[%c232, %c0_147] : memref<976x32xbf16, #tpu.memory_space<vmem>>, vector<224x32xbf16>
    %123 = arith.truncf %121 : vector<14x224xf32> to vector<14x224xbf16>
    %cst_148 = arith.constant dense<0.000000e+00> : vector<14x32xf32>
    %124 = tpu.matmul %123, %122, %cst_148 {dimension_numbers = #tpu.dot_dimension_numbers<[1], [0], [0], [1], [0, 0, 1, 1], [], []>} : vector<14x224xbf16>, vector<224x32xbf16>, vector<14x32xf32> -> vector<14x32xf32>
    %c4_149 = arith.constant 4 : index
    %c0_150 = arith.constant 0 : index
    %125 = vector.load %arg4[%c4_149, %c0_150] : memref<16x32xf32, #tpu.memory_space<vmem>>, vector<1x32xf32>
    %126 = vector.broadcast %125 : vector<1x32xf32> to vector<14x32xf32>
    %127 = arith.addf %124, %126 : vector<14x32xf32>
    %c5_151 = arith.constant 5 : index
    %c0_152 = arith.constant 0 : index
    %128 = vector.load %arg4[%c5_151, %c0_152] : memref<16x32xf32, #tpu.memory_space<vmem>>, vector<1x32xf32>
    %c6_153 = arith.constant 6 : index
    %c0_154 = arith.constant 0 : index
    %129 = vector.load %arg4[%c6_153, %c0_154] : memref<16x32xf32, #tpu.memory_space<vmem>>, vector<1x32xf32>
    %cst_155 = arith.constant dense<0.000000e+00> : vector<32xf32>
    %130 = vector.multi_reduction <add>, %127, %cst_155 [0] : vector<14x32xf32> to vector<32xf32>
    %131 = vector.shape_cast %130 : vector<32xf32> to vector<1x32xf32>
    %cst_156 = arith.constant 0.000000e+00 : f32
    %132 = vector.broadcast %cst_156 : f32 to vector<1x32xf32>
    %133 = arith.addf %132, %131 : vector<1x32xf32>
    %134 = arith.mulf %127, %127 : vector<14x32xf32>
    %cst_157 = arith.constant dense<0.000000e+00> : vector<32xf32>
    %135 = vector.multi_reduction <add>, %134, %cst_157 [0] : vector<14x32xf32> to vector<32xf32>
    %136 = vector.shape_cast %135 : vector<32xf32> to vector<1x32xf32>
    %cst_158 = arith.constant 0.000000e+00 : f32
    %137 = vector.broadcast %cst_158 : f32 to vector<1x32xf32>
    %138 = arith.addf %137, %136 : vector<1x32xf32>
    %cst_159 = arith.constant 0.0714285746 : f32
    %139 = vector.broadcast %cst_159 : f32 to vector<1x32xf32>
    %140 = arith.mulf %133, %139 : vector<1x32xf32>
    %cst_160 = arith.constant 0.0714285746 : f32
    %141 = vector.broadcast %cst_160 : f32 to vector<1x32xf32>
    %142 = arith.mulf %138, %141 : vector<1x32xf32>
    %143 = arith.mulf %140, %140 : vector<1x32xf32>
    %144 = arith.subf %142, %143 : vector<1x32xf32>
    %cst_161 = arith.constant 9.99999974E-6 : f32
    %145 = vector.broadcast %cst_161 : f32 to vector<1x32xf32>
    %146 = arith.addf %144, %145 : vector<1x32xf32>
    %147 = math.rsqrt %146 : vector<1x32xf32>
    %148 = arith.mulf %128, %147 : vector<1x32xf32>
    %149 = arith.mulf %140, %148 : vector<1x32xf32>
    %150 = arith.subf %129, %149 : vector<1x32xf32>
    %151 = vector.broadcast %148 : vector<1x32xf32> to vector<14x32xf32>
    %152 = arith.mulf %127, %151 : vector<14x32xf32>
    %153 = vector.broadcast %150 : vector<1x32xf32> to vector<14x32xf32>
    %154 = arith.addf %152, %153 : vector<14x32xf32>
    %155 = arith.negf %154 : vector<14x32xf32>
    %156 = math.exp %155 : vector<14x32xf32>
    %cst_162 = arith.constant 1.000000e+00 : f32
    %157 = vector.broadcast %cst_162 : f32 to vector<14x32xf32>
    %158 = arith.addf %157, %156 : vector<14x32xf32>
    %159 = arith.divf %157, %158 : vector<14x32xf32>
    %160 = arith.mulf %154, %159 : vector<14x32xf32>
    %c456 = arith.constant 456 : index
    %c0_163 = arith.constant 0 : index
    %161 = vector.load %arg3[%c456, %c0_163] : memref<976x32xbf16, #tpu.memory_space<vmem>>, vector<32x32xbf16>
    %162 = arith.truncf %160 : vector<14x32xf32> to vector<14x32xbf16>
    %cst_164 = arith.constant dense<0.000000e+00> : vector<14x32xf32>
    %163 = tpu.matmul %162, %161, %cst_164 {dimension_numbers = #tpu.dot_dimension_numbers<[1], [0], [0], [1], [0, 0, 1, 1], [], []>} : vector<14x32xbf16>, vector<32x32xbf16>, vector<14x32xf32> -> vector<14x32xf32>
    %c7_165 = arith.constant 7 : index
    %c0_166 = arith.constant 0 : index
    %164 = vector.load %arg4[%c7_165, %c0_166] : memref<16x32xf32, #tpu.memory_space<vmem>>, vector<1x32xf32>
    %165 = vector.extract_strided_slice %163 {offsets = [0, 0], sizes = [14, 8], strides = [1, 1]} : vector<14x32xf32> to vector<14x8xf32>
    %166 = vector.extract_strided_slice %164 {offsets = [0, 0], sizes = [1, 8], strides = [1, 1]} : vector<1x32xf32> to vector<1x8xf32>
    %167 = vector.broadcast %166 : vector<1x8xf32> to vector<14x8xf32>
    %168 = arith.addf %165, %167 : vector<14x8xf32>
    %169 = vector.extract_strided_slice %163 {offsets = [0, 8], sizes = [14, 8], strides = [1, 1]} : vector<14x32xf32> to vector<14x8xf32>
    %170 = vector.extract_strided_slice %164 {offsets = [0, 8], sizes = [1, 8], strides = [1, 1]} : vector<1x32xf32> to vector<1x8xf32>
    %171 = vector.broadcast %170 : vector<1x8xf32> to vector<14x8xf32>
    %172 = arith.addf %169, %171 : vector<14x8xf32>
    %c0_167 = arith.constant 0 : index
    %c0_168 = arith.constant 0 : index
    %173 = vector.load %arg2[%c0_167, %c0_168] : memref<14x8xf32, #tpu.memory_space<vmem>>, vector<14x8xf32>
    %cst_169 = arith.constant 5.000000e-01 : f32
    %174 = vector.broadcast %cst_169 : f32 to vector<14x8xf32>
    %175 = arith.mulf %174, %172 : vector<14x8xf32>
    %176 = math.exp %175 : vector<14x8xf32>
    %177 = arith.mulf %173, %176 : vector<14x8xf32>
    %178 = arith.addf %168, %177 : vector<14x8xf32>
    %179 = tpu.iota {dimensions = array<i32: 0>} : vector<14x8xi32>
    %c0_i32 = arith.constant 0 : i32
    %180 = vector.broadcast %c0_i32 : i32 to vector<14x8xi32>
    %181 = arith.cmpi slt, %179, %180 : vector<14x8xi32>
    %c0_i32_170 = arith.constant 0 : i32
    %182 = vector.broadcast %c0_i32_170 : i32 to vector<14x8xi32>
    %183 = arith.cmpi sge, %179, %182 : vector<14x8xi32>
    %c0_171 = arith.constant 0 : index
    %184 = memref.load %arg0[%c0_171] : memref<2xi32, #tpu.memory_space<smem>>
    %c0_i32_172 = arith.constant 0 : i32
    %185 = arith.addi %c0_i32_172, %184 : i32
    %186 = vector.broadcast %185 : i32 to vector<14x8xi32>
    %187 = arith.cmpi slt, %179, %186 : vector<14x8xi32>
    %188 = arith.andi %183, %187 : vector<14x8xi1>
    %189 = arith.ori %181, %188 : vector<14x8xi1>
    %c7_i32 = arith.constant 7 : i32
    %190 = vector.broadcast %c7_i32 : i32 to vector<14x8xi32>
    %191 = arith.cmpi sge, %179, %190 : vector<14x8xi32>
    %c1_173 = arith.constant 1 : index
    %192 = memref.load %arg0[%c1_173] : memref<2xi32, #tpu.memory_space<smem>>
    %c7_i32_174 = arith.constant 7 : i32
    %193 = arith.addi %c7_i32_174, %192 : i32
    %194 = vector.broadcast %193 : i32 to vector<14x8xi32>
    %195 = arith.cmpi slt, %179, %194 : vector<14x8xi32>
    %196 = arith.andi %191, %195 : vector<14x8xi1>
    %197 = arith.ori %189, %196 : vector<14x8xi1>
    %cst_175 = arith.constant 0.000000e+00 : f32
    %198 = vector.broadcast %cst_175 : f32 to vector<14x8xf32>
    %199 = arith.select %197, %178, %198 : vector<14x8xi1>, vector<14x8xf32>
    %c488 = arith.constant 488 : index
    %c0_176 = arith.constant 0 : index
    %200 = vector.load %arg3[%c488, %c0_176] : memref<976x32xbf16, #tpu.memory_space<vmem>>, vector<8x32xbf16>
    %201 = arith.truncf %199 : vector<14x8xf32> to vector<14x8xbf16>
    %cst_177 = arith.constant dense<0.000000e+00> : vector<14x32xf32>
    %202 = tpu.matmul %201, %200, %cst_177 {dimension_numbers = #tpu.dot_dimension_numbers<[1], [0], [0], [1], [0, 0, 1, 1], [], []>} : vector<14x8xbf16>, vector<8x32xbf16>, vector<14x32xf32> -> vector<14x32xf32>
    %c8_178 = arith.constant 8 : index
    %c0_179 = arith.constant 0 : index
    %203 = vector.load %arg4[%c8_178, %c0_179] : memref<16x32xf32, #tpu.memory_space<vmem>>, vector<1x32xf32>
    %204 = vector.broadcast %203 : vector<1x32xf32> to vector<14x32xf32>
    %205 = arith.addf %202, %204 : vector<14x32xf32>
    %c0_180 = arith.constant 0 : index
    %c0_181 = arith.constant 0 : index
    %206 = vector.load %arg10[%c0_180, %c0_181] : memref<21x32xf32, #tpu.memory_space<vmem>>, vector<2x32xf32>
    tpu.vector_store %arg10[%c0_180, %c0_181], %1 {strides = array<i32>} : memref<21x32xf32, #tpu.memory_space<vmem>>, vector<2x32xf32>,
    %c9 = arith.constant 9 : index
    %c0_182 = arith.constant 0 : index
    %207 = vector.load %arg10[%c9, %c0_182] : memref<21x32xf32, #tpu.memory_space<vmem>>, vector<2x32xf32>
    tpu.vector_store %arg10[%c9, %c0_182], %1 {strides = array<i32>} : memref<21x32xf32, #tpu.memory_space<vmem>>, vector<2x32xf32>,
    %208 = vector.extract_strided_slice %205 {offsets = [0, 0], sizes = [7, 32], strides = [1, 1]} : vector<14x32xf32> to vector<7x32xf32>
    %c2_183 = arith.constant 2 : index
    %c0_184 = arith.constant 0 : index
    %209 = vector.load %arg10[%c2_183, %c0_184] : memref<21x32xf32, #tpu.memory_space<vmem>>, vector<7x32xf32>
    tpu.vector_store %arg10[%c2_183, %c0_184], %208 {strides = array<i32>} : memref<21x32xf32, #tpu.memory_space<vmem>>, vector<7x32xf32>,
    %c0_185 = arith.constant 0 : index
    %c0_186 = arith.constant 0 : index
    %210 = vector.load %arg10[%c0_185, %c0_186] : memref<21x32xf32, #tpu.memory_space<vmem>>, vector<9x32xf32>
    %c0_187 = arith.constant 0 : index
    %c0_188 = arith.constant 0 : index
    %211 = vector.load %arg11[%c0_187, %c0_188] : memref<38x96xf32, #tpu.memory_space<vmem>>, vector<9x32xf32>
    tpu.vector_store %arg11[%c0_187, %c0_188], %210 {strides = array<i32>} : memref<38x96xf32, #tpu.memory_space<vmem>>, vector<9x32xf32>,
    %c1_189 = arith.constant 1 : index
    %c0_190 = arith.constant 0 : index
    %212 = vector.load %arg10[%c1_189, %c0_190] : memref<21x32xf32, #tpu.memory_space<vmem>>, vector<9x32xf32>
    %c0_191 = arith.constant 0 : index
    %c32_192 = arith.constant 32 : index
    %213 = vector.load %arg11[%c0_191, %c32_192] : memref<38x96xf32, #tpu.memory_space<vmem>>, vector<9x32xf32>
    tpu.vector_store %arg11[%c0_191, %c32_192], %212 {strides = array<i32>} : memref<38x96xf32, #tpu.memory_space<vmem>>, vector<9x32xf32>,
    %c2_193 = arith.constant 2 : index
    %c0_194 = arith.constant 0 : index
    %214 = vector.load %arg10[%c2_193, %c0_194] : memref<21x32xf32, #tpu.memory_space<vmem>>, vector<9x32xf32>
    %c0_195 = arith.constant 0 : index
    %c64_196 = arith.constant 64 : index
    %215 = vector.load %arg11[%c0_195, %c64_196] : memref<38x96xf32, #tpu.memory_space<vmem>>, vector<9x32xf32>
    tpu.vector_store %arg11[%c0_195, %c64_196], %214 {strides = array<i32>} : memref<38x96xf32, #tpu.memory_space<vmem>>, vector<9x32xf32>,
    %c0_197 = arith.constant 0 : index
    %c0_198 = arith.constant 0 : index
    %216 = vector.load %arg10[%c0_197, %c0_198] : memref<21x32xf32, #tpu.memory_space<vmem>>, vector<8x32xf32>
    %c0_199 = arith.constant 0 : index
    %c0_200 = arith.constant 0 : index
    %217 = vector.load %arg12[%c0_199, %c0_200] : memref<36x128xf32, #tpu.memory_space<vmem>>, vector<8x32xf32>
    tpu.vector_store %arg12[%c0_199, %c0_200], %216 {strides = array<i32>} : memref<36x128xf32, #tpu.memory_space<vmem>>, vector<8x32xf32>,
    %c1_201 = arith.constant 1 : index
    %c0_202 = arith.constant 0 : index
    %218 = vector.load %arg10[%c1_201, %c0_202] : memref<21x32xf32, #tpu.memory_space<vmem>>, vector<8x32xf32>
    %c0_203 = arith.constant 0 : index
    %c32_204 = arith.constant 32 : index
    %219 = vector.load %arg12[%c0_203, %c32_204] : memref<36x128xf32, #tpu.memory_space<vmem>>, vector<8x32xf32>
    tpu.vector_store %arg12[%c0_203, %c32_204], %218 {strides = array<i32>} : memref<36x128xf32, #tpu.memory_space<vmem>>, vector<8x32xf32>,
    %c2_205 = arith.constant 2 : index
    %c0_206 = arith.constant 0 : index
    %220 = vector.load %arg10[%c2_205, %c0_206] : memref<21x32xf32, #tpu.memory_space<vmem>>, vector<8x32xf32>
    %c0_207 = arith.constant 0 : index
    %c64_208 = arith.constant 64 : index
    %221 = vector.load %arg12[%c0_207, %c64_208] : memref<36x128xf32, #tpu.memory_space<vmem>>, vector<8x32xf32>
    tpu.vector_store %arg12[%c0_207, %c64_208], %220 {strides = array<i32>} : memref<36x128xf32, #tpu.memory_space<vmem>>, vector<8x32xf32>,
    %c3_209 = arith.constant 3 : index
    %c0_210 = arith.constant 0 : index
    %222 = vector.load %arg10[%c3_209, %c0_210] : memref<21x32xf32, #tpu.memory_space<vmem>>, vector<8x32xf32>
    %c0_211 = arith.constant 0 : index
    %c96_212 = arith.constant 96 : index
    %223 = vector.load %arg12[%c0_211, %c96_212] : memref<36x128xf32, #tpu.memory_space<vmem>>, vector<8x32xf32>
    tpu.vector_store %arg12[%c0_211, %c96_212], %222 {strides = array<i32>} : memref<36x128xf32, #tpu.memory_space<vmem>>, vector<8x32xf32>,
    %c0_213 = arith.constant 0 : index
    %c0_214 = arith.constant 0 : index
    %224 = vector.load %arg10[%c0_213, %c0_214] : memref<21x32xf32, #tpu.memory_space<vmem>>, vector<2x32xf32>
    tpu.vector_store %arg10[%c0_213, %c0_214], %1 {strides = array<i32>} : memref<21x32xf32, #tpu.memory_space<vmem>>, vector<2x32xf32>,
    %c9_215 = arith.constant 9 : index
    %c0_216 = arith.constant 0 : index
    %225 = vector.load %arg10[%c9_215, %c0_216] : memref<21x32xf32, #tpu.memory_space<vmem>>, vector<2x32xf32>
    tpu.vector_store %arg10[%c9_215, %c0_216], %1 {strides = array<i32>} : memref<21x32xf32, #tpu.memory_space<vmem>>, vector<2x32xf32>,
    %226 = vector.extract_strided_slice %205 {offsets = [7, 0], sizes = [7, 32], strides = [1, 1]} : vector<14x32xf32> to vector<7x32xf32>
    %c2_217 = arith.constant 2 : index
    %c0_218 = arith.constant 0 : index
    %227 = vector.load %arg10[%c2_217, %c0_218] : memref<21x32xf32, #tpu.memory_space<vmem>>, vector<7x32xf32>
    tpu.vector_store %arg10[%c2_217, %c0_218], %226 {strides = array<i32>} : memref<21x32xf32, #tpu.memory_space<vmem>>, vector<7x32xf32>,
    %c0_219 = arith.constant 0 : index
    %c0_220 = arith.constant 0 : index
    %228 = vector.load %arg10[%c0_219, %c0_220] : memref<21x32xf32, #tpu.memory_space<vmem>>, vector<9x32xf32>
    %c9_221 = arith.constant 9 : index
    %c0_222 = arith.constant 0 : index
    %229 = vector.load %arg11[%c9_221, %c0_222] : memref<38x96xf32, #tpu.memory_space<vmem>>, vector<9x32xf32>
    tpu.vector_store %arg11[%c9_221, %c0_222], %228 {strides = array<i32>} : memref<38x96xf32, #tpu.memory_space<vmem>>, vector<9x32xf32>,
    %c1_223 = arith.constant 1 : index
    %c0_224 = arith.constant 0 : index
    %230 = vector.load %arg10[%c1_223, %c0_224] : memref<21x32xf32, #tpu.memory_space<vmem>>, vector<9x32xf32>
    %c9_225 = arith.constant 9 : index
    %c32_226 = arith.constant 32 : index
    %231 = vector.load %arg11[%c9_225, %c32_226] : memref<38x96xf32, #tpu.memory_space<vmem>>, vector<9x32xf32>
    tpu.vector_store %arg11[%c9_225, %c32_226], %230 {strides = array<i32>} : memref<38x96xf32, #tpu.memory_space<vmem>>, vector<9x32xf32>,
    %c2_227 = arith.constant 2 : index
    %c0_228 = arith.constant 0 : index
    %232 = vector.load %arg10[%c2_227, %c0_228] : memref<21x32xf32, #tpu.memory_space<vmem>>, vector<9x32xf32>
    %c9_229 = arith.constant 9 : index
    %c64_230 = arith.constant 64 : index
    %233 = vector.load %arg11[%c9_229, %c64_230] : memref<38x96xf32, #tpu.memory_space<vmem>>, vector<9x32xf32>
    tpu.vector_store %arg11[%c9_229, %c64_230], %232 {strides = array<i32>} : memref<38x96xf32, #tpu.memory_space<vmem>>, vector<9x32xf32>,
    %c0_231 = arith.constant 0 : index
    %c0_232 = arith.constant 0 : index
    %234 = vector.load %arg10[%c0_231, %c0_232] : memref<21x32xf32, #tpu.memory_space<vmem>>, vector<8x32xf32>
    %c8_233 = arith.constant 8 : index
    %c0_234 = arith.constant 0 : index
    %235 = vector.load %arg12[%c8_233, %c0_234] : memref<36x128xf32, #tpu.memory_space<vmem>>, vector<8x32xf32>
    tpu.vector_store %arg12[%c8_233, %c0_234], %234 {strides = array<i32>} : memref<36x128xf32, #tpu.memory_space<vmem>>, vector<8x32xf32>,
    %c1_235 = arith.constant 1 : index
    %c0_236 = arith.constant 0 : index
    %236 = vector.load %arg10[%c1_235, %c0_236] : memref<21x32xf32, #tpu.memory_space<vmem>>, vector<8x32xf32>
    %c8_237 = arith.constant 8 : index
    %c32_238 = arith.constant 32 : index
    %237 = vector.load %arg12[%c8_237, %c32_238] : memref<36x128xf32, #tpu.memory_space<vmem>>, vector<8x32xf32>
    tpu.vector_store %arg12[%c8_237, %c32_238], %236 {strides = array<i32>} : memref<36x128xf32, #tpu.memory_space<vmem>>, vector<8x32xf32>,
    %c2_239 = arith.constant 2 : index
    %c0_240 = arith.constant 0 : index
    %238 = vector.load %arg10[%c2_239, %c0_240] : memref<21x32xf32, #tpu.memory_space<vmem>>, vector<8x32xf32>
    %c8_241 = arith.constant 8 : index
    %c64_242 = arith.constant 64 : index
    %239 = vector.load %arg12[%c8_241, %c64_242] : memref<36x128xf32, #tpu.memory_space<vmem>>, vector<8x32xf32>
    tpu.vector_store %arg12[%c8_241, %c64_242], %238 {strides = array<i32>} : memref<36x128xf32, #tpu.memory_space<vmem>>, vector<8x32xf32>,
    %c3_243 = arith.constant 3 : index
    %c0_244 = arith.constant 0 : index
    %240 = vector.load %arg10[%c3_243, %c0_244] : memref<21x32xf32, #tpu.memory_space<vmem>>, vector<8x32xf32>
    %c8_245 = arith.constant 8 : index
    %c96_246 = arith.constant 96 : index
    %241 = vector.load %arg12[%c8_245, %c96_246] : memref<36x128xf32, #tpu.memory_space<vmem>>, vector<8x32xf32>
    tpu.vector_store %arg12[%c8_245, %c96_246], %240 {strides = array<i32>} : memref<36x128xf32, #tpu.memory_space<vmem>>, vector<8x32xf32>,
    %c0_247 = arith.constant 0 : index
    %c0_248 = arith.constant 0 : index
    %242 = vector.load %arg11[%c0_247, %c0_248] : memref<38x96xf32, #tpu.memory_space<vmem>>, vector<18x96xf32>
    %c496 = arith.constant 496 : index
    %c0_249 = arith.constant 0 : index
    %243 = vector.load %arg3[%c496, %c0_249] : memref<976x32xbf16, #tpu.memory_space<vmem>>, vector<96x32xbf16>
    %244 = arith.truncf %242 : vector<18x96xf32> to vector<18x96xbf16>
    %cst_250 = arith.constant dense<0.000000e+00> : vector<18x32xf32>
    %245 = tpu.matmul %244, %243, %cst_250 {dimension_numbers = #tpu.dot_dimension_numbers<[1], [0], [0], [1], [0, 0, 1, 1], [], []>} : vector<18x96xbf16>, vector<96x32xbf16>, vector<18x32xf32> -> vector<18x32xf32>
    %c9_251 = arith.constant 9 : index
    %c0_252 = arith.constant 0 : index
    %246 = vector.load %arg4[%c9_251, %c0_252] : memref<16x32xf32, #tpu.memory_space<vmem>>, vector<1x32xf32>
    %247 = vector.broadcast %246 : vector<1x32xf32> to vector<18x32xf32>
    %248 = arith.addf %245, %247 : vector<18x32xf32>
    %c0_253 = arith.constant 0 : index
    %c0_254 = arith.constant 0 : index
    %249 = vector.load %arg12[%c0_253, %c0_254] : memref<36x128xf32, #tpu.memory_space<vmem>>, vector<16x128xf32>
    %c592 = arith.constant 592 : index
    %c0_255 = arith.constant 0 : index
    %250 = vector.load %arg3[%c592, %c0_255] : memref<976x32xbf16, #tpu.memory_space<vmem>>, vector<128x32xbf16>
    %251 = arith.truncf %249 : vector<16x128xf32> to vector<16x128xbf16>
    %cst_256 = arith.constant dense<0.000000e+00> : vector<16x32xf32>
    %252 = tpu.matmul %251, %250, %cst_256 {dimension_numbers = #tpu.dot_dimension_numbers<[1], [0], [0], [1], [0, 0, 1, 1], [], []>} : vector<16x128xbf16>, vector<128x32xbf16>, vector<16x32xf32> -> vector<16x32xf32>
    %c9_257 = arith.constant 9 : index
    %c0_258 = arith.constant 0 : index
    %253 = vector.load %arg4[%c9_257, %c0_258] : memref<16x32xf32, #tpu.memory_space<vmem>>, vector<1x32xf32>
    %254 = vector.broadcast %253 : vector<1x32xf32> to vector<16x32xf32>
    %255 = arith.addf %252, %254 : vector<16x32xf32>
    %c10 = arith.constant 10 : index
    %c0_259 = arith.constant 0 : index
    %256 = vector.load %arg4[%c10, %c0_259] : memref<16x32xf32, #tpu.memory_space<vmem>>, vector<1x32xf32>
    %c11 = arith.constant 11 : index
    %c0_260 = arith.constant 0 : index
    %257 = vector.load %arg4[%c11, %c0_260] : memref<16x32xf32, #tpu.memory_space<vmem>>, vector<1x32xf32>
    %cst_261 = arith.constant dense<0.000000e+00> : vector<32xf32>
    %258 = vector.multi_reduction <add>, %248, %cst_261 [0] : vector<18x32xf32> to vector<32xf32>
    %259 = vector.shape_cast %258 : vector<32xf32> to vector<1x32xf32>
    %cst_262 = arith.constant 0.000000e+00 : f32
    %260 = vector.broadcast %cst_262 : f32 to vector<1x32xf32>
    %261 = arith.addf %260, %259 : vector<1x32xf32>
    %cst_263 = arith.constant dense<0.000000e+00> : vector<32xf32>
    %262 = vector.multi_reduction <add>, %255, %cst_263 [0] : vector<16x32xf32> to vector<32xf32>
    %263 = vector.shape_cast %262 : vector<32xf32> to vector<1x32xf32>
    %264 = arith.addf %261, %263 : vector<1x32xf32>
    %265 = arith.mulf %248, %248 : vector<18x32xf32>
    %cst_264 = arith.constant dense<0.000000e+00> : vector<32xf32>
    %266 = vector.multi_reduction <add>, %265, %cst_264 [0] : vector<18x32xf32> to vector<32xf32>
    %267 = vector.shape_cast %266 : vector<32xf32> to vector<1x32xf32>
    %cst_265 = arith.constant 0.000000e+00 : f32
    %268 = vector.broadcast %cst_265 : f32 to vector<1x32xf32>
    %269 = arith.addf %268, %267 : vector<1x32xf32>
    %270 = arith.mulf %255, %255 : vector<16x32xf32>
    %cst_266 = arith.constant dense<0.000000e+00> : vector<32xf32>
    %271 = vector.multi_reduction <add>, %270, %cst_266 [0] : vector<16x32xf32> to vector<32xf32>
    %272 = vector.shape_cast %271 : vector<32xf32> to vector<1x32xf32>
    %273 = arith.addf %269, %272 : vector<1x32xf32>
    %cst_267 = arith.constant 0.0294117648 : f32
    %274 = vector.broadcast %cst_267 : f32 to vector<1x32xf32>
    %275 = arith.mulf %264, %274 : vector<1x32xf32>
    %cst_268 = arith.constant 0.0294117648 : f32
    %276 = vector.broadcast %cst_268 : f32 to vector<1x32xf32>
    %277 = arith.mulf %273, %276 : vector<1x32xf32>
    %278 = arith.mulf %275, %275 : vector<1x32xf32>
    %279 = arith.subf %277, %278 : vector<1x32xf32>
    %cst_269 = arith.constant 9.99999974E-6 : f32
    %280 = vector.broadcast %cst_269 : f32 to vector<1x32xf32>
    %281 = arith.addf %279, %280 : vector<1x32xf32>
    %282 = math.rsqrt %281 : vector<1x32xf32>
    %283 = arith.mulf %256, %282 : vector<1x32xf32>
    %284 = arith.mulf %275, %283 : vector<1x32xf32>
    %285 = arith.subf %257, %284 : vector<1x32xf32>
    %286 = vector.broadcast %283 : vector<1x32xf32> to vector<18x32xf32>
    %287 = arith.mulf %248, %286 : vector<18x32xf32>
    %288 = vector.broadcast %285 : vector<1x32xf32> to vector<18x32xf32>
    %289 = arith.addf %287, %288 : vector<18x32xf32>
    %290 = arith.negf %289 : vector<18x32xf32>
    %291 = math.exp %290 : vector<18x32xf32>
    %cst_270 = arith.constant 1.000000e+00 : f32
    %292 = vector.broadcast %cst_270 : f32 to vector<18x32xf32>
    %293 = arith.addf %292, %291 : vector<18x32xf32>
    %294 = arith.divf %292, %293 : vector<18x32xf32>
    %295 = arith.mulf %289, %294 : vector<18x32xf32>
    %296 = vector.broadcast %283 : vector<1x32xf32> to vector<16x32xf32>
    %297 = arith.mulf %255, %296 : vector<16x32xf32>
    %298 = vector.broadcast %285 : vector<1x32xf32> to vector<16x32xf32>
    %299 = arith.addf %297, %298 : vector<16x32xf32>
    %300 = arith.negf %299 : vector<16x32xf32>
    %301 = math.exp %300 : vector<16x32xf32>
    %cst_271 = arith.constant 1.000000e+00 : f32
    %302 = vector.broadcast %cst_271 : f32 to vector<16x32xf32>
    %303 = arith.addf %302, %301 : vector<16x32xf32>
    %304 = arith.divf %302, %303 : vector<16x32xf32>
    %305 = arith.mulf %299, %304 : vector<16x32xf32>
    %c0_272 = arith.constant 0 : index
    %c0_273 = arith.constant 0 : index
    %306 = vector.load %arg10[%c0_272, %c0_273] : memref<21x32xf32, #tpu.memory_space<vmem>>, vector<2x32xf32>
    tpu.vector_store %arg10[%c0_272, %c0_273], %1 {strides = array<i32>} : memref<21x32xf32, #tpu.memory_space<vmem>>, vector<2x32xf32>,
    %c19_274 = arith.constant 19 : index
    %c0_275 = arith.constant 0 : index
    %307 = vector.load %arg10[%c19_274, %c0_275] : memref<21x32xf32, #tpu.memory_space<vmem>>, vector<2x32xf32>
    tpu.vector_store %arg10[%c19_274, %c0_275], %1 {strides = array<i32>} : memref<21x32xf32, #tpu.memory_space<vmem>>, vector<2x32xf32>,
    %308 = vector.extract_strided_slice %295 {offsets = [0, 0], sizes = [9, 32], strides = [1, 1]} : vector<18x32xf32> to vector<9x32xf32>
    %c2_276 = arith.constant 2 : index
    %c0_277 = arith.constant 0 : index
    %309 = tpu.strided_load %arg10[%c2_276, %c0_277] {strides = array<i32: 2, 1>} : memref<21x32xf32, #tpu.memory_space<vmem>>, vector<9x32xf32>
    tpu.strided_store %arg10[%c2_276, %c0_277], %308 {strides = array<i32: 2, 1>} : memref<21x32xf32, #tpu.memory_space<vmem>>, vector<9x32xf32>
    %310 = vector.extract_strided_slice %305 {offsets = [0, 0], sizes = [8, 32], strides = [1, 1]} : vector<16x32xf32> to vector<8x32xf32>
    %c3_278 = arith.constant 3 : index
    %c0_279 = arith.constant 0 : index
    %311 = tpu.strided_load %arg10[%c3_278, %c0_279] {strides = array<i32: 2, 1>} : memref<21x32xf32, #tpu.memory_space<vmem>>, vector<8x32xf32>
    tpu.strided_store %arg10[%c3_278, %c0_279], %310 {strides = array<i32: 2, 1>} : memref<21x32xf32, #tpu.memory_space<vmem>>, vector<8x32xf32>
    %c0_280 = arith.constant 0 : index
    %c0_281 = arith.constant 0 : index
    %312 = vector.load %arg10[%c0_280, %c0_281] : memref<21x32xf32, #tpu.memory_space<vmem>>, vector<19x32xf32>
    %c0_282 = arith.constant 0 : index
    %c0_283 = arith.constant 0 : index
    %313 = vector.load %arg11[%c0_282, %c0_283] : memref<38x96xf32, #tpu.memory_space<vmem>>, vector<19x32xf32>
    tpu.vector_store %arg11[%c0_282, %c0_283], %312 {strides = array<i32>} : memref<38x96xf32, #tpu.memory_space<vmem>>, vector<19x32xf32>,
    %c1_284 = arith.constant 1 : index
    %c0_285 = arith.constant 0 : index
    %314 = vector.load %arg10[%c1_284, %c0_285] : memref<21x32xf32, #tpu.memory_space<vmem>>, vector<19x32xf32>
    %c0_286 = arith.constant 0 : index
    %c32_287 = arith.constant 32 : index
    %315 = vector.load %arg11[%c0_286, %c32_287] : memref<38x96xf32, #tpu.memory_space<vmem>>, vector<19x32xf32>
    tpu.vector_store %arg11[%c0_286, %c32_287], %314 {strides = array<i32>} : memref<38x96xf32, #tpu.memory_space<vmem>>, vector<19x32xf32>,
    %c2_288 = arith.constant 2 : index
    %c0_289 = arith.constant 0 : index
    %316 = vector.load %arg10[%c2_288, %c0_289] : memref<21x32xf32, #tpu.memory_space<vmem>>, vector<19x32xf32>
    %c0_290 = arith.constant 0 : index
    %c64_291 = arith.constant 64 : index
    %317 = vector.load %arg11[%c0_290, %c64_291] : memref<38x96xf32, #tpu.memory_space<vmem>>, vector<19x32xf32>
    tpu.vector_store %arg11[%c0_290, %c64_291], %316 {strides = array<i32>} : memref<38x96xf32, #tpu.memory_space<vmem>>, vector<19x32xf32>,
    %c0_292 = arith.constant 0 : index
    %c0_293 = arith.constant 0 : index
    %318 = vector.load %arg10[%c0_292, %c0_293] : memref<21x32xf32, #tpu.memory_space<vmem>>, vector<18x32xf32>
    %c0_294 = arith.constant 0 : index
    %c0_295 = arith.constant 0 : index
    %319 = vector.load %arg12[%c0_294, %c0_295] : memref<36x128xf32, #tpu.memory_space<vmem>>, vector<18x32xf32>
    tpu.vector_store %arg12[%c0_294, %c0_295], %318 {strides = array<i32>} : memref<36x128xf32, #tpu.memory_space<vmem>>, vector<18x32xf32>,
    %c1_296 = arith.constant 1 : index
    %c0_297 = arith.constant 0 : index
    %320 = vector.load %arg10[%c1_296, %c0_297] : memref<21x32xf32, #tpu.memory_space<vmem>>, vector<18x32xf32>
    %c0_298 = arith.constant 0 : index
    %c32_299 = arith.constant 32 : index
    %321 = vector.load %arg12[%c0_298, %c32_299] : memref<36x128xf32, #tpu.memory_space<vmem>>, vector<18x32xf32>
    tpu.vector_store %arg12[%c0_298, %c32_299], %320 {strides = array<i32>} : memref<36x128xf32, #tpu.memory_space<vmem>>, vector<18x32xf32>,
    %c2_300 = arith.constant 2 : index
    %c0_301 = arith.constant 0 : index
    %322 = vector.load %arg10[%c2_300, %c0_301] : memref<21x32xf32, #tpu.memory_space<vmem>>, vector<18x32xf32>
    %c0_302 = arith.constant 0 : index
    %c64_303 = arith.constant 64 : index
    %323 = vector.load %arg12[%c0_302, %c64_303] : memref<36x128xf32, #tpu.memory_space<vmem>>, vector<18x32xf32>
    tpu.vector_store %arg12[%c0_302, %c64_303], %322 {strides = array<i32>} : memref<36x128xf32, #tpu.memory_space<vmem>>, vector<18x32xf32>,
    %c3_304 = arith.constant 3 : index
    %c0_305 = arith.constant 0 : index
    %324 = vector.load %arg10[%c3_304, %c0_305] : memref<21x32xf32, #tpu.memory_space<vmem>>, vector<18x32xf32>
    %c0_306 = arith.constant 0 : index
    %c96_307 = arith.constant 96 : index
    %325 = vector.load %arg12[%c0_306, %c96_307] : memref<36x128xf32, #tpu.memory_space<vmem>>, vector<18x32xf32>
    tpu.vector_store %arg12[%c0_306, %c96_307], %324 {strides = array<i32>} : memref<36x128xf32, #tpu.memory_space<vmem>>, vector<18x32xf32>,
    %c0_308 = arith.constant 0 : index
    %c0_309 = arith.constant 0 : index
    %326 = vector.load %arg10[%c0_308, %c0_309] : memref<21x32xf32, #tpu.memory_space<vmem>>, vector<2x32xf32>
    tpu.vector_store %arg10[%c0_308, %c0_309], %1 {strides = array<i32>} : memref<21x32xf32, #tpu.memory_space<vmem>>, vector<2x32xf32>,
    %c19_310 = arith.constant 19 : index
    %c0_311 = arith.constant 0 : index
    %327 = vector.load %arg10[%c19_310, %c0_311] : memref<21x32xf32, #tpu.memory_space<vmem>>, vector<2x32xf32>
    tpu.vector_store %arg10[%c19_310, %c0_311], %1 {strides = array<i32>} : memref<21x32xf32, #tpu.memory_space<vmem>>, vector<2x32xf32>,
    %328 = vector.extract_strided_slice %295 {offsets = [9, 0], sizes = [9, 32], strides = [1, 1]} : vector<18x32xf32> to vector<9x32xf32>
    %c2_312 = arith.constant 2 : index
    %c0_313 = arith.constant 0 : index
    %329 = tpu.strided_load %arg10[%c2_312, %c0_313] {strides = array<i32: 2, 1>} : memref<21x32xf32, #tpu.memory_space<vmem>>, vector<9x32xf32>
    tpu.strided_store %arg10[%c2_312, %c0_313], %328 {strides = array<i32: 2, 1>} : memref<21x32xf32, #tpu.memory_space<vmem>>, vector<9x32xf32>
    %330 = vector.extract_strided_slice %305 {offsets = [8, 0], sizes = [8, 32], strides = [1, 1]} : vector<16x32xf32> to vector<8x32xf32>
    %c3_314 = arith.constant 3 : index
    %c0_315 = arith.constant 0 : index
    %331 = tpu.strided_load %arg10[%c3_314, %c0_315] {strides = array<i32: 2, 1>} : memref<21x32xf32, #tpu.memory_space<vmem>>, vector<8x32xf32>
    tpu.strided_store %arg10[%c3_314, %c0_315], %330 {strides = array<i32: 2, 1>} : memref<21x32xf32, #tpu.memory_space<vmem>>, vector<8x32xf32>
    %c0_316 = arith.constant 0 : index
    %c0_317 = arith.constant 0 : index
    %332 = vector.load %arg10[%c0_316, %c0_317] : memref<21x32xf32, #tpu.memory_space<vmem>>, vector<19x32xf32>
    %c19_318 = arith.constant 19 : index
    %c0_319 = arith.constant 0 : index
    %333 = vector.load %arg11[%c19_318, %c0_319] : memref<38x96xf32, #tpu.memory_space<vmem>>, vector<19x32xf32>
    tpu.vector_store %arg11[%c19_318, %c0_319], %332 {strides = array<i32>} : memref<38x96xf32, #tpu.memory_space<vmem>>, vector<19x32xf32>,
    %c1_320 = arith.constant 1 : index
    %c0_321 = arith.constant 0 : index
    %334 = vector.load %arg10[%c1_320, %c0_321] : memref<21x32xf32, #tpu.memory_space<vmem>>, vector<19x32xf32>
    %c19_322 = arith.constant 19 : index
    %c32_323 = arith.constant 32 : index
    %335 = vector.load %arg11[%c19_322, %c32_323] : memref<38x96xf32, #tpu.memory_space<vmem>>, vector<19x32xf32>
    tpu.vector_store %arg11[%c19_322, %c32_323], %334 {strides = array<i32>} : memref<38x96xf32, #tpu.memory_space<vmem>>, vector<19x32xf32>,
    %c2_324 = arith.constant 2 : index
    %c0_325 = arith.constant 0 : index
    %336 = vector.load %arg10[%c2_324, %c0_325] : memref<21x32xf32, #tpu.memory_space<vmem>>, vector<19x32xf32>
    %c19_326 = arith.constant 19 : index
    %c64_327 = arith.constant 64 : index
    %337 = vector.load %arg11[%c19_326, %c64_327] : memref<38x96xf32, #tpu.memory_space<vmem>>, vector<19x32xf32>
    tpu.vector_store %arg11[%c19_326, %c64_327], %336 {strides = array<i32>} : memref<38x96xf32, #tpu.memory_space<vmem>>, vector<19x32xf32>,
    %c0_328 = arith.constant 0 : index
    %c0_329 = arith.constant 0 : index
    %338 = vector.load %arg10[%c0_328, %c0_329] : memref<21x32xf32, #tpu.memory_space<vmem>>, vector<18x32xf32>
    %c18_330 = arith.constant 18 : index
    %c0_331 = arith.constant 0 : index
    %339 = vector.load %arg12[%c18_330, %c0_331] : memref<36x128xf32, #tpu.memory_space<vmem>>, vector<18x32xf32>
    tpu.vector_store %arg12[%c18_330, %c0_331], %338 {strides = array<i32>} : memref<36x128xf32, #tpu.memory_space<vmem>>, vector<18x32xf32>,
    %c1_332 = arith.constant 1 : index
    %c0_333 = arith.constant 0 : index
    %340 = vector.load %arg10[%c1_332, %c0_333] : memref<21x32xf32, #tpu.memory_space<vmem>>, vector<18x32xf32>
    %c18_334 = arith.constant 18 : index
    %c32_335 = arith.constant 32 : index
    %341 = vector.load %arg12[%c18_334, %c32_335] : memref<36x128xf32, #tpu.memory_space<vmem>>, vector<18x32xf32>
    tpu.vector_store %arg12[%c18_334, %c32_335], %340 {strides = array<i32>} : memref<36x128xf32, #tpu.memory_space<vmem>>, vector<18x32xf32>,
    %c2_336 = arith.constant 2 : index
    %c0_337 = arith.constant 0 : index
    %342 = vector.load %arg10[%c2_336, %c0_337] : memref<21x32xf32, #tpu.memory_space<vmem>>, vector<18x32xf32>
    %c18_338 = arith.constant 18 : index
    %c64_339 = arith.constant 64 : index
    %343 = vector.load %arg12[%c18_338, %c64_339] : memref<36x128xf32, #tpu.memory_space<vmem>>, vector<18x32xf32>
    tpu.vector_store %arg12[%c18_338, %c64_339], %342 {strides = array<i32>} : memref<36x128xf32, #tpu.memory_space<vmem>>, vector<18x32xf32>,
    %c3_340 = arith.constant 3 : index
    %c0_341 = arith.constant 0 : index
    %344 = vector.load %arg10[%c3_340, %c0_341] : memref<21x32xf32, #tpu.memory_space<vmem>>, vector<18x32xf32>
    %c18_342 = arith.constant 18 : index
    %c96_343 = arith.constant 96 : index
    %345 = vector.load %arg12[%c18_342, %c96_343] : memref<36x128xf32, #tpu.memory_space<vmem>>, vector<18x32xf32>
    tpu.vector_store %arg12[%c18_342, %c96_343], %344 {strides = array<i32>} : memref<36x128xf32, #tpu.memory_space<vmem>>, vector<18x32xf32>,
    %c0_344 = arith.constant 0 : index
    %c0_345 = arith.constant 0 : index
    %346 = vector.load %arg11[%c0_344, %c0_345] : memref<38x96xf32, #tpu.memory_space<vmem>>, vector<38x96xf32>
    %c720 = arith.constant 720 : index
    %c0_346 = arith.constant 0 : index
    %347 = vector.load %arg3[%c720, %c0_346] : memref<976x32xbf16, #tpu.memory_space<vmem>>, vector<96x32xbf16>
    %348 = arith.truncf %346 : vector<38x96xf32> to vector<38x96xbf16>
    %cst_347 = arith.constant dense<0.000000e+00> : vector<38x32xf32>
    %349 = tpu.matmul %348, %347, %cst_347 {dimension_numbers = #tpu.dot_dimension_numbers<[1], [0], [0], [1], [0, 0, 1, 1], [], []>} : vector<38x96xbf16>, vector<96x32xbf16>, vector<38x32xf32> -> vector<38x32xf32>
    %c12 = arith.constant 12 : index
    %c0_348 = arith.constant 0 : index
    %350 = vector.load %arg4[%c12, %c0_348] : memref<16x32xf32, #tpu.memory_space<vmem>>, vector<1x32xf32>
    %351 = vector.broadcast %350 : vector<1x32xf32> to vector<38x32xf32>
    %352 = arith.addf %349, %351 : vector<38x32xf32>
    %c0_349 = arith.constant 0 : index
    %c0_350 = arith.constant 0 : index
    %353 = vector.load %arg12[%c0_349, %c0_350] : memref<36x128xf32, #tpu.memory_space<vmem>>, vector<36x128xf32>
    %c816 = arith.constant 816 : index
    %c0_351 = arith.constant 0 : index
    %354 = vector.load %arg3[%c816, %c0_351] : memref<976x32xbf16, #tpu.memory_space<vmem>>, vector<128x32xbf16>
    %355 = arith.truncf %353 : vector<36x128xf32> to vector<36x128xbf16>
    %cst_352 = arith.constant dense<0.000000e+00> : vector<36x32xf32>
    %356 = tpu.matmul %355, %354, %cst_352 {dimension_numbers = #tpu.dot_dimension_numbers<[1], [0], [0], [1], [0, 0, 1, 1], [], []>} : vector<36x128xbf16>, vector<128x32xbf16>, vector<36x32xf32> -> vector<36x32xf32>
    %c12_353 = arith.constant 12 : index
    %c0_354 = arith.constant 0 : index
    %357 = vector.load %arg4[%c12_353, %c0_354] : memref<16x32xf32, #tpu.memory_space<vmem>>, vector<1x32xf32>
    %358 = vector.broadcast %357 : vector<1x32xf32> to vector<36x32xf32>
    %359 = arith.addf %356, %358 : vector<36x32xf32>
    %c13 = arith.constant 13 : index
    %c0_355 = arith.constant 0 : index
    %360 = vector.load %arg4[%c13, %c0_355] : memref<16x32xf32, #tpu.memory_space<vmem>>, vector<1x32xf32>
    %c14 = arith.constant 14 : index
    %c0_356 = arith.constant 0 : index
    %361 = vector.load %arg4[%c14, %c0_356] : memref<16x32xf32, #tpu.memory_space<vmem>>, vector<1x32xf32>
    %cst_357 = arith.constant dense<0.000000e+00> : vector<32xf32>
    %362 = vector.multi_reduction <add>, %352, %cst_357 [0] : vector<38x32xf32> to vector<32xf32>
    %363 = vector.shape_cast %362 : vector<32xf32> to vector<1x32xf32>
    %cst_358 = arith.constant 0.000000e+00 : f32
    %364 = vector.broadcast %cst_358 : f32 to vector<1x32xf32>
    %365 = arith.addf %364, %363 : vector<1x32xf32>
    %cst_359 = arith.constant dense<0.000000e+00> : vector<32xf32>
    %366 = vector.multi_reduction <add>, %359, %cst_359 [0] : vector<36x32xf32> to vector<32xf32>
    %367 = vector.shape_cast %366 : vector<32xf32> to vector<1x32xf32>
    %368 = arith.addf %365, %367 : vector<1x32xf32>
    %369 = arith.mulf %352, %352 : vector<38x32xf32>
    %cst_360 = arith.constant dense<0.000000e+00> : vector<32xf32>
    %370 = vector.multi_reduction <add>, %369, %cst_360 [0] : vector<38x32xf32> to vector<32xf32>
    %371 = vector.shape_cast %370 : vector<32xf32> to vector<1x32xf32>
    %cst_361 = arith.constant 0.000000e+00 : f32
    %372 = vector.broadcast %cst_361 : f32 to vector<1x32xf32>
    %373 = arith.addf %372, %371 : vector<1x32xf32>
    %374 = arith.mulf %359, %359 : vector<36x32xf32>
    %cst_362 = arith.constant dense<0.000000e+00> : vector<32xf32>
    %375 = vector.multi_reduction <add>, %374, %cst_362 [0] : vector<36x32xf32> to vector<32xf32>
    %376 = vector.shape_cast %375 : vector<32xf32> to vector<1x32xf32>
    %377 = arith.addf %373, %376 : vector<1x32xf32>
    %cst_363 = arith.constant 0.0135135138 : f32
    %378 = vector.broadcast %cst_363 : f32 to vector<1x32xf32>
    %379 = arith.mulf %368, %378 : vector<1x32xf32>
    %cst_364 = arith.constant 0.0135135138 : f32
    %380 = vector.broadcast %cst_364 : f32 to vector<1x32xf32>
    %381 = arith.mulf %377, %380 : vector<1x32xf32>
    %382 = arith.mulf %379, %379 : vector<1x32xf32>
    %383 = arith.subf %381, %382 : vector<1x32xf32>
    %cst_365 = arith.constant 9.99999974E-6 : f32
    %384 = vector.broadcast %cst_365 : f32 to vector<1x32xf32>
    %385 = arith.addf %383, %384 : vector<1x32xf32>
    %386 = math.rsqrt %385 : vector<1x32xf32>
    %387 = arith.mulf %360, %386 : vector<1x32xf32>
    %388 = arith.mulf %379, %387 : vector<1x32xf32>
    %389 = arith.subf %361, %388 : vector<1x32xf32>
    %390 = vector.broadcast %387 : vector<1x32xf32> to vector<38x32xf32>
    %391 = arith.mulf %352, %390 : vector<38x32xf32>
    %392 = vector.broadcast %389 : vector<1x32xf32> to vector<38x32xf32>
    %393 = arith.addf %391, %392 : vector<38x32xf32>
    %394 = arith.negf %393 : vector<38x32xf32>
    %395 = math.exp %394 : vector<38x32xf32>
    %cst_366 = arith.constant 1.000000e+00 : f32
    %396 = vector.broadcast %cst_366 : f32 to vector<38x32xf32>
    %397 = arith.addf %396, %395 : vector<38x32xf32>
    %398 = arith.divf %396, %397 : vector<38x32xf32>
    %399 = arith.mulf %393, %398 : vector<38x32xf32>
    %400 = vector.broadcast %387 : vector<1x32xf32> to vector<36x32xf32>
    %401 = arith.mulf %359, %400 : vector<36x32xf32>
    %402 = vector.broadcast %389 : vector<1x32xf32> to vector<36x32xf32>
    %403 = arith.addf %401, %402 : vector<36x32xf32>
    %404 = arith.negf %403 : vector<36x32xf32>
    %405 = math.exp %404 : vector<36x32xf32>
    %cst_367 = arith.constant 1.000000e+00 : f32
    %406 = vector.broadcast %cst_367 : f32 to vector<36x32xf32>
    %407 = arith.addf %406, %405 : vector<36x32xf32>
    %408 = arith.divf %406, %407 : vector<36x32xf32>
    %409 = arith.mulf %403, %408 : vector<36x32xf32>
    %c15 = arith.constant 15 : index
    %c0_368 = arith.constant 0 : index
    %410 = vector.load %arg4[%c15, %c0_368] : memref<16x32xf32, #tpu.memory_space<vmem>>, vector<1x32xf32>
    %411 = vector.extract_strided_slice %410 {offsets = [0, 0], sizes = [1, 8], strides = [1, 1]} : vector<1x32xf32> to vector<1x8xf32>
    %c944 = arith.constant 944 : index
    %c0_369 = arith.constant 0 : index
    %412 = vector.load %arg3[%c944, %c0_369] : memref<976x32xbf16, #tpu.memory_space<vmem>>, vector<32x32xbf16>
    %413 = arith.truncf %399 : vector<38x32xf32> to vector<38x32xbf16>
    %cst_370 = arith.constant dense<0.000000e+00> : vector<38x32xf32>
    %414 = tpu.matmul %413, %412, %cst_370 {dimension_numbers = #tpu.dot_dimension_numbers<[1], [0], [0], [1], [0, 0, 1, 1], [], []>} : vector<38x32xbf16>, vector<32x32xbf16>, vector<38x32xf32> -> vector<38x32xf32>
    %415 = vector.extract_strided_slice %414 {offsets = [0, 0], sizes = [38, 8], strides = [1, 1]} : vector<38x32xf32> to vector<38x8xf32>
    %416 = vector.broadcast %411 : vector<1x8xf32> to vector<38x8xf32>
    %417 = arith.addf %415, %416 : vector<38x8xf32>
    %c944_371 = arith.constant 944 : index
    %c0_372 = arith.constant 0 : index
    %418 = vector.load %arg3[%c944_371, %c0_372] : memref<976x32xbf16, #tpu.memory_space<vmem>>, vector<32x32xbf16>
    %419 = arith.truncf %409 : vector<36x32xf32> to vector<36x32xbf16>
    %cst_373 = arith.constant dense<0.000000e+00> : vector<36x32xf32>
    %420 = tpu.matmul %419, %418, %cst_373 {dimension_numbers = #tpu.dot_dimension_numbers<[1], [0], [0], [1], [0, 0, 1, 1], [], []>} : vector<36x32xbf16>, vector<32x32xbf16>, vector<36x32xf32> -> vector<36x32xf32>
    %421 = vector.extract_strided_slice %420 {offsets = [0, 0], sizes = [36, 8], strides = [1, 1]} : vector<36x32xf32> to vector<36x8xf32>
    %422 = vector.broadcast %411 : vector<1x8xf32> to vector<36x8xf32>
    %423 = arith.addf %421, %422 : vector<36x8xf32>
    %c0_374 = arith.constant 0 : index
    %c0_375 = arith.constant 0 : index
    %424 = vector.load %arg5[%c0_374, %c0_375] : memref<24x19xbf16, #tpu.memory_space<vmem>>, vector<24x19xbf16>
    %425 = vector.extract_strided_slice %417 {offsets = [0, 0], sizes = [19, 8], strides = [1, 1]} : vector<38x8xf32> to vector<19x8xf32>
    %426 = arith.truncf %425 : vector<19x8xf32> to vector<19x8xbf16>
    %cst_376 = arith.constant dense<0.000000e+00> : vector<24x8xf32>
    %427 = tpu.matmul %424, %426, %cst_376 {dimension_numbers = #tpu.dot_dimension_numbers<[1], [0], [0], [1], [0, 0, 1, 1], [], []>} : vector<24x19xbf16>, vector<19x8xbf16>, vector<24x8xf32> -> vector<24x8xf32>
    %c0_377 = arith.constant 0 : index
    %c0_378 = arith.constant 0 : index
    %428 = vector.load %arg6[%c0_377, %c0_378] : memref<24x18xbf16, #tpu.memory_space<vmem>>, vector<24x18xbf16>
    %429 = vector.extract_strided_slice %423 {offsets = [0, 0], sizes = [18, 8], strides = [1, 1]} : vector<36x8xf32> to vector<18x8xf32>
    %430 = arith.truncf %429 : vector<18x8xf32> to vector<18x8xbf16>
    %cst_379 = arith.constant dense<0.000000e+00> : vector<24x8xf32>
    %431 = tpu.matmul %428, %430, %cst_379 {dimension_numbers = #tpu.dot_dimension_numbers<[1], [0], [0], [1], [0, 0, 1, 1], [], []>} : vector<24x18xbf16>, vector<18x8xbf16>, vector<24x8xf32> -> vector<24x8xf32>
    %432 = arith.addf %427, %431 : vector<24x8xf32>
    %c0_380 = arith.constant 0 : index
    %c0_381 = arith.constant 0 : index
    %433 = vector.load %arg7[%c0_380, %c0_381] : memref<48x8xf32, #tpu.memory_space<vmem>>, vector<24x8xf32>
    tpu.vector_store %arg7[%c0_380, %c0_381], %432 {strides = array<i32>} : memref<48x8xf32, #tpu.memory_space<vmem>>, vector<24x8xf32>,
    %c0_382 = arith.constant 0 : index
    %c0_383 = arith.constant 0 : index
    %434 = vector.load %arg5[%c0_382, %c0_383] : memref<24x19xbf16, #tpu.memory_space<vmem>>, vector<24x19xbf16>
    %435 = vector.extract_strided_slice %417 {offsets = [19, 0], sizes = [19, 8], strides = [1, 1]} : vector<38x8xf32> to vector<19x8xf32>
    %436 = arith.truncf %435 : vector<19x8xf32> to vector<19x8xbf16>
    %cst_384 = arith.constant dense<0.000000e+00> : vector<24x8xf32>
    %437 = tpu.matmul %434, %436, %cst_384 {dimension_numbers = #tpu.dot_dimension_numbers<[1], [0], [0], [1], [0, 0, 1, 1], [], []>} : vector<24x19xbf16>, vector<19x8xbf16>, vector<24x8xf32> -> vector<24x8xf32>
    %c0_385 = arith.constant 0 : index
    %c0_386 = arith.constant 0 : index
    %438 = vector.load %arg6[%c0_385, %c0_386] : memref<24x18xbf16, #tpu.memory_space<vmem>>, vector<24x18xbf16>
    %439 = vector.extract_strided_slice %423 {offsets = [18, 0], sizes = [18, 8], strides = [1, 1]} : vector<36x8xf32> to vector<18x8xf32>
    %440 = arith.truncf %439 : vector<18x8xf32> to vector<18x8xbf16>
    %cst_387 = arith.constant dense<0.000000e+00> : vector<24x8xf32>
    %441 = tpu.matmul %438, %440, %cst_387 {dimension_numbers = #tpu.dot_dimension_numbers<[1], [0], [0], [1], [0, 0, 1, 1], [], []>} : vector<24x18xbf16>, vector<18x8xbf16>, vector<24x8xf32> -> vector<24x8xf32>
    %442 = arith.addf %437, %441 : vector<24x8xf32>
    %c24 = arith.constant 24 : index
    %c0_388 = arith.constant 0 : index
    %443 = vector.load %arg7[%c24, %c0_388] : memref<48x8xf32, #tpu.memory_space<vmem>>, vector<24x8xf32>
    tpu.vector_store %arg7[%c24, %c0_388], %442 {strides = array<i32>} : memref<48x8xf32, #tpu.memory_space<vmem>>, vector<24x8xf32>,
    return
  }
}

</mosaic_0001>

<llo_original>
// kernel: generative_policy_forward.1
$region0: #{generative_policy_forward.1}
  #allocation0 [shape = 'u32[]', space=smem, size = 0x4, offset = 0x4, fixed_abs, tag = 'smem constant byte address 0x4 - core index']
  #allocation1 [shape = 'u32[144,128]{1,0:T(1,128)}', space=vmem, size = 0x12000, scoped, tag = 'internal scratch']
  #allocation2 [shape = 'f32[42,32]{1,0:T(8,128)}', space=vmem, size = 0x6000, scoped, tag = 'scratch operand']
  #allocation3 [shape = 'f32[36,224]{1,0:T(8,128)}', space=vmem, size = 0xa000, scoped, tag = 'scratch operand']
  #allocation4 [shape = 'f32[21,32]{1,0:T(8,128)}', space=vmem, size = 0x3000, scoped, tag = 'scratch operand']
  #allocation5 [shape = 'f32[38,96]{1,0:T(8,128)}', space=vmem, size = 0x5000, scoped, tag = 'scratch operand']
  #allocation6 [shape = 'f32[36,128]{1,0:T(8,128)}', space=vmem, size = 0x5000, scoped, tag = 'scratch operand']
  %s0 = inlined_call_operand.vmem [shape: s32[2], index: 0, kind: input, shape index: {}]
  %s1 = inlined_call_operand.vmem [shape: f32[80,8], index: 1, kind: input, shape index: {}]
  %s2 = inlined_call_operand.vmem [shape: f32[14,8], index: 2, kind: input, shape index: {}]
  %s3 = inlined_call_operand.vmem [shape: bf16[976,32], index: 3, kind: input, shape index: {}]
  %s4 = inlined_call_operand.vmem [shape: f32[16,32], index: 4, kind: input, shape index: {}]
  %s5 = inlined_call_operand.vmem [shape: bf16[24,19], index: 5, kind: input, shape index: {}]
  %s6 = inlined_call_operand.vmem [shape: bf16[24,18], index: 6, kind: input, shape index: {}]
  %s7 = inlined_call_operand.vmem [shape: f32[48,8], index: 7, kind: output, shape index: {}]
  %s8 = sld [smem:[#allocation0]]
  $region42: #{generative_policy_forward.1} parent=0
    _
  %s10 = ssub.s32 1, %s8
  %s11 = scalar_select 0, %s10, %s8
  $region1: #{generative_policy_forward.1} parent=0
    #allocation7 [shape = 'u8[512]{0}', space=smem, size = 0x200, scoped, tag = 'input window, operand 0, single buffered']
    #allocation8 [shape = 's32[1]{0}', space=sflag, size = 0x4, scoped, tag = 'scoped memory for generative_policy_forward.1']
    %12 = vsyncpa [#allocation8], 0
    // Predicated region
    $region2: #{generative_policy_forward.1} parent=1 // pred_check
      _
    $region3: #{generative_policy_forward.1} parent=1 // pred_check_branch
      %14 = sbr.rel (0) target = $region5
    $region4: #{generative_policy_forward.1} parent=1 // pred_region
      %s16 = ssub.s32 16, 16
      %17 = vsyncadd [#allocation8], %s16
      %s19 = sshll.u32 %s0, 4
      %s20 = int_to_ptr.vmem [resolvable:$true] %s19
      %22 = dma.vmem_to_smem %s20, 16, [#allocation7], [#allocation8]
    $region5: #{generative_policy_forward.1} parent=1 // pred_fallthru
      _
    // Predicated region
    $region6: #{generative_policy_forward.1} parent=1 // pred_check
      _
    $region7: #{generative_policy_forward.1} parent=1 // pred_check_branch
      %24 = sbr.rel (0) target = $region9
    $region8: #{generative_policy_forward.1} parent=1 // pred_region
      _
    $region9: #{generative_policy_forward.1} parent=1 // pred_fallthru
      _
    // Predicated region
    $region10: #{generative_policy_forward.1} parent=1 // pred_check
      _
    $region11: #{generative_policy_forward.1} parent=1 // pred_check_branch
      %26 = sbr.rel (0) target = $region13
    $region12: #{generative_policy_forward.1} parent=1 // pred_region
      _
    $region13: #{generative_policy_forward.1} parent=1 // pred_fallthru
      _
    // Predicated region
    $region14: #{generative_policy_forward.1} parent=1 // pred_check
      _
    $region15: #{generative_policy_forward.1} parent=1 // pred_check_branch
      %28 = sbr.rel (0) target = $region17
    $region16: #{generative_policy_forward.1} parent=1 // pred_region
      _
    $region17: #{generative_policy_forward.1} parent=1 // pred_fallthru
      _
    // Predicated region
    $region18: #{generative_policy_forward.1} parent=1 // pred_check
      _
    $region19: #{generative_policy_forward.1} parent=1 // pred_check_branch
      %30 = sbr.rel (0) target = $region21
    $region20: #{generative_policy_forward.1} parent=1 // pred_region
      _
    $region21: #{generative_policy_forward.1} parent=1 // pred_fallthru
      _
    // Predicated region
    $region22: #{generative_policy_forward.1} parent=1 // pred_check
      _
    $region23: #{generative_policy_forward.1} parent=1 // pred_check_branch
      %32 = sbr.rel (0) target = $region25
    $region24: #{generative_policy_forward.1} parent=1 // pred_region
      _
    $region25: #{generative_policy_forward.1} parent=1 // pred_fallthru
      _
    // Predicated region
    $region26: #{generative_policy_forward.1} parent=1 // pred_check
      _
    $region27: #{generative_policy_forward.1} parent=1 // pred_check_branch
      %34 = sbr.rel (0) target = $region29
    $region28: #{generative_policy_forward.1} parent=1 // pred_region
      _
    $region29: #{generative_policy_forward.1} parent=1 // pred_fallthru
      _
    // Predicated region
    $region30: #{generative_policy_forward.1} parent=1 // pred_check
      _
    $region31: #{generative_policy_forward.1} parent=1 // pred_check_branch
      %36 = sbr.rel (0) target = $region33
    $region32: #{generative_policy_forward.1} parent=1 // pred_region
      %37 = dma.done [#allocation8], 16
    $region33: #{generative_policy_forward.1} parent=1 // pred_fallthru
      _
    %38 = sfence
    %v40 = vld [vmem:[%s1] sm:$0xff]
    %v41 = vld [vmem:[%s1 + $0x8] sm:$0xff]
    %v42 = vld [vmem:[%s1 + $0x10] sm:$0xff]
    %v43 = vld [vmem:[%s1 + $0x18] sm:$0xff]
    %v44 = vld [vmem:[%s1 + $0x20] sm:$0xff]
    %v45 = vld [vmem:[%s1 + $0x28] sm:$0xff]
    %v46 = vld [vmem:[%s1 + $0x30] sm:$0xff]
    %v47 = vld [vmem:[%s1 + $0x38] sm:$0xff]
    %v48 = vld [vmem:[%s1 + $0x40] sm:$0xff]
    %v49 = vld [vmem:[%s1 + $0x48] sm:$0xff]
    %v50 = vld [vmem:[%s3] sm:$0xf]
    %v51 = vpack.c.bf16 %v41, %v40
    %v52 = vpack.c.bf16 %v43, %v42
    %v53 = vpack.c.bf16 %v45, %v44
    %v54 = vpack.c.bf16 %v47, %v46
    %v55 = vpack.c.bf16 %v49, %v48
    %v56 = vld [vmem:[%s4] sm:$0x1]
    %v57 = vlaneseq
    %v58 = vshrl.u32 %v57, 7
    %v59 = vsub.s32 0, %v58
    %v60 = vrot.slane %v56, %v59
    %vm61 = vcmask 64512
    %v63 = vsel %vm61, %v51, 0
    %v66 = vsel %vm61, %v52, 0
    %v69 = vsel %vm61, %v53, 0
    %v72 = vsel %vm61, %v54, 0
    %v75 = vsel %vm61, %v55, 0
    %vm77 = vcmask 1043456
    %v79 = vsel %vm77, %v50, 0
    %81 = vmatprep.subr.bf16.mxu0 0
    %82 = vmatpush1.bf16.msra.mxu0 %v79
    %83 = vmatprep.subr.bf16.mxu0 0
    %84 = vmatpush1.bf16.msra.mxu0 0
    %85 = vmatprep.subr.bf16.mxu0 0
    %86 = vmatpush1.bf16.msra.mxu0 0
    %87 = vmatprep.subr.bf16.mxu0 0
    %88 = vmatpush1.bf16.msra.mxu0 0
    %89 = vmatprep.subr.bf16.mxu0 0
    %90 = vmatpush1.bf16.msra.mxu0 0
    %91 = vmatprep.subr.bf16.mxu0 0
    %92 = vmatpush1.bf16.msra.mxu0 0
    %93 = vmatprep.subr.bf16.mxu0 0
    %94 = vmatpush1.bf16.msra.mxu0 0
    %95 = vmatprep.subr.bf16.mxu0 0
    %96 = vmatpush1.bf16.msra.mxu0 0
    %97 = vmatprep.subr.bf16.mxu0 0
    %98 = vmatpush1.bf16.msra.mxu0 0
    %99 = vmatprep.subr.bf16.mxu0 0
    %100 = vmatpush1.bf16.msra.mxu0 0
    %101 = vmatprep.subr.bf16.mxu0 0
    %102 = vmatpush1.bf16.msra.mxu0 0
    %103 = vmatprep.subr.bf16.mxu0 0
    %104 = vmatpush1.bf16.msra.mxu0 0
    %105 = vmatprep.subr.bf16.mxu0 0
    %106 = vmatpush1.bf16.msra.mxu0 0
    %107 = vmatprep.subr.bf16.mxu0 0
    %108 = vmatpush1.bf16.msra.mxu0 0
    %109 = vmatprep.subr.bf16.mxu0 0
    %110 = vmatpush1.bf16.msra.mxu0 0
    %111 = vmatprep.subr.bf16.mxu0 0
    %112 = vmatpush1.bf16.msra.mxu0 0
    %113 = vmatprep.mubr.bf16.mxu0 0
    %114 = vmatmul.mubr.bf16.gmra.mrb[0].mxu0 %v63
    %v115 = vpop.f32.mrb[0].mxu0
    %v116 = vadd.f32 %v60, %v115
    %v117 = vpop.f32.mrb[0].mxu0
    %v118 = vpop.f32.mrb[0].mxu0
    %v119 = vadd.f32 %v60, %v118
    %v120 = vpop.f32.mrb[0].mxu0
    %121 = vmatprep.mubr.bf16.mxu0 0
    %122 = vmatmul.mubr.bf16.gmra.mrb[0].mxu0 %v66
    %v123 = vpop.f32.mrb[0].mxu0
    %v124 = vadd.f32 %v60, %v123
    %v125 = vpop.f32.mrb[0].mxu0
    %v126 = vpop.f32.mrb[0].mxu0
    %v127 = vadd.f32 %v60, %v126
    %v128 = vpop.f32.mrb[0].mxu0
    %129 = vmatprep.mubr.bf16.mxu0 0
    %130 = vmatmul.mubr.bf16.gmra.mrb[0].mxu0 %v69
    %v131 = vpop.f32.mrb[0].mxu0
    %v132 = vadd.f32 %v60, %v131
    %v133 = vpop.f32.mrb[0].mxu0
    %v134 = vpop.f32.mrb[0].mxu0
    %v135 = vadd.f32 %v60, %v134
    %v136 = vpop.f32.mrb[0].mxu0
    %137 = vmatprep.mubr.bf16.mxu0 0
    %138 = vmatmul.mubr.bf16.gmra.mrb[0].mxu0 %v72
    %v139 = vpop.f32.mrb[0].mxu0
    %v140 = vadd.f32 %v60, %v139
    %v141 = vpop.f32.mrb[0].mxu0
    %v142 = vpop.f32.mrb[0].mxu0
    %v143 = vadd.f32 %v60, %v142
    %v144 = vpop.f32.mrb[0].mxu0
    %145 = vmatprep.mubr.bf16.mxu0 0
    %146 = vmatmul.mubr.bf16.gmra.mrb[0].mxu0 %v75
    %v147 = vpop.f32.mrb[0].mxu0
    %v148 = vadd.f32 %v60, %v147
    %v149 = vpop.f32.mrb[0].mxu0
    %v150 = vpop.f32.mrb[0].mxu0
    %v151 = vadd.f32 %v60, %v150
    %v152 = vpop.f32.mrb[0].mxu0
    %153 = vdwg.mxu0
    %vm154 = vcmask 253952
    %155 = vst.msk [vmem:[#allocation2] sm:$0x1] %vm154, 0.0
    %vm156 = vcmask 261120
    %157 = vst.msk [vmem:[#allocation2 + $0x1] sm:$0xff] %vm156, %v116
    %158 = vst.msk [vmem:[#allocation2 + $0x9] sm:$0xff] %vm156, %v119
    %159 = vst.msk [vmem:[#allocation2 + $0x11] sm:$0xff] %vm156, %v124
    %160 = vst.msk [vmem:[#allocation2 + $0x19] sm:$0xff] %vm156, %v127
    %161 = vst.msk [vmem:[#allocation2 + $0x21] sm:$0xff] %vm156, %v132
    %162 = vst.msk [vmem:[#allocation2 + $0x29] sm:$0x1] %vm154, 0.0
    %v163 = vld [vmem:[#allocation2] ss:$2 sm:$0xff]
    %s164 = scalar_lea.vmem [#allocation2], 16
    %v165 = vld [vmem:[%s164] ss:$2 sm:$0xff]
    %s166 = scalar_lea.vmem [#allocation2], 32
    %v167 = vld [vmem:[%s166] ss:$2 sm:$0x3]
    %168 = vst.msk [vmem:[#allocation3] sm:$0xff] %vm156, %v163
    %169 = vst.msk [vmem:[#allocation3 + $0x10] sm:$0xff] %vm156, %v165
    %vm170 = vcmask 254976
    %171 = vst.msk [vmem:[#allocation3 + $0x20] sm:$0x3] %vm170, %v167
    %s172 = scalar_lea.vmem [#allocation2], 1
    %v173 = vld [vmem:[%s172] ss:$2 sm:$0xff]
    %s174 = scalar_lea.vmem [#allocation2], 17
    %v175 = vld [vmem:[%s174] ss:$2 sm:$0xff]
    %s176 = scalar_lea.vmem [#allocation2], 33
    %v177 = vld [vmem:[%s176] ss:$2 sm:$0x3]
    %181 = vrot.lane.b32.xlu0 %v173, 32
    %v182 = vpop.permute.xlu0 %181
    %183 = vrot.lane.b32.xlu0 %v175, 32
    %v184 = vpop.permute.xlu0 %183
    %185 = vrot.lane.b32.xlu0 %v177, 32
    %v186 = vpop.permute.xlu0 %185
    %vm190 = vcmask 523520
    %191 = vst.msk [vmem:[#allocation3] sm:$0xff] %vm190, %v182
    %192 = vst.msk [vmem:[#allocation3 + $0x10] sm:$0xff] %vm190, %v184
    %vm193 = vcmask 517376
    %194 = vst.msk [vmem:[#allocation3 + $0x20] sm:$0x3] %vm193, %v186
    %s195 = scalar_lea.vmem [#allocation2], 2
    %v196 = vld [vmem:[%s195] ss:$2 sm:$0xff]
    %s197 = scalar_lea.vmem [#allocation2], 18
    %v198 = vld [vmem:[%s197] ss:$2 sm:$0xff]
    %s199 = scalar_lea.vmem [#allocation2], 34
    %v200 = vld [vmem:[%s199] ss:$2 sm:$0x3]
    %204 = vrot.lane.b32.xlu0 %v196, 64
    %v205 = vpop.permute.xlu0 %204
    %206 = vrot.lane.b32.xlu0 %v198, 64
    %v207 = vpop.permute.xlu0 %206
    %208 = vrot.lane.b32.xlu0 %v200, 64
    %v209 = vpop.permute.xlu0 %208
    %vm213 = vcmask 785920
    %214 = vst.msk [vmem:[#allocation3] sm:$0xff] %vm213, %v205
    %215 = vst.msk [vmem:[#allocation3 + $0x10] sm:$0xff] %vm213, %v207
    %vm216 = vcmask 779776
    %217 = vst.msk [vmem:[#allocation3 + $0x20] sm:$0x3] %vm216, %v209
    %s218 = scalar_lea.vmem [#allocation2], 3
    %v219 = vld [vmem:[%s218] ss:$2 sm:$0xff]
    %s220 = scalar_lea.vmem [#allocation2], 19
    %v221 = vld [vmem:[%s220] ss:$2 sm:$0xff]
    %s222 = scalar_lea.vmem [#allocation2], 35
    %v223 = vld [vmem:[%s222] ss:$2 sm:$0x3]
    %227 = vrot.lane.b32.xlu0 %v219, 96
    %v228 = vpop.permute.xlu0 %227
    %229 = vrot.lane.b32.xlu0 %v221, 96
    %v230 = vpop.permute.xlu0 %229
    %231 = vrot.lane.b32.xlu0 %v223, 96
    %v232 = vpop.permute.xlu0 %231
    %vm236 = vcmask 1048320
    %237 = vst.msk [vmem:[#allocation3] sm:$0xff] %vm236, %v228
    %238 = vst.msk [vmem:[#allocation3 + $0x10] sm:$0xff] %vm236, %v230
    %vm239 = vcmask 1042176
    %240 = vst.msk [vmem:[#allocation3 + $0x20] sm:$0x3] %vm239, %v232
    %s241 = scalar_lea.vmem [#allocation2], 4
    %v242 = vld [vmem:[%s241] ss:$2 sm:$0xff]
    %s243 = scalar_lea.vmem [#allocation2], 20
    %v244 = vld [vmem:[%s243] ss:$2 sm:$0xff]
    %s245 = scalar_lea.vmem [#allocation2], 36
    %v246 = vld [vmem:[%s245] ss:$2 sm:$0x3]
    %247 = vst.msk [vmem:[#allocation3 + $0x8] sm:$0xff] %vm156, %v242
    %248 = vst.msk [vmem:[#allocation3 + $0x18] sm:$0xff] %vm156, %v244
    %249 = vst.msk [vmem:[#allocation3 + $0x28] sm:$0x3] %vm170, %v246
    %s250 = scalar_lea.vmem [#allocation2], 5
    %v251 = vld [vmem:[%s250] ss:$2 sm:$0xff]
    %s252 = scalar_lea.vmem [#allocation2], 21
    %v253 = vld [vmem:[%s252] ss:$2 sm:$0xff]
    %s254 = scalar_lea.vmem [#allocation2], 37
    %v255 = vld [vmem:[%s254] ss:$2 sm:$0x3]
    %259 = vrot.lane.b32.xlu0 %v251, 32
    %v260 = vpop.permute.xlu0 %259
    %261 = vrot.lane.b32.xlu0 %v253, 32
    %v262 = vpop.permute.xlu0 %261
    %263 = vrot.lane.b32.xlu0 %v255, 32
    %v264 = vpop.permute.xlu0 %263
    %268 = vst.msk [vmem:[#allocation3 + $0x8] sm:$0xff] %vm190, %v260
    %269 = vst.msk [vmem:[#allocation3 + $0x18] sm:$0xff] %vm190, %v262
    %270 = vst.msk [vmem:[#allocation3 + $0x28] sm:$0x3] %vm193, %v264
    %s271 = scalar_lea.vmem [#allocation2], 6
    %v272 = vld [vmem:[%s271] ss:$2 sm:$0xff]
    %s273 = scalar_lea.vmem [#allocation2], 22
    %v274 = vld [vmem:[%s273] ss:$2 sm:$0xff]
    %s275 = scalar_lea.vmem [#allocation2], 38
    %v276 = vld [vmem:[%s275] ss:$2 sm:$0x3]
    %280 = vrot.lane.b32.xlu0 %v272, 64
    %v281 = vpop.permute.xlu0 %280
    %282 = vrot.lane.b32.xlu0 %v274, 64
    %v283 = vpop.permute.xlu0 %282
    %284 = vrot.lane.b32.xlu0 %v276, 64
    %v285 = vpop.permute.xlu0 %284
    %289 = vst.msk [vmem:[#allocation3 + $0x8] sm:$0xff] %vm213, %v281
    %290 = vst.msk [vmem:[#allocation3 + $0x18] sm:$0xff] %vm213, %v283
    %291 = vst.msk [vmem:[#allocation3 + $0x28] sm:$0x3] %vm216, %v285
    %292 = vst.msk [vmem:[#allocation2] sm:$0x1] %vm154, 0.0
    %293 = vst.msk [vmem:[#allocation2 + $0x1] sm:$0xff] %vm156, %v135
    %294 = vst.msk [vmem:[#allocation2 + $0x9] sm:$0xff] %vm156, %v140
    %295 = vst.msk [vmem:[#allocation2 + $0x11] sm:$0xff] %vm156, %v143
    %296 = vst.msk [vmem:[#allocation2 + $0x19] sm:$0xff] %vm156, %v148
    %297 = vst.msk [vmem:[#allocation2 + $0x21] sm:$0xff] %vm156, %v151
    %298 = vst.msk [vmem:[#allocation2 + $0x29] sm:$0x1] %vm154, 0.0
    %v299 = vld [vmem:[#allocation2] ss:$2 sm:$0xff]
    %v300 = vld [vmem:[%s164] ss:$2 sm:$0xff]
    %v301 = vld [vmem:[%s166] ss:$2 sm:$0x3]
    %vm305 = vcmask 1041408
    %v306 = vrot.slane %v299, 6
    %v307 = vrot.slane %v300, 6
    %v308 = vsel %vm305, %v306, %v307
    %v309 = vrot.slane %v301, 6
    %v310 = vsel %vm305, %v307, %v309
    %vm314 = vcmask 261122
    %315 = vst.msk [vmem:[#allocation3 + $0x20] sm:$0xfc] %vm314, %v306
    %316 = vst.msk [vmem:[#allocation3 + $0x30] sm:$0xff] %vm156, %v308
    %vm317 = vcmask 257024
    %318 = vst.msk [vmem:[#allocation3 + $0x40] sm:$0xf] %vm317, %v310
    %v319 = vld [vmem:[%s172] ss:$2 sm:$0xff]
    %v320 = vld [vmem:[%s174] ss:$2 sm:$0xff]
    %v321 = vld [vmem:[%s176] ss:$2 sm:$0x3]
    %v325 = vrot.slane %v319, 6
    %v326 = vrot.slane %v320, 6
    %v327 = vsel %vm305, %v325, %v326
    %v328 = vrot.slane %v321, 6
    %v329 = vsel %vm305, %v326, %v328
    %330 = vrot.lane.b32.xlu0 %v325, 32
    %v331 = vpop.permute.xlu0 %330
    %332 = vrot.lane.b32.xlu0 %v327, 32
    %v333 = vpop.permute.xlu0 %332
    %334 = vrot.lane.b32.xlu0 %v329, 32
    %v335 = vpop.permute.xlu0 %334
    %vm339 = vcmask 523522
    %340 = vst.msk [vmem:[#allocation3 + $0x20] sm:$0xfc] %vm339, %v331
    %341 = vst.msk [vmem:[#allocation3 + $0x30] sm:$0xff] %vm190, %v333
    %vm342 = vcmask 519424
    %343 = vst.msk [vmem:[#allocation3 + $0x40] sm:$0xf] %vm342, %v335
    %v344 = vld [vmem:[%s195] ss:$2 sm:$0xff]
    %v345 = vld [vmem:[%s197] ss:$2 sm:$0xff]
    %v346 = vld [vmem:[%s199] ss:$2 sm:$0x3]
    %v350 = vrot.slane %v344, 6
    %v351 = vrot.slane %v345, 6
    %v352 = vsel %vm305, %v350, %v351
    %v353 = vrot.slane %v346, 6
    %v354 = vsel %vm305, %v351, %v353
    %355 = vrot.lane.b32.xlu0 %v350, 64
    %v356 = vpop.permute.xlu0 %355
    %357 = vrot.lane.b32.xlu0 %v352, 64
    %v358 = vpop.permute.xlu0 %357
    %359 = vrot.lane.b32.xlu0 %v354, 64
    %v360 = vpop.permute.xlu0 %359
    %vm364 = vcmask 785922
    %365 = vst.msk [vmem:[#allocation3 + $0x20] sm:$0xfc] %vm364, %v356
    %366 = vst.msk [vmem:[#allocation3 + $0x30] sm:$0xff] %vm213, %v358
    %vm367 = vcmask 781824
    %368 = vst.msk [vmem:[#allocation3 + $0x40] sm:$0xf] %vm367, %v360
    %v369 = vld [vmem:[%s218] ss:$2 sm:$0xff]
    %v370 = vld [vmem:[%s220] ss:$2 sm:$0xff]
    %v371 = vld [vmem:[%s222] ss:$2 sm:$0x3]
    %v375 = vrot.slane %v369, 6
    %v376 = vrot.slane %v370, 6
    %v377 = vsel %vm305, %v375, %v376
    %v378 = vrot.slane %v371, 6
    %v379 = vsel %vm305, %v376, %v378
    %380 = vrot.lane.b32.xlu0 %v375, 96
    %v381 = vpop.permute.xlu0 %380
    %382 = vrot.lane.b32.xlu0 %v377, 96
    %v383 = vpop.permute.xlu0 %382
    %384 = vrot.lane.b32.xlu0 %v379, 96
    %v385 = vpop.permute.xlu0 %384
    %vm389 = vcmask 1048322
    %390 = vst.msk [vmem:[#allocation3 + $0x20] sm:$0xfc] %vm389, %v381
    %391 = vst.msk [vmem:[#allocation3 + $0x30] sm:$0xff] %vm236, %v383
    %vm392 = vcmask 1044224
    %393 = vst.msk [vmem:[#allocation3 + $0x40] sm:$0xf] %vm392, %v385
    %v394 = vld [vmem:[%s241] ss:$2 sm:$0xff]
    %v395 = vld [vmem:[%s243] ss:$2 sm:$0xff]
    %v396 = vld [vmem:[%s245] ss:$2 sm:$0x3]
    %v400 = vrot.slane %v394, 6
    %v401 = vrot.slane %v395, 6
    %v402 = vsel %vm305, %v400, %v401
    %v403 = vrot.slane %v396, 6
    %v404 = vsel %vm305, %v401, %v403
    %408 = vst.msk [vmem:[#allocation3 + $0x28] sm:$0xfc] %vm314, %v400
    %409 = vst.msk [vmem:[#allocation3 + $0x38] sm:$0xff] %vm156, %v402
    %410 = vst.msk [vmem:[#allocation3 + $0x48] sm:$0xf] %vm317, %v404
    %v411 = vld [vmem:[%s250] ss:$2 sm:$0xff]
    %v412 = vld [vmem:[%s252] ss:$2 sm:$0xff]
    %v413 = vld [vmem:[%s254] ss:$2 sm:$0x3]
    %v417 = vrot.slane %v411, 6
    %v418 = vrot.slane %v412, 6
    %v419 = vsel %vm305, %v417, %v418
    %v420 = vrot.slane %v413, 6
    %v421 = vsel %vm305, %v418, %v420
    %422 = vrot.lane.b32.xlu0 %v417, 32
    %v423 = vpop.permute.xlu0 %422
    %424 = vrot.lane.b32.xlu0 %v419, 32
    %v425 = vpop.permute.xlu0 %424
    %426 = vrot.lane.b32.xlu0 %v421, 32
    %v427 = vpop.permute.xlu0 %426
    %431 = vst.msk [vmem:[#allocation3 + $0x28] sm:$0xfc] %vm339, %v423
    %432 = vst.msk [vmem:[#allocation3 + $0x38] sm:$0xff] %vm190, %v425
    %433 = vst.msk [vmem:[#allocation3 + $0x48] sm:$0xf] %vm342, %v427
    %v434 = vld [vmem:[%s271] ss:$2 sm:$0xff]
    %v435 = vld [vmem:[%s273] ss:$2 sm:$0xff]
    %v436 = vld [vmem:[%s275] ss:$2 sm:$0x3]
    %v440 = vrot.slane %v434, 6
    %v441 = vrot.slane %v435, 6
    %v442 = vsel %vm305, %v440, %v441
    %v443 = vrot.slane %v436, 6
    %v444 = vsel %vm305, %v441, %v443
    %445 = vrot.lane.b32.xlu0 %v440, 64
    %v446 = vpop.permute.xlu0 %445
    %447 = vrot.lane.b32.xlu0 %v442, 64
    %v448 = vpop.permute.xlu0 %447
    %449 = vrot.lane.b32.xlu0 %v444, 64
    %v450 = vpop.permute.xlu0 %449
    %454 = vst.msk [vmem:[#allocation3 + $0x28] sm:$0xfc] %vm364, %v446
    %455 = vst.msk [vmem:[#allocation3 + $0x38] sm:$0xff] %vm213, %v448
    %456 = vst.msk [vmem:[#allocation3 + $0x48] sm:$0xf] %vm367, %v450
    %v457 = vld [vmem:[#allocation3] sm:$0xff]
    %v458 = vld [vmem:[#allocation3 + $0x8] sm:$0xff]
    %v459 = vld [vmem:[#allocation3 + $0x10] sm:$0xff]
    %v460 = vld [vmem:[#allocation3 + $0x18] sm:$0xff]
    %v461 = vld [vmem:[#allocation3 + $0x20] sm:$0xff]
    %v462 = vld [vmem:[#allocation3 + $0x28] sm:$0xff]
    %v463 = vld [vmem:[#allocation3 + $0x30] sm:$0xff]
    %v464 = vld [vmem:[#allocation3 + $0x38] sm:$0xff]
    %v465 = vld [vmem:[#allocation3 + $0x40] sm:$0xf]
    %v466 = vld [vmem:[#allocation3 + $0x48] sm:$0xf]
    %v467 = vld [vmem:[%s3 + $0x4] sm:$0xf]
    %v468 = vld [vmem:[%s3 + $0x8] sm:$0xf]
    %v469 = vld [vmem:[%s3 + $0xc] sm:$0xf]
    %v470 = vld [vmem:[%s3 + $0x10] sm:$0xf]
    %v471 = vld [vmem:[%s3 + $0x14] sm:$0xf]
    %v472 = vld [vmem:[%s3 + $0x18] sm:$0xf]
    %v473 = vld [vmem:[%s3 + $0x1c] sm:$0xf]
    %v474 = vld [vmem:[%s3 + $0x20] sm:$0xf]
    %v475 = vld [vmem:[%s3 + $0x24] sm:$0xf]
    %v476 = vld [vmem:[%s3 + $0x28] sm:$0xf]
    %v477 = vld [vmem:[%s3 + $0x2c] sm:$0xf]
    %v478 = vld [vmem:[%s3 + $0x30] sm:$0xf]
    %v479 = vld [vmem:[%s3 + $0x34] sm:$0xf]
    %v480 = vld [vmem:[%s3 + $0x38] sm:$0xf]
    %v481 = vld [vmem:[%s3 + $0x3c] sm:$0xf]
    %v482 = vld [vmem:[%s3 + $0x40] sm:$0xf]
    %v483 = vld [vmem:[%s3 + $0x44] sm:$0xf]
    %v484 = vld [vmem:[%s3 + $0x48] sm:$0xf]
    %v485 = vld [vmem:[%s3 + $0x4c] sm:$0xf]
    %v486 = vld [vmem:[%s3 + $0x50] sm:$0xf]
    %v487 = vld [vmem:[%s3 + $0x54] sm:$0xf]
    %v488 = vld [vmem:[%s3 + $0x58] sm:$0xf]
    %v489 = vld [vmem:[%s3 + $0x5c] sm:$0xf]
    %v490 = vld [vmem:[%s3 + $0x60] sm:$0xf]
    %v491 = vld [vmem:[%s3 + $0x64] sm:$0xf]
    %v492 = vld [vmem:[%s3 + $0x68] sm:$0xf]
    %v493 = vld [vmem:[%s3 + $0x6c] sm:$0xf]
    %v494 = vld [vmem:[%s3 + $0x70] sm:$0xf]
    %v495 = vpack.c.bf16 %v459, %v457
    %v496 = vpack.c.bf16 %v460, %v458
    %v497 = vpack.c.bf16 %v463, %v461
    %v498 = vpack.c.bf16 %v464, %v462
    %v499 = vpack.c.bf16 %v465, %v465
    %v500 = vpack.c.bf16 %v466, %v466
    %v501 = vld [vmem:[%s4 + $0x1] sm:$0x1]
    %v502 = vlaneseq
    %v503 = vshrl.u32 %v502, 7
    %v504 = vsub.s32 0, %v503
    %v505 = vrot.slane %v501, %v504
    %v534 = vunpack.c.l.b16 %v467
    %v535 = vunpack.c.l.b16 %v468
    %v536 = vunpack.c.l.b16 %v469
    %v537 = vunpack.c.l.b16 %v470
    %v538 = vunpack.c.l.b16 %v471
    %v539 = vunpack.c.l.b16 %v472
    %v540 = vunpack.c.l.b16 %v473
    %v541 = vunpack.c.l.b16 %v474
    %v542 = vunpack.c.l.b16 %v475
    %v543 = vunpack.c.l.b16 %v476
    %v544 = vunpack.c.l.b16 %v477
    %v545 = vunpack.c.l.b16 %v478
    %v546 = vunpack.c.l.b16 %v479
    %v547 = vunpack.c.l.b16 %v480
    %v548 = vunpack.c.l.b16 %v481
    %v549 = vunpack.c.l.b16 %v482
    %v550 = vunpack.c.l.b16 %v483
    %v551 = vunpack.c.l.b16 %v484
    %v552 = vunpack.c.l.b16 %v485
    %v553 = vunpack.c.l.b16 %v486
    %v554 = vunpack.c.l.b16 %v487
    %v555 = vunpack.c.l.b16 %v488
    %v556 = vunpack.c.l.b16 %v489
    %v557 = vunpack.c.l.b16 %v490
    %v558 = vunpack.c.l.b16 %v491
    %v559 = vunpack.c.l.b16 %v492
    %v560 = vunpack.c.l.b16 %v493
    %v561 = vunpack.c.l.b16 %v494
    %v562 = vpack.c.b16 %v535, %v534
    %v563 = vpack.c.b16 %v537, %v536
    %v564 = vpack.c.b16 %v539, %v538
    %v565 = vpack.c.b16 %v541, %v540
    %v566 = vpack.c.b16 %v543, %v542
    %v567 = vpack.c.b16 %v545, %v544
    %v568 = vpack.c.b16 %v547, %v546
    %v569 = vpack.c.b16 %v549, %v548
    %v570 = vpack.c.b16 %v551, %v550
    %v571 = vpack.c.b16 %v553, %v552
    %v572 = vpack.c.b16 %v555, %v554
    %v573 = vpack.c.b16 %v557, %v556
    %v574 = vpack.c.b16 %v559, %v558
    %v575 = vpack.c.b16 %v561, %v560
    %vm590 = vcmask 785408
    %v592 = vsel %vm590, %v496, 0
    %v595 = vsel %vm590, %v498, 0
    %v598 = vsel %vm590, %v500, 0
    %600 = vmatprep.subr.bf16.mxu0 0
    %601 = vmatpush1.bf16.msra.mxu0 %v562
    %602 = vmatprep.subr.bf16.mxu0 0
    %603 = vmatpush1.bf16.msra.mxu0 %v563
    %604 = vmatprep.subr.bf16.mxu0 0
    %605 = vmatpush1.bf16.msra.mxu0 %v564
    %606 = vmatprep.subr.bf16.mxu0 0
    %607 = vmatpush1.bf16.msra.mxu0 %v565
    %608 = vmatprep.subr.bf16.mxu0 0
    %609 = vmatpush1.bf16.msra.mxu0 %v566
    %610 = vmatprep.subr.bf16.mxu0 0
    %611 = vmatpush1.bf16.msra.mxu0 %v567
    %612 = vmatprep.subr.bf16.mxu0 0
    %613 = vmatpush1.bf16.msra.mxu0 %v568
    %614 = vmatprep.subr.bf16.mxu0 0
    %615 = vmatpush1.bf16.msra.mxu0 %v569
    %616 = vmatprep.subr.bf16.mxu0 0
    %617 = vmatpush1.bf16.msra.mxu0 %v570
    %618 = vmatprep.subr.bf16.mxu0 0
    %619 = vmatpush1.bf16.msra.mxu0 %v571
    %620 = vmatprep.subr.bf16.mxu0 0
    %621 = vmatpush1.bf16.msra.mxu0 %v572
    %622 = vmatprep.subr.bf16.mxu0 0
    %623 = vmatpush1.bf16.msra.mxu0 %v573
    %624 = vmatprep.subr.bf16.mxu0 0
    %625 = vmatpush1.bf16.msra.mxu0 %v574
    %626 = vmatprep.subr.bf16.mxu0 0
    %627 = vmatpush1.bf16.msra.mxu0 %v575
    %628 = vmatprep.subr.bf16.mxu0 0
    %629 = vmatpush1.bf16.msra.mxu0 0
    %630 = vmatprep.subr.bf16.mxu0 0
    %631 = vmatpush1.bf16.msra.mxu0 0
    %632 = vmatprep.mubr.bf16.mxu0 %v592
    %633 = vmatmul.mubr.bf16.gmra.mrb[0].mxu0 %v495
    %v634 = vpop.f32.mrb[0].mxu0
    %v635 = vadd.f32 %v505, %v634
    %v636 = vpop.f32.mrb[0].mxu0
    %v637 = vpop.f32.mrb[0].mxu0
    %v638 = vadd.f32 %v505, %v637
    %v639 = vpop.f32.mrb[0].mxu0
    %640 = vmatprep.mubr.bf16.mxu0 %v595
    %641 = vmatmul.mubr.bf16.gmra.mrb[0].mxu0 %v497
    %v642 = vpop.f32.mrb[0].mxu0
    %v643 = vadd.f32 %v505, %v642
    %v644 = vpop.f32.mrb[0].mxu0
    %v645 = vpop.f32.mrb[0].mxu0
    %v646 = vadd.f32 %v505, %v645
    %v647 = vpop.f32.mrb[0].mxu0
    %648 = vmatprep.mubr.bf16.mxu0 %v598
    %649 = vmatmul.mubr.bf16.gmra.mrb[0].mxu0 %v499
    %v650 = vpop.f32.mrb[0].mxu0
    %v651 = vadd.f32 %v505, %v650
    %v652 = vpop.f32.mrb[0].mxu0
    %v653 = vpop.f32.mrb[0].mxu0
    %v654 = vpop.f32.mrb[0].mxu0
    %655 = vdwg.mxu0
    %v656 = vld [vmem:[%s4 + $0x2] sm:$0x1]
    %v657 = vld [vmem:[%s4 + $0x3] sm:$0x1]
    %v658 = vsel %vm156, %v635, 0.0
    %v659 = vsel %vm156, %v638, 0.0
    %v660 = vadd.f32 %v658, %v659
    %v661 = vsel %vm156, %v643, 0.0
    %v662 = vadd.f32 %v660, %v661
    %v663 = vsel %vm156, %v646, 0.0
    %v664 = vadd.f32 %v662, %v663
    %v665 = vsel %vm317, %v651, 0.0
    %v666 = vadd.f32 %v664, %v665
    %v667 = vrot.slane %v666, 4
    %v668 = vadd.f32 %v666, %v667
    %v669 = vrot.slane %v668, 2
    %v670 = vadd.f32 %v668, %v669
    %v671 = vrot.slane %v670, 1
    %v672 = vadd.f32 %v670, %v671
    %v673 = vadd.f32 %v672, 0.0
    %v674 = vmul.f32 %v635, %v635
    %v675 = vmul.f32 %v638, %v638
    %v676 = vmul.f32 %v643, %v643
    %v677 = vmul.f32 %v646, %v646
    %v678 = vmul.f32 %v651, %v651
    %v679 = vsel %vm156, %v674, 0.0
    %v680 = vsel %vm156, %v675, 0.0
    %v681 = vadd.f32 %v679, %v680
    %v682 = vsel %vm156, %v676, 0.0
    %v683 = vadd.f32 %v681, %v682
    %v684 = vsel %vm156, %v677, 0.0
    %v685 = vadd.f32 %v683, %v684
    %v686 = vsel %vm317, %v678, 0.0
    %v687 = vadd.f32 %v685, %v686
    %v688 = vrot.slane %v687, 4
    %v689 = vadd.f32 %v687, %v688
    %v690 = vrot.slane %v689, 2
    %v691 = vadd.f32 %v689, %v690
    %v692 = vrot.slane %v691, 1
    %v693 = vadd.f32 %v691, %v692
    %v694 = vadd.f32 %v693, 0.0
    %v695 = vmul.f32 %v673, 0.027777778
    %v696 = vmul.f32 %v694, 0.027777778
    %v697 = vmul.f32 %v695, %v695
    %v698 = vsub.f32 %v696, %v697
    %v699 = vadd.f32 %v698, 1e-05
    %v700 = vrsqrt.pop %v699
    %v701 = vmul.f32 %v656, %v700
    %v702 = vmul.f32 %v695, %v701
    %v703 = vsub.f32 %v657, %v702
    %v704 = vlaneseq
    %v705 = vshrl.u32 %v704, 7
    %v706 = vsub.s32 0, %v705
    %v707 = vrot.slane %v701, %v706
    %v708 = vmul.f32 %v635, %v707
    %v709 = vmul.f32 %v638, %v707
    %v710 = vmul.f32 %v643, %v707
    %v711 = vmul.f32 %v646, %v707
    %v712 = vmul.f32 %v651, %v707
    %v713 = vlaneseq
    %v714 = vshrl.u32 %v713, 7
    %v715 = vsub.s32 0, %v714
    %v716 = vrot.slane %v703, %v715
    %v717 = vadd.f32 %v708, %v716
    %v718 = vadd.f32 %v709, %v716
    %v719 = vadd.f32 %v710, %v716
    %v720 = vadd.f32 %v711, %v716
    %v721 = vadd.f32 %v712, %v716
    %v722 = vxor.u32 %v717, 2147483648
    %v723 = vxor.u32 %v718, 2147483648
    %v724 = vxor.u32 %v719, 2147483648
    %v725 = vxor.u32 %v720, 2147483648
    %v726 = vxor.u32 %v721, 2147483648
    %v727 = vmul.f32 %v722, 1.442695
    %v728 = vpow.pop %v727
    %v729 = vmul.f32 %v723, 1.442695
    %v730 = vpow.pop %v729
    %v731 = vmul.f32 %v724, 1.442695
    %v732 = vpow.pop %v731
    %v733 = vmul.f32 %v725, 1.442695
    %v734 = vpow.pop %v733
    %v735 = vmul.f32 %v726, 1.442695
    %v736 = vpow.pop %v735
    %v737 = vadd.f32 %v728, 1.0
    %v738 = vadd.f32 %v730, 1.0
    %v739 = vadd.f32 %v732, 1.0
    %v740 = vadd.f32 %v734, 1.0
    %v741 = vadd.f32 %v736, 1.0
    %v742 = vrcp.pop %v737
    %v743 = vmul.f32 1.0, %v742
    %v744 = vrcp.pop %v738
    %v745 = vmul.f32 1.0, %v744
    %v746 = vrcp.pop %v739
    %v747 = vmul.f32 1.0, %v746
    %v748 = vrcp.pop %v740
    %v749 = vmul.f32 1.0, %v748
    %v750 = vrcp.pop %v741
    %v751 = vmul.f32 1.0, %v750
    %v752 = vmul.f32 %v717, %v743
    %v753 = vmul.f32 %v718, %v745
    %v754 = vmul.f32 %v719, %v747
    %v755 = vmul.f32 %v720, %v749
    %v756 = vmul.f32 %v721, %v751
    %757 = vst.msk [vmem:[#allocation2] sm:$0x1] %vm154, 0.0
    %758 = vst.msk [vmem:[#allocation2 + $0x1] sm:$0xff] %vm156, %v752
    %759 = vst.msk [vmem:[#allocation2 + $0x9] sm:$0xff] %vm156, %v753
    %760 = vst.msk [vmem:[#allocation2 + $0x11] sm:$0x3] %vm170, %v754
    %761 = vst.msk [vmem:[#allocation2 + $0x13] sm:$0x1] %vm154, 0.0
    %v762 = vld [vmem:[#allocation2] ss:$2 sm:$0x7f]
    %vm763 = vcmask 260096
    %764 = vst.msk [vmem:[#allocation3] sm:$0x7f] %vm763, %v762
    %v765 = vld [vmem:[%s172] ss:$2 sm:$0x7f]
    %767 = vrot.lane.b32.xlu0 %v765, 32
    %v768 = vpop.permute.xlu0 %767
    %vm770 = vcmask 522496
    %771 = vst.msk [vmem:[#allocation3] sm:$0x7f] %vm770, %v768
    %v772 = vld [vmem:[%s195] ss:$2 sm:$0x7f]
    %774 = vrot.lane.b32.xlu0 %v772, 64
    %v775 = vpop.permute.xlu0 %774
    %vm777 = vcmask 784896
    %778 = vst.msk [vmem:[#allocation3] sm:$0x7f] %vm777, %v775
    %v779 = vld [vmem:[%s218] ss:$2 sm:$0x7f]
    %781 = vrot.lane.b32.xlu0 %v779, 96
    %v782 = vpop.permute.xlu0 %781
    %vm784 = vcmask 1047296
    %785 = vst.msk [vmem:[#allocation3] sm:$0x7f] %vm784, %v782
    %v786 = vld [vmem:[%s241] ss:$2 sm:$0x7f]
    %787 = vst.msk [vmem:[#allocation3 + $0x8] sm:$0x7f] %vm763, %v786
    %v788 = vld [vmem:[%s250] ss:$2 sm:$0x7f]
    %790 = vrot.lane.b32.xlu0 %v788, 32
    %v791 = vpop.permute.xlu0 %790
    %793 = vst.msk [vmem:[#allocation3 + $0x8] sm:$0x7f] %vm770, %v791
    %v794 = vld [vmem:[%s271] ss:$2 sm:$0x7f]
    %796 = vrot.lane.b32.xlu0 %v794, 64
    %v797 = vpop.permute.xlu0 %796
    %799 = vst.msk [vmem:[#allocation3 + $0x8] sm:$0x7f] %vm777, %v797
    %800 = vst.msk [vmem:[#allocation2] sm:$0x1] %vm154, 0.0
    %801 = vst.msk [vmem:[#allocation2 - $0x1] sm:$0xfc] %vm314, %v754
    %802 = vst.msk [vmem:[#allocation2 + $0x7] sm:$0xff] %vm156, %v755
    %803 = vst.msk [vmem:[#allocation2 + $0xf] sm:$0xf] %vm317, %v756
    %804 = vst.msk [vmem:[#allocation2 + $0x13] sm:$0x1] %vm154, 0.0
    %v805 = vld [vmem:[#allocation2] ss:$2 sm:$0x7f]
    %v807 = vrot.slane %v805, 1
    %vm809 = vcmask 261127
    %810 = vst.msk [vmem:[#allocation3] sm:$0x80] %vm809, %v807
    %vm811 = vcmask 259072
    %812 = vst.msk [vmem:[#allocation3 + $0x10] sm:$0x3f] %vm811, %v807
    %v813 = vld [vmem:[%s172] ss:$2 sm:$0x7f]
    %v815 = vrot.slane %v813, 1
    %816 = vrot.lane.b32.xlu0 %v815, 32
    %v817 = vpop.permute.xlu0 %816
    %vm819 = vcmask 523527
    %820 = vst.msk [vmem:[#allocation3] sm:$0x80] %vm819, %v817
    %vm821 = vcmask 521472
    %822 = vst.msk [vmem:[#allocation3 + $0x10] sm:$0x3f] %vm821, %v817
    %v823 = vld [vmem:[%s195] ss:$2 sm:$0x7f]
    %v825 = vrot.slane %v823, 1
    %826 = vrot.lane.b32.xlu0 %v825, 64
    %v827 = vpop.permute.xlu0 %826
    %vm829 = vcmask 785927
    %830 = vst.msk [vmem:[#allocation3] sm:$0x80] %vm829, %v827
    %vm831 = vcmask 783872
    %832 = vst.msk [vmem:[#allocation3 + $0x10] sm:$0x3f] %vm831, %v827
    %v833 = vld [vmem:[%s218] ss:$2 sm:$0x7f]
    %v835 = vrot.slane %v833, 1
    %836 = vrot.lane.b32.xlu0 %v835, 96
    %v837 = vpop.permute.xlu0 %836
    %vm839 = vcmask 1048327
    %840 = vst.msk [vmem:[#allocation3] sm:$0x80] %vm839, %v837
    %vm841 = vcmask 1046272
    %842 = vst.msk [vmem:[#allocation3 + $0x10] sm:$0x3f] %vm841, %v837
    %v843 = vld [vmem:[%s241] ss:$2 sm:$0x7f]
    %v845 = vrot.slane %v843, 1
    %847 = vst.msk [vmem:[#allocation3 + $0x8] sm:$0x80] %vm809, %v845
    %848 = vst.msk [vmem:[#allocation3 + $0x18] sm:$0x3f] %vm811, %v845
    %v849 = vld [vmem:[%s250] ss:$2 sm:$0x7f]
    %v851 = vrot.slane %v849, 1
    %852 = vrot.lane.b32.xlu0 %v851, 32
    %v853 = vpop.permute.xlu0 %852
    %855 = vst.msk [vmem:[#allocation3 + $0x8] sm:$0x80] %vm819, %v853
    %856 = vst.msk [vmem:[#allocation3 + $0x18] sm:$0x3f] %vm821, %v853
    %v857 = vld [vmem:[%s271] ss:$2 sm:$0x7f]
    %v859 = vrot.slane %v857, 1
    %860 = vrot.lane.b32.xlu0 %v859, 64
    %v861 = vpop.permute.xlu0 %860
    %863 = vst.msk [vmem:[#allocation3 + $0x8] sm:$0x80] %vm829, %v861
    %864 = vst.msk [vmem:[#allocation3 + $0x18] sm:$0x3f] %vm831, %v861
    %v865 = vld [vmem:[#allocation3] sm:$0xff]
    %v866 = vld [vmem:[#allocation3 + $0x8] sm:$0xff]
    %v867 = vld [vmem:[#allocation3 + $0x10] sm:$0x3f]
    %v868 = vld [vmem:[#allocation3 + $0x18] sm:$0x3f]
    %v869 = vld [vmem:[%s3 + $0x74] sm:$0xf]
    %v870 = vld [vmem:[%s3 + $0x78] sm:$0xf]
    %v871 = vld [vmem:[%s3 + $0x7c] sm:$0xf]
    %v872 = vld [vmem:[%s3 + $0x80] sm:$0xf]
    %v873 = vld [vmem:[%s3 + $0x84] sm:$0xf]
    %v874 = vld [vmem:[%s3 + $0x88] sm:$0xf]
    %v875 = vld [vmem:[%s3 + $0x8c] sm:$0xf]
    %v876 = vld [vmem:[%s3 + $0x90] sm:$0xf]
    %v877 = vld [vmem:[%s3 + $0x94] sm:$0xf]
    %v878 = vld [vmem:[%s3 + $0x98] sm:$0xf]
    %v879 = vld [vmem:[%s3 + $0x9c] sm:$0xf]
    %v880 = vld [vmem:[%s3 + $0xa0] sm:$0xf]
    %v881 = vld [vmem:[%s3 + $0xa4] sm:$0xf]
    %v882 = vld [vmem:[%s3 + $0xa8] sm:$0xf]
    %v883 = vld [vmem:[%s3 + $0xac] sm:$0xf]
    %v884 = vld [vmem:[%s3 + $0xb0] sm:$0xf]
    %v885 = vld [vmem:[%s3 + $0xb4] sm:$0xf]
    %v886 = vld [vmem:[%s3 + $0xb8] sm:$0xf]
    %v887 = vld [vmem:[%s3 + $0xbc] sm:$0xf]
    %v888 = vld [vmem:[%s3 + $0xc0] sm:$0xf]
    %v889 = vld [vmem:[%s3 + $0xc4] sm:$0xf]
    %v890 = vld [vmem:[%s3 + $0xc8] sm:$0xf]
    %v891 = vld [vmem:[%s3 + $0xcc] sm:$0xf]
    %v892 = vld [vmem:[%s3 + $0xd0] sm:$0xf]
    %v893 = vld [vmem:[%s3 + $0xd4] sm:$0xf]
    %v894 = vld [vmem:[%s3 + $0xd8] sm:$0xf]
    %v895 = vld [vmem:[%s3 + $0xdc] sm:$0xf]
    %v896 = vld [vmem:[%s3 + $0xe0] sm:$0xf]
    %v897 = vpack.c.bf16 %v867, %v865
    %v898 = vpack.c.bf16 %v868, %v866
    %v899 = vld [vmem:[%s4 + $0x4] sm:$0x1]
    %v900 = vlaneseq
    %v901 = vshrl.u32 %v900, 7
    %v902 = vsub.s32 0, %v901
    %v903 = vrot.slane %v899, %v902
    %v932 = vunpack.c.l.b16 %v869
    %v933 = vunpack.c.l.b16 %v870
    %v934 = vunpack.c.l.b16 %v871
    %v935 = vunpack.c.l.b16 %v872
    %v936 = vunpack.c.l.b16 %v873
    %v937 = vunpack.c.l.b16 %v874
    %v938 = vunpack.c.l.b16 %v875
    %v939 = vunpack.c.l.b16 %v876
    %v940 = vunpack.c.l.b16 %v877
    %v941 = vunpack.c.l.b16 %v878
    %v942 = vunpack.c.l.b16 %v879
    %v943 = vunpack.c.l.b16 %v880
    %v944 = vunpack.c.l.b16 %v881
    %v945 = vunpack.c.l.b16 %v882
    %v946 = vunpack.c.l.b16 %v883
    %v947 = vunpack.c.l.b16 %v884
    %v948 = vunpack.c.l.b16 %v885
    %v949 = vunpack.c.l.b16 %v886
    %v950 = vunpack.c.l.b16 %v887
    %v951 = vunpack.c.l.b16 %v888
    %v952 = vunpack.c.l.b16 %v889
    %v953 = vunpack.c.l.b16 %v890
    %v954 = vunpack.c.l.b16 %v891
    %v955 = vunpack.c.l.b16 %v892
    %v956 = vunpack.c.l.b16 %v893
    %v957 = vunpack.c.l.b16 %v894
    %v958 = vunpack.c.l.b16 %v895
    %v959 = vunpack.c.l.b16 %v896
    %v960 = vpack.c.b16 %v933, %v932
    %v961 = vpack.c.b16 %v935, %v934
    %v962 = vpack.c.b16 %v937, %v936
    %v963 = vpack.c.b16 %v939, %v938
    %v964 = vpack.c.b16 %v941, %v940
    %v965 = vpack.c.b16 %v943, %v942
    %v966 = vpack.c.b16 %v945, %v944
    %v967 = vpack.c.b16 %v947, %v946
    %v968 = vpack.c.b16 %v949, %v948
    %v969 = vpack.c.b16 %v951, %v950
    %v970 = vpack.c.b16 %v953, %v952
    %v971 = vpack.c.b16 %v955, %v954
    %v972 = vpack.c.b16 %v957, %v956
    %v973 = vpack.c.b16 %v959, %v958
    %v989 = vsel %vm590, %v898, 0
    %991 = vmatprep.subr.bf16.mxu0 0
    %992 = vmatpush1.bf16.msra.mxu0 %v960
    %993 = vmatprep.subr.bf16.mxu0 0
    %994 = vmatpush1.bf16.msra.mxu0 %v961
    %995 = vmatprep.subr.bf16.mxu0 0
    %996 = vmatpush1.bf16.msra.mxu0 %v962
    %997 = vmatprep.subr.bf16.mxu0 0
    %998 = vmatpush1.bf16.msra.mxu0 %v963
    %999 = vmatprep.subr.bf16.mxu0 0
    %1000 = vmatpush1.bf16.msra.mxu0 %v964
    %1001 = vmatprep.subr.bf16.mxu0 0
    %1002 = vmatpush1.bf16.msra.mxu0 %v965
    %1003 = vmatprep.subr.bf16.mxu0 0
    %1004 = vmatpush1.bf16.msra.mxu0 %v966
    %1005 = vmatprep.subr.bf16.mxu0 0
    %1006 = vmatpush1.bf16.msra.mxu0 %v967
    %1007 = vmatprep.subr.bf16.mxu0 0
    %1008 = vmatpush1.bf16.msra.mxu0 %v968
    %1009 = vmatprep.subr.bf16.mxu0 0
    %1010 = vmatpush1.bf16.msra.mxu0 %v969
    %1011 = vmatprep.subr.bf16.mxu0 0
    %1012 = vmatpush1.bf16.msra.mxu0 %v970
    %1013 = vmatprep.subr.bf16.mxu0 0
    %1014 = vmatpush1.bf16.msra.mxu0 %v971
    %1015 = vmatprep.subr.bf16.mxu0 0
    %1016 = vmatpush1.bf16.msra.mxu0 %v972
    %1017 = vmatprep.subr.bf16.mxu0 0
    %1018 = vmatpush1.bf16.msra.mxu0 %v973
    %1019 = vmatprep.subr.bf16.mxu0 0
    %1020 = vmatpush1.bf16.msra.mxu0 0
    %1021 = vmatprep.subr.bf16.mxu0 0
    %1022 = vmatpush1.bf16.msra.mxu0 0
    %1023 = vmatprep.mubr.bf16.mxu0 %v989
    %1024 = vmatmul.mubr.bf16.gmra.mrb[0].mxu0 %v897
    %v1025 = vpop.f32.mrb[0].mxu0
    %v1026 = vadd.f32 %v903, %v1025
    %v1027 = vpop.f32.mrb[0].mxu0
    %v1028 = vpop.f32.mrb[0].mxu0
    %v1029 = vadd.f32 %v903, %v1028
    %v1030 = vpop.f32.mrb[0].mxu0
    %1031 = vdwg.mxu0
    %v1032 = vld [vmem:[%s4 + $0x5] sm:$0x1]
    %v1033 = vld [vmem:[%s4 + $0x6] sm:$0x1]
    %v1034 = vsel %vm156, %v1026, 0.0
    %v1035 = vsel %vm811, %v1029, 0.0
    %v1036 = vadd.f32 %v1034, %v1035
    %v1037 = vrot.slane %v1036, 4
    %v1038 = vadd.f32 %v1036, %v1037
    %v1039 = vrot.slane %v1038, 2
    %v1040 = vadd.f32 %v1038, %v1039
    %v1041 = vrot.slane %v1040, 1
    %v1042 = vadd.f32 %v1040, %v1041
    %v1043 = vadd.f32 %v1042, 0.0
    %v1044 = vmul.f32 %v1026, %v1026
    %v1045 = vmul.f32 %v1029, %v1029
    %v1046 = vsel %vm156, %v1044, 0.0
    %v1047 = vsel %vm811, %v1045, 0.0
    %v1048 = vadd.f32 %v1046, %v1047
    %v1049 = vrot.slane %v1048, 4
    %v1050 = vadd.f32 %v1048, %v1049
    %v1051 = vrot.slane %v1050, 2
    %v1052 = vadd.f32 %v1050, %v1051
    %v1053 = vrot.slane %v1052, 1
    %v1054 = vadd.f32 %v1052, %v1053
    %v1055 = vadd.f32 %v1054, 0.0
    %v1056 = vmul.f32 %v1043, 0.071428575
    %v1057 = vmul.f32 %v1055, 0.071428575
    %v1058 = vmul.f32 %v1056, %v1056
    %v1059 = vsub.f32 %v1057, %v1058
    %v1060 = vadd.f32 %v1059, 1e-05
    %v1061 = vrsqrt.pop %v1060
    %v1062 = vmul.f32 %v1032, %v1061
    %v1063 = vmul.f32 %v1056, %v1062
    %v1064 = vsub.f32 %v1033, %v1063
    %v1065 = vlaneseq
    %v1066 = vshrl.u32 %v1065, 7
    %v1067 = vsub.s32 0, %v1066
    %v1068 = vrot.slane %v1062, %v1067
    %v1069 = vmul.f32 %v1026, %v1068
    %v1070 = vmul.f32 %v1029, %v1068
    %v1071 = vlaneseq
    %v1072 = vshrl.u32 %v1071, 7
    %v1073 = vsub.s32 0, %v1072
    %v1074 = vrot.slane %v1064, %v1073
    %v1075 = vadd.f32 %v1069, %v1074
    %v1076 = vadd.f32 %v1070, %v1074
    %v1077 = vxor.u32 %v1075, 2147483648
    %v1078 = vxor.u32 %v1076, 2147483648
    %v1079 = vmul.f32 %v1077, 1.442695
    %v1080 = vpow.pop %v1079
    %v1081 = vmul.f32 %v1078, 1.442695
    %v1082 = vpow.pop %v1081
    %v1083 = vadd.f32 %v1080, 1.0
    %v1084 = vadd.f32 %v1082, 1.0
    %v1085 = vrcp.pop %v1083
    %v1086 = vmul.f32 1.0, %v1085
    %v1087 = vrcp.pop %v1084
    %v1088 = vmul.f32 1.0, %v1087
    %v1089 = vmul.f32 %v1075, %v1086
    %v1090 = vmul.f32 %v1076, %v1088
    %v1091 = vld [vmem:[%s3 + $0xe4] sm:$0xf]
    %v1092 = vld [vmem:[%s3 + $0xe8] sm:$0xf]
    %v1093 = vld [vmem:[%s3 + $0xec] sm:$0xf]
    %v1094 = vld [vmem:[%s3 + $0xf0] sm:$0xf]
    %v1095 = vpack.c.bf16 %v1090, %v1089
    %v1100 = vunpack.c.l.b16 %v1091
    %v1101 = vunpack.c.l.b16 %v1092
    %v1102 = vunpack.c.l.b16 %v1093
    %v1103 = vunpack.c.l.b16 %v1094
    %v1104 = vpack.c.b16 %v1101, %v1100
    %v1105 = vpack.c.b16 %v1103, %v1102
    %v1109 = vsel %vm156, %v1095, 0
    %1111 = vmatprep.subr.bf16.mxu0 0
    %1112 = vmatpush1.bf16.msra.mxu0 %v1104
    %1113 = vmatprep.subr.bf16.mxu0 0
    %1114 = vmatpush1.bf16.msra.mxu0 %v1105
    %1115 = vmatprep.subr.bf16.mxu0 0
    %1116 = vmatpush1.bf16.msra.mxu0 0
    %1117 = vmatprep.subr.bf16.mxu0 0
    %1118 = vmatpush1.bf16.msra.mxu0 0
    %1119 = vmatprep.subr.bf16.mxu0 0
    %1120 = vmatpush1.bf16.msra.mxu0 0
    %1121 = vmatprep.subr.bf16.mxu0 0
    %1122 = vmatpush1.bf16.msra.mxu0 0
    %1123 = vmatprep.subr.bf16.mxu0 0
    %1124 = vmatpush1.bf16.msra.mxu0 0
    %1125 = vmatprep.subr.bf16.mxu0 0
    %1126 = vmatpush1.bf16.msra.mxu0 0
    %1127 = vmatprep.subr.bf16.mxu0 0
    %1128 = vmatpush1.bf16.msra.mxu0 0
    %1129 = vmatprep.subr.bf16.mxu0 0
    %1130 = vmatpush1.bf16.msra.mxu0 0
    %1131 = vmatprep.subr.bf16.mxu0 0
    %1132 = vmatpush1.bf16.msra.mxu0 0
    %1133 = vmatprep.subr.bf16.mxu0 0
    %1134 = vmatpush1.bf16.msra.mxu0 0
    %1135 = vmatprep.subr.bf16.mxu0 0
    %1136 = vmatpush1.bf16.msra.mxu0 0
    %1137 = vmatprep.subr.bf16.mxu0 0
    %1138 = vmatpush1.bf16.msra.mxu0 0
    %1139 = vmatprep.subr.bf16.mxu0 0
    %1140 = vmatpush1.bf16.msra.mxu0 0
    %1141 = vmatprep.subr.bf16.mxu0 0
    %1142 = vmatpush1.bf16.msra.mxu0 0
    %1143 = vmatprep.mubr.bf16.mxu0 0
    %1144 = vmatmul.mubr.bf16.gmra.mrb[0].mxu0 %v1109
    %v1145 = vpop.f32.mrb[0].mxu0
    %v1146 = vadd.f32 0.0, %v1145
    %v1147 = vpop.f32.mrb[0].mxu0
    %v1148 = vpop.f32.mrb[0].mxu0
    %v1149 = vadd.f32 0.0, %v1148
    %v1150 = vpop.f32.mrb[0].mxu0
    %1151 = vdwg.mxu0
    %v1152 = vld [vmem:[%s4 + $0x7] sm:$0x1]
    %v1153 = vlaneseq
    %v1154 = vshrl.u32 %v1153, 7
    %v1155 = vsub.s32 0, %v1154
    %v1156 = vrot.slane %v1152, %v1155
    %v1157 = vadd.f32 %v1146, %v1156
    %v1158 = vadd.f32 %v1149, %v1156
    %v1159 = vld [vmem:[%s2] sm:$0xff]
    %v1160 = vld [vmem:[%s2 + $0x8] sm:$0x3f]
    %v1161 = vmul.f32 %v1157, 0.5
    %v1162 = vmul.f32 %v1158, 0.5
    %v1163 = vmul.f32 %v1161, 1.442695
    %v1164 = vpow.pop %v1163
    %v1165 = vmul.f32 %v1162, 1.442695
    %v1166 = vpow.pop %v1165
    %1169 = vrot.lane.b32.xlu0 %v1164, 120
    %v1170 = vpop.permute.xlu0 %1169
    %1171 = vrot.lane.b32.xlu0 %v1166, 120
    %v1172 = vpop.permute.xlu0 %1171
    %v1175 = vmul.f32 %v1159, %v1170
    %v1176 = vmul.f32 %v1160, %v1172
    %v1177 = vadd.f32 %v1157, %v1175
    %v1178 = vadd.f32 %v1158, %v1176
    %v1179 = vlaneseq
    %v1180 = vshrl.u32 %v1179, 7
    %v1181 = vadd.s32 %v1180, 8
    %vm1182 = vcmp.lt.s32.totalorder %v1180, 0
    %vm1183 = vcmp.lt.s32.totalorder %v1181, 0
    %vm1184 = vcmp.ge.s32.totalorder %v1180, 0
    %vm1185 = vcmp.ge.s32.totalorder %v1181, 0
    %s1186 = sld [smem:[#allocation7]]
    %v1187 = vstv %s1186
    %vm1188 = vcmp.lt.s32.totalorder %v1180, %v1187
    %vm1189 = vcmp.lt.s32.totalorder %v1181, %v1187
    %vm1190 = vmand %vm1184, %vm1188
    %vm1191 = vmand %vm1185, %vm1189
    %vm1192 = vmor %vm1182, %vm1190
    %vm1193 = vmor %vm1183, %vm1191
    %vm1194 = vcmp.ge.s32.totalorder %v1180, 7
    %vm1195 = vcmp.ge.s32.totalorder %v1181, 7
    %s1196 = sld [smem:[#allocation7 + $0x1]]
    %s1197 = sadd.s32 %s1196, 7
    %v1198 = vstv %s1197
    %vm1199 = vcmp.lt.s32.totalorder %v1180, %v1198
    %vm1200 = vcmp.lt.s32.totalorder %v1181, %v1198
    %vm1201 = vmand %vm1194, %vm1199
    %vm1202 = vmand %vm1195, %vm1200
    %vm1203 = vmor %vm1192, %vm1201
    %vm1204 = vmor %vm1193, %vm1202
    %v1205 = vsel %vm1203, %v1177, 0.0
    %v1206 = vsel %vm1204, %v1178, 0.0
    %v1207 = vld [vmem:[%s3 + $0xf4] sm:$0xf]
    %v1208 = vpack.c.bf16 %v1206, %v1205
    %v1209 = vld [vmem:[%s4 + $0x8] sm:$0x1]
    %v1210 = vlaneseq
    %v1211 = vshrl.u32 %v1210, 7
    %v1212 = vsub.s32 0, %v1211
    %v1213 = vrot.slane %v1209, %v1212
    %v1215 = vsel %vm61, %v1208, 0
    %v1218 = vsel %vm77, %v1207, 0
    %1220 = vmatprep.subr.bf16.mxu0 0
    %1221 = vmatpush1.bf16.msra.mxu0 %v1218
    %1222 = vmatprep.subr.bf16.mxu0 0
    %1223 = vmatpush1.bf16.msra.mxu0 0
    %1224 = vmatprep.subr.bf16.mxu0 0
    %1225 = vmatpush1.bf16.msra.mxu0 0
    %1226 = vmatprep.subr.bf16.mxu0 0
    %1227 = vmatpush1.bf16.msra.mxu0 0
    %1228 = vmatprep.subr.bf16.mxu0 0
    %1229 = vmatpush1.bf16.msra.mxu0 0
    %1230 = vmatprep.subr.bf16.mxu0 0
    %1231 = vmatpush1.bf16.msra.mxu0 0
    %1232 = vmatprep.subr.bf16.mxu0 0
    %1233 = vmatpush1.bf16.msra.mxu0 0
    %1234 = vmatprep.subr.bf16.mxu0 0
    %1235 = vmatpush1.bf16.msra.mxu0 0
    %1236 = vmatprep.subr.bf16.mxu0 0
    %1237 = vmatpush1.bf16.msra.mxu0 0
    %1238 = vmatprep.subr.bf16.mxu0 0
    %1239 = vmatpush1.bf16.msra.mxu0 0
    %1240 = vmatprep.subr.bf16.mxu0 0
    %1241 = vmatpush1.bf16.msra.mxu0 0
    %1242 = vmatprep.subr.bf16.mxu0 0
    %1243 = vmatpush1.bf16.msra.mxu0 0
    %1244 = vmatprep.subr.bf16.mxu0 0
    %1245 = vmatpush1.bf16.msra.mxu0 0
    %1246 = vmatprep.subr.bf16.mxu0 0
    %1247 = vmatpush1.bf16.msra.mxu0 0
    %1248 = vmatprep.subr.bf16.mxu0 0
    %1249 = vmatpush1.bf16.msra.mxu0 0
    %1250 = vmatprep.subr.bf16.mxu0 0
    %1251 = vmatpush1.bf16.msra.mxu0 0
    %1252 = vmatprep.mubr.bf16.mxu0 0
    %1253 = vmatmul.mubr.bf16.gmra.mrb[0].mxu0 %v1215
    %v1254 = vpop.f32.mrb[0].mxu0
    %v1255 = vadd.f32 %v1213, %v1254
    %v1256 = vpop.f32.mrb[0].mxu0
    %v1257 = vpop.f32.mrb[0].mxu0
    %v1258 = vadd.f32 %v1213, %v1257
    %v1259 = vpop.f32.mrb[0].mxu0
    %1260 = vdwg.mxu0
    %1261 = vst.msk [vmem:[#allocation4] sm:$0x3] %vm170, 0.0
    %1262 = vst.msk [vmem:[#allocation4 + $0x9] sm:$0x3] %vm170, 0.0
    %1263 = vst.msk [vmem:[#allocation4 + $0x2] sm:$0x7f] %vm763, %v1255
    %v1264 = vld [vmem:[#allocation4] sm:$0xff]
    %v1265 = vld [vmem:[#allocation4 + $0x8] sm:$0x1]
    %1266 = vst.msk [vmem:[#allocation5] sm:$0xff] %vm156, %v1264
    %1267 = vst.msk [vmem:[#allocation5 + $0x8] sm:$0x1] %vm154, %v1265
    %v1268 = vld [vmem:[#allocation4 + $0x1] sm:$0xff]
    %v1269 = vld [vmem:[#allocation4 + $0x9] sm:$0x1]
    %1272 = vrot.lane.b32.xlu0 %v1268, 32
    %v1273 = vpop.permute.xlu0 %1272
    %1274 = vrot.lane.b32.xlu0 %v1269, 32
    %v1275 = vpop.permute.xlu0 %1274
    %1278 = vst.msk [vmem:[#allocation5] sm:$0xff] %vm190, %v1273
    %vm1279 = vcmask 516352
    %1280 = vst.msk [vmem:[#allocation5 + $0x8] sm:$0x1] %vm1279, %v1275
    %v1281 = vld [vmem:[#allocation4 + $0x2] sm:$0xff]
    %v1282 = vld [vmem:[#allocation4 + $0xa] sm:$0x1]
    %1285 = vrot.lane.b32.xlu0 %v1281, 64
    %v1286 = vpop.permute.xlu0 %1285
    %1287 = vrot.lane.b32.xlu0 %v1282, 64
    %v1288 = vpop.permute.xlu0 %1287
    %1291 = vst.msk [vmem:[#allocation5] sm:$0xff] %vm213, %v1286
    %vm1292 = vcmask 778752
    %1293 = vst.msk [vmem:[#allocation5 + $0x8] sm:$0x1] %vm1292, %v1288
    %v1294 = vld [vmem:[#allocation4] sm:$0xff]
    %1295 = vst.msk [vmem:[#allocation6] sm:$0xff] %vm156, %v1294
    %v1296 = vld [vmem:[#allocation4 + $0x1] sm:$0xff]
    %1298 = vrot.lane.b32.xlu0 %v1296, 32
    %v1299 = vpop.permute.xlu0 %1298
    %1301 = vst.msk [vmem:[#allocation6] sm:$0xff] %vm190, %v1299
    %v1302 = vld [vmem:[#allocation4 + $0x2] sm:$0xff]
    %1304 = vrot.lane.b32.xlu0 %v1302, 64
    %v1305 = vpop.permute.xlu0 %1304
    %1307 = vst.msk [vmem:[#allocation6] sm:$0xff] %vm213, %v1305
    %v1308 = vld [vmem:[#allocation4 + $0x3] sm:$0xff]
    %1310 = vrot.lane.b32.xlu0 %v1308, 96
    %v1311 = vpop.permute.xlu0 %1310
    %1313 = vst.msk [vmem:[#allocation6] sm:$0xff] %vm236, %v1311
    %1314 = vst.msk [vmem:[#allocation4] sm:$0x3] %vm170, 0.0
    %1315 = vst.msk [vmem:[#allocation4 + $0x9] sm:$0x3] %vm170, 0.0
    %1316 = vst.msk [vmem:[#allocation4 - $0x5] sm:$0x80] %vm809, %v1255
    %1317 = vst.msk [vmem:[#allocation4 + $0x3] sm:$0x3f] %vm811, %v1258
    %v1318 = vld [vmem:[#allocation4] sm:$0xff]
    %v1319 = vld [vmem:[#allocation4 + $0x8] sm:$0x1]
    %1320 = vst.msk [vmem:[#allocation5 + $0x9] sm:$0xff] %vm156, %v1318
    %1321 = vst.msk [vmem:[#allocation5 + $0x11] sm:$0x1] %vm154, %v1319
    %v1322 = vld [vmem:[#allocation4 + $0x1] sm:$0xff]
    %v1323 = vld [vmem:[#allocation4 + $0x9] sm:$0x1]
    %1326 = vrot.lane.b32.xlu0 %v1322, 32
    %v1327 = vpop.permute.xlu0 %1326
    %1328 = vrot.lane.b32.xlu0 %v1323, 32
    %v1329 = vpop.permute.xlu0 %1328
    %1332 = vst.msk [vmem:[#allocation5 + $0x9] sm:$0xff] %vm190, %v1327
    %1333 = vst.msk [vmem:[#allocation5 + $0x11] sm:$0x1] %vm1279, %v1329
    %v1334 = vld [vmem:[#allocation4 + $0x2] sm:$0xff]
    %v1335 = vld [vmem:[#allocation4 + $0xa] sm:$0x1]
    %1338 = vrot.lane.b32.xlu0 %v1334, 64
    %v1339 = vpop.permute.xlu0 %1338
    %1340 = vrot.lane.b32.xlu0 %v1335, 64
    %v1341 = vpop.permute.xlu0 %1340
    %1344 = vst.msk [vmem:[#allocation5 + $0x9] sm:$0xff] %vm213, %v1339
    %1345 = vst.msk [vmem:[#allocation5 + $0x11] sm:$0x1] %vm1292, %v1341
    %v1346 = vld [vmem:[#allocation4] sm:$0xff]
    %1347 = vst.msk [vmem:[#allocation6 + $0x8] sm:$0xff] %vm156, %v1346
    %v1348 = vld [vmem:[#allocation4 + $0x1] sm:$0xff]
    %1350 = vrot.lane.b32.xlu0 %v1348, 32
    %v1351 = vpop.permute.xlu0 %1350
    %1353 = vst.msk [vmem:[#allocation6 + $0x8] sm:$0xff] %vm190, %v1351
    %v1354 = vld [vmem:[#allocation4 + $0x2] sm:$0xff]
    %1356 = vrot.lane.b32.xlu0 %v1354, 64
    %v1357 = vpop.permute.xlu0 %1356
    %1359 = vst.msk [vmem:[#allocation6 + $0x8] sm:$0xff] %vm213, %v1357
    %v1360 = vld [vmem:[#allocation4 + $0x3] sm:$0xff]
    %1362 = vrot.lane.b32.xlu0 %v1360, 96
    %v1363 = vpop.permute.xlu0 %1362
    %1365 = vst.msk [vmem:[#allocation6 + $0x8] sm:$0xff] %vm236, %v1363
    %v1366 = vld [vmem:[#allocation5] sm:$0xff]
    %v1367 = vld [vmem:[#allocation5 + $0x8] sm:$0xff]
    %v1368 = vld [vmem:[#allocation5 + $0x10] sm:$0x3]
    %v1369 = vld [vmem:[%s3 + $0xf8] sm:$0xf]
    %v1370 = vld [vmem:[%s3 + $0xfc] sm:$0xf]
    %v1371 = vld [vmem:[%s3 + $0x100] sm:$0xf]
    %v1372 = vld [vmem:[%s3 + $0x104] sm:$0xf]
    %v1373 = vld [vmem:[%s3 + $0x108] sm:$0xf]
    %v1374 = vld [vmem:[%s3 + $0x10c] sm:$0xf]
    %v1375 = vld [vmem:[%s3 + $0x110] sm:$0xf]
    %v1376 = vld [vmem:[%s3 + $0x114] sm:$0xf]
    %v1377 = vld [vmem:[%s3 + $0x118] sm:$0xf]
    %v1378 = vld [vmem:[%s3 + $0x11c] sm:$0xf]
    %v1379 = vld [vmem:[%s3 + $0x120] sm:$0xf]
    %v1380 = vld [vmem:[%s3 + $0x124] sm:$0xf]
    %v1381 = vpack.c.bf16 %v1367, %v1366
    %v1382 = vpack.c.bf16 %v1368, %v1368
    %v1383 = vld [vmem:[%s4 + $0x9] sm:$0x1]
    %v1384 = vlaneseq
    %v1385 = vshrl.u32 %v1384, 7
    %v1386 = vsub.s32 0, %v1385
    %v1387 = vrot.slane %v1383, %v1386
    %v1400 = vunpack.c.l.b16 %v1369
    %v1401 = vunpack.c.l.b16 %v1370
    %v1402 = vunpack.c.l.b16 %v1371
    %v1403 = vunpack.c.l.b16 %v1372
    %v1404 = vunpack.c.l.b16 %v1373
    %v1405 = vunpack.c.l.b16 %v1374
    %v1406 = vunpack.c.l.b16 %v1375
    %v1407 = vunpack.c.l.b16 %v1376
    %v1408 = vunpack.c.l.b16 %v1377
    %v1409 = vunpack.c.l.b16 %v1378
    %v1410 = vunpack.c.l.b16 %v1379
    %v1411 = vunpack.c.l.b16 %v1380
    %v1412 = vpack.c.b16 %v1401, %v1400
    %v1413 = vpack.c.b16 %v1403, %v1402
    %v1414 = vpack.c.b16 %v1405, %v1404
    %v1415 = vpack.c.b16 %v1407, %v1406
    %v1416 = vpack.c.b16 %v1409, %v1408
    %v1417 = vpack.c.b16 %v1411, %v1410
    %v1425 = vsel %vm590, %v1381, 0
    %v1428 = vsel %vm590, %v1382, 0
    %1430 = vmatprep.subr.bf16.mxu0 0
    %1431 = vmatpush1.bf16.msra.mxu0 %v1412
    %1432 = vmatprep.subr.bf16.mxu0 0
    %1433 = vmatpush1.bf16.msra.mxu0 %v1413
    %1434 = vmatprep.subr.bf16.mxu0 0
    %1435 = vmatpush1.bf16.msra.mxu0 %v1414
    %1436 = vmatprep.subr.bf16.mxu0 0
    %1437 = vmatpush1.bf16.msra.mxu0 %v1415
    %1438 = vmatprep.subr.bf16.mxu0 0
    %1439 = vmatpush1.bf16.msra.mxu0 %v1416
    %1440 = vmatprep.subr.bf16.mxu0 0
    %1441 = vmatpush1.bf16.msra.mxu0 %v1417
    %1442 = vmatprep.subr.bf16.mxu0 0
    %1443 = vmatpush1.bf16.msra.mxu0 0
    %1444 = vmatprep.subr.bf16.mxu0 0
    %1445 = vmatpush1.bf16.msra.mxu0 0
    %1446 = vmatprep.subr.bf16.mxu0 0
    %1447 = vmatpush1.bf16.msra.mxu0 0
    %1448 = vmatprep.subr.bf16.mxu0 0
    %1449 = vmatpush1.bf16.msra.mxu0 0
    %1450 = vmatprep.subr.bf16.mxu0 0
    %1451 = vmatpush1.bf16.msra.mxu0 0
    %1452 = vmatprep.subr.bf16.mxu0 0
    %1453 = vmatpush1.bf16.msra.mxu0 0
    %1454 = vmatprep.subr.bf16.mxu0 0
    %1455 = vmatpush1.bf16.msra.mxu0 0
    %1456 = vmatprep.subr.bf16.mxu0 0
    %1457 = vmatpush1.bf16.msra.mxu0 0
    %1458 = vmatprep.subr.bf16.mxu0 0
    %1459 = vmatpush1.bf16.msra.mxu0 0
    %1460 = vmatprep.subr.bf16.mxu0 0
    %1461 = vmatpush1.bf16.msra.mxu0 0
    %1462 = vmatprep.mubr.bf16.mxu0 0
    %1463 = vmatmul.mubr.bf16.gmra.mrb[0].mxu0 %v1425
    %v1464 = vpop.f32.mrb[0].mxu0
    %v1465 = vadd.f32 %v1387, %v1464
    %v1466 = vpop.f32.mrb[0].mxu0
    %v1467 = vpop.f32.mrb[0].mxu0
    %v1468 = vadd.f32 %v1387, %v1467
    %v1469 = vpop.f32.mrb[0].mxu0
    %1470 = vmatprep.mubr.bf16.mxu0 0
    %1471 = vmatmul.mubr.bf16.gmra.mrb[0].mxu0 %v1428
    %v1472 = vpop.f32.mrb[0].mxu0
    %v1473 = vadd.f32 %v1387, %v1472
    %v1474 = vpop.f32.mrb[0].mxu0
    %v1475 = vpop.f32.mrb[0].mxu0
    %v1476 = vpop.f32.mrb[0].mxu0
    %1477 = vdwg.mxu0
    %v1478 = vld [vmem:[#allocation6] sm:$0xff]
    %v1479 = vld [vmem:[#allocation6 + $0x8] sm:$0xff]
    %v1480 = vld [vmem:[%s3 + $0x128] sm:$0xf]
    %v1481 = vld [vmem:[%s3 + $0x12c] sm:$0xf]
    %v1482 = vld [vmem:[%s3 + $0x130] sm:$0xf]
    %v1483 = vld [vmem:[%s3 + $0x134] sm:$0xf]
    %v1484 = vld [vmem:[%s3 + $0x138] sm:$0xf]
    %v1485 = vld [vmem:[%s3 + $0x13c] sm:$0xf]
    %v1486 = vld [vmem:[%s3 + $0x140] sm:$0xf]
    %v1487 = vld [vmem:[%s3 + $0x144] sm:$0xf]
    %v1488 = vld [vmem:[%s3 + $0x148] sm:$0xf]
    %v1489 = vld [vmem:[%s3 + $0x14c] sm:$0xf]
    %v1490 = vld [vmem:[%s3 + $0x150] sm:$0xf]
    %v1491 = vld [vmem:[%s3 + $0x154] sm:$0xf]
    %v1492 = vld [vmem:[%s3 + $0x158] sm:$0xf]
    %v1493 = vld [vmem:[%s3 + $0x15c] sm:$0xf]
    %v1494 = vld [vmem:[%s3 + $0x160] sm:$0xf]
    %v1495 = vld [vmem:[%s3 + $0x164] sm:$0xf]
    %v1496 = vpack.c.bf16 %v1479, %v1478
    %v1513 = vunpack.c.l.b16 %v1480
    %v1514 = vunpack.c.l.b16 %v1481
    %v1515 = vunpack.c.l.b16 %v1482
    %v1516 = vunpack.c.l.b16 %v1483
    %v1517 = vunpack.c.l.b16 %v1484
    %v1518 = vunpack.c.l.b16 %v1485
    %v1519 = vunpack.c.l.b16 %v1486
    %v1520 = vunpack.c.l.b16 %v1487
    %v1521 = vunpack.c.l.b16 %v1488
    %v1522 = vunpack.c.l.b16 %v1489
    %v1523 = vunpack.c.l.b16 %v1490
    %v1524 = vunpack.c.l.b16 %v1491
    %v1525 = vunpack.c.l.b16 %v1492
    %v1526 = vunpack.c.l.b16 %v1493
    %v1527 = vunpack.c.l.b16 %v1494
    %v1528 = vunpack.c.l.b16 %v1495
    %v1529 = vpack.c.b16 %v1514, %v1513
    %v1530 = vpack.c.b16 %v1516, %v1515
    %v1531 = vpack.c.b16 %v1518, %v1517
    %v1532 = vpack.c.b16 %v1520, %v1519
    %v1533 = vpack.c.b16 %v1522, %v1521
    %v1534 = vpack.c.b16 %v1524, %v1523
    %v1535 = vpack.c.b16 %v1526, %v1525
    %v1536 = vpack.c.b16 %v1528, %v1527
    %1545 = vmatprep.subr.bf16.mxu0 0
    %1546 = vmatpush1.bf16.msra.mxu0 %v1529
    %1547 = vmatprep.subr.bf16.mxu0 0
    %1548 = vmatpush1.bf16.msra.mxu0 %v1530
    %1549 = vmatprep.subr.bf16.mxu0 0
    %1550 = vmatpush1.bf16.msra.mxu0 %v1531
    %1551 = vmatprep.subr.bf16.mxu0 0
    %1552 = vmatpush1.bf16.msra.mxu0 %v1532
    %1553 = vmatprep.subr.bf16.mxu0 0
    %1554 = vmatpush1.bf16.msra.mxu0 %v1533
    %1555 = vmatprep.subr.bf16.mxu0 0
    %1556 = vmatpush1.bf16.msra.mxu0 %v1534
    %1557 = vmatprep.subr.bf16.mxu0 0
    %1558 = vmatpush1.bf16.msra.mxu0 %v1535
    %1559 = vmatprep.subr.bf16.mxu0 0
    %1560 = vmatpush1.bf16.msra.mxu0 %v1536
    %1561 = vmatprep.subr.bf16.mxu0 0
    %1562 = vmatpush1.bf16.msra.mxu0 0
    %1563 = vmatprep.subr.bf16.mxu0 0
    %1564 = vmatpush1.bf16.msra.mxu0 0
    %1565 = vmatprep.subr.bf16.mxu0 0
    %1566 = vmatpush1.bf16.msra.mxu0 0
    %1567 = vmatprep.subr.bf16.mxu0 0
    %1568 = vmatpush1.bf16.msra.mxu0 0
    %1569 = vmatprep.subr.bf16.mxu0 0
    %1570 = vmatpush1.bf16.msra.mxu0 0
    %1571 = vmatprep.subr.bf16.mxu0 0
    %1572 = vmatpush1.bf16.msra.mxu0 0
    %1573 = vmatprep.subr.bf16.mxu0 0
    %1574 = vmatpush1.bf16.msra.mxu0 0
    %1575 = vmatprep.subr.bf16.mxu0 0
    %1576 = vmatpush1.bf16.msra.mxu0 0
    %1577 = vmatprep.mubr.bf16.mxu0 0
    %1578 = vmatmul.mubr.bf16.gmra.mrb[0].mxu0 %v1496
    %v1579 = vpop.f32.mrb[0].mxu0
    %v1580 = vadd.f32 %v1387, %v1579
    %v1581 = vpop.f32.mrb[0].mxu0
    %v1582 = vpop.f32.mrb[0].mxu0
    %v1583 = vadd.f32 %v1387, %v1582
    %v1584 = vpop.f32.mrb[0].mxu0
    %1585 = vdwg.mxu0
    %v1586 = vld [vmem:[%s4 + $0xa] sm:$0x1]
    %v1587 = vld [vmem:[%s4 + $0xb] sm:$0x1]
    %v1588 = vsel %vm156, %v1465, 0.0
    %v1589 = vsel %vm156, %v1468, 0.0
    %v1590 = vadd.f32 %v1588, %v1589
    %v1591 = vsel %vm170, %v1473, 0.0
    %v1592 = vadd.f32 %v1590, %v1591
    %v1593 = vrot.slane %v1592, 4
    %v1594 = vadd.f32 %v1592, %v1593
    %v1595 = vrot.slane %v1594, 2
    %v1596 = vadd.f32 %v1594, %v1595
    %v1597 = vrot.slane %v1596, 1
    %v1598 = vadd.f32 %v1596, %v1597
    %v1599 = vadd.f32 %v1598, 0.0
    %v1600 = vsel %vm156, %v1580, 0.0
    %v1601 = vsel %vm156, %v1583, 0.0
    %v1602 = vadd.f32 %v1600, %v1601
    %v1603 = vrot.slane %v1602, 4
    %v1604 = vadd.f32 %v1602, %v1603
    %v1605 = vrot.slane %v1604, 2
    %v1606 = vadd.f32 %v1604, %v1605
    %v1607 = vrot.slane %v1606, 1
    %v1608 = vadd.f32 %v1606, %v1607
    %v1609 = vadd.f32 %v1599, %v1608
    %v1610 = vmul.f32 %v1465, %v1465
    %v1611 = vmul.f32 %v1468, %v1468
    %v1612 = vmul.f32 %v1473, %v1473
    %v1613 = vsel %vm156, %v1610, 0.0
    %v1614 = vsel %vm156, %v1611, 0.0
    %v1615 = vadd.f32 %v1613, %v1614
    %v1616 = vsel %vm170, %v1612, 0.0
    %v1617 = vadd.f32 %v1615, %v1616
    %v1618 = vrot.slane %v1617, 4
    %v1619 = vadd.f32 %v1617, %v1618
    %v1620 = vrot.slane %v1619, 2
    %v1621 = vadd.f32 %v1619, %v1620
    %v1622 = vrot.slane %v1621, 1
    %v1623 = vadd.f32 %v1621, %v1622
    %v1624 = vadd.f32 %v1623, 0.0
    %v1625 = vmul.f32 %v1580, %v1580
    %v1626 = vmul.f32 %v1583, %v1583
    %v1627 = vsel %vm156, %v1625, 0.0
    %v1628 = vsel %vm156, %v1626, 0.0
    %v1629 = vadd.f32 %v1627, %v1628
    %v1630 = vrot.slane %v1629, 4
    %v1631 = vadd.f32 %v1629, %v1630
    %v1632 = vrot.slane %v1631, 2
    %v1633 = vadd.f32 %v1631, %v1632
    %v1634 = vrot.slane %v1633, 1
    %v1635 = vadd.f32 %v1633, %v1634
    %v1636 = vadd.f32 %v1624, %v1635
    %v1637 = vmul.f32 %v1609, 0.029411765
    %v1638 = vmul.f32 %v1636, 0.029411765
    %v1639 = vmul.f32 %v1637, %v1637
    %v1640 = vsub.f32 %v1638, %v1639
    %v1641 = vadd.f32 %v1640, 1e-05
    %v1642 = vrsqrt.pop %v1641
    %v1643 = vmul.f32 %v1586, %v1642
    %v1644 = vmul.f32 %v1637, %v1643
    %v1645 = vsub.f32 %v1587, %v1644
    %v1646 = vlaneseq
    %v1647 = vshrl.u32 %v1646, 7
    %v1648 = vsub.s32 0, %v1647
    %v1649 = vrot.slane %v1643, %v1648
    %v1650 = vmul.f32 %v1465, %v1649
    %v1651 = vmul.f32 %v1468, %v1649
    %v1652 = vmul.f32 %v1473, %v1649
    %v1653 = vlaneseq
    %v1654 = vshrl.u32 %v1653, 7
    %v1655 = vsub.s32 0, %v1654
    %v1656 = vrot.slane %v1645, %v1655
    %v1657 = vadd.f32 %v1650, %v1656
    %v1658 = vadd.f32 %v1651, %v1656
    %v1659 = vadd.f32 %v1652, %v1656
    %v1660 = vxor.u32 %v1657, 2147483648
    %v1661 = vxor.u32 %v1658, 2147483648
    %v1662 = vxor.u32 %v1659, 2147483648
    %v1663 = vmul.f32 %v1660, 1.442695
    %v1664 = vpow.pop %v1663
    %v1665 = vmul.f32 %v1661, 1.442695
    %v1666 = vpow.pop %v1665
    %v1667 = vmul.f32 %v1662, 1.442695
    %v1668 = vpow.pop %v1667
    %v1669 = vadd.f32 %v1664, 1.0
    %v1670 = vadd.f32 %v1666, 1.0
    %v1671 = vadd.f32 %v1668, 1.0
    %v1672 = vrcp.pop %v1669
    %v1673 = vmul.f32 1.0, %v1672
    %v1674 = vrcp.pop %v1670
    %v1675 = vmul.f32 1.0, %v1674
    %v1676 = vrcp.pop %v1671
    %v1677 = vmul.f32 1.0, %v1676
    %v1678 = vmul.f32 %v1657, %v1673
    %v1679 = vmul.f32 %v1658, %v1675
    %v1680 = vmul.f32 %v1659, %v1677
    %v1681 = vmul.f32 %v1580, %v1649
    %v1682 = vmul.f32 %v1583, %v1649
    %v1683 = vadd.f32 %v1681, %v1656
    %v1684 = vadd.f32 %v1682, %v1656
    %v1685 = vxor.u32 %v1683, 2147483648
    %v1686 = vxor.u32 %v1684, 2147483648
    %v1687 = vmul.f32 %v1685, 1.442695
    %v1688 = vpow.pop %v1687
    %v1689 = vmul.f32 %v1686, 1.442695
    %v1690 = vpow.pop %v1689
    %v1691 = vadd.f32 %v1688, 1.0
    %v1692 = vadd.f32 %v1690, 1.0
    %v1693 = vrcp.pop %v1691
    %v1694 = vmul.f32 1.0, %v1693
    %v1695 = vrcp.pop %v1692
    %v1696 = vmul.f32 1.0, %v1695
    %v1697 = vmul.f32 %v1683, %v1694
    %v1698 = vmul.f32 %v1684, %v1696
    %1699 = vst.msk [vmem:[#allocation4] sm:$0x3] %vm170, 0.0
    %1700 = vst.msk [vmem:[#allocation4 + $0x13] sm:$0x3] %vm170, 0.0
    %s1701 = scalar_lea.vmem [#allocation4], 2
    %1702 = vst [vmem:[%s1701] ss:$2 sm:$0xff] %v1678
    %s1703 = scalar_lea.vmem [#allocation4], 18
    %1704 = vst [vmem:[%s1703] ss:$2 sm:$0x1] %v1679
    %s1705 = scalar_lea.vmem [#allocation4], 3
    %1706 = vst [vmem:[%s1705] ss:$2 sm:$0xff] %v1697
    %v1707 = vld [vmem:[#allocation4] sm:$0xff]
    %v1708 = vld [vmem:[#allocation4 + $0x8] sm:$0xff]
    %v1709 = vld [vmem:[#allocation4 + $0x10] sm:$0x7]
    %1710 = vst.msk [vmem:[#allocation5] sm:$0xff] %vm156, %v1707
    %1711 = vst.msk [vmem:[#allocation5 + $0x8] sm:$0xff] %vm156, %v1708
    %vm1712 = vcmask 256000
    %1713 = vst.msk [vmem:[#allocation5 + $0x10] sm:$0x7] %vm1712, %v1709
    %v1714 = vld [vmem:[#allocation4 + $0x1] sm:$0xff]
    %v1715 = vld [vmem:[#allocation4 + $0x9] sm:$0xff]
    %v1716 = vld [vmem:[#allocation4 + $0x11] sm:$0x7]
    %1720 = vrot.lane.b32.xlu0 %v1714, 32
    %v1721 = vpop.permute.xlu0 %1720
    %1722 = vrot.lane.b32.xlu0 %v1715, 32
    %v1723 = vpop.permute.xlu0 %1722
    %1724 = vrot.lane.b32.xlu0 %v1716, 32
    %v1725 = vpop.permute.xlu0 %1724
    %1729 = vst.msk [vmem:[#allocation5] sm:$0xff] %vm190, %v1721
    %1730 = vst.msk [vmem:[#allocation5 + $0x8] sm:$0xff] %vm190, %v1723
    %vm1731 = vcmask 518400
    %1732 = vst.msk [vmem:[#allocation5 + $0x10] sm:$0x7] %vm1731, %v1725
    %v1733 = vld [vmem:[#allocation4 + $0x2] sm:$0xff]
    %v1734 = vld [vmem:[#allocation4 + $0xa] sm:$0xff]
    %v1735 = vld [vmem:[#allocation4 + $0x12] sm:$0x7]
    %1739 = vrot.lane.b32.xlu0 %v1733, 64
    %v1740 = vpop.permute.xlu0 %1739
    %1741 = vrot.lane.b32.xlu0 %v1734, 64
    %v1742 = vpop.permute.xlu0 %1741
    %1743 = vrot.lane.b32.xlu0 %v1735, 64
    %v1744 = vpop.permute.xlu0 %1743
    %1748 = vst.msk [vmem:[#allocation5] sm:$0xff] %vm213, %v1740
    %1749 = vst.msk [vmem:[#allocation5 + $0x8] sm:$0xff] %vm213, %v1742
    %vm1750 = vcmask 780800
    %1751 = vst.msk [vmem:[#allocation5 + $0x10] sm:$0x7] %vm1750, %v1744
    %v1752 = vld [vmem:[#allocation4] sm:$0xff]
    %v1753 = vld [vmem:[#allocation4 + $0x8] sm:$0xff]
    %v1754 = vld [vmem:[#allocation4 + $0x10] sm:$0x3]
    %1755 = vst.msk [vmem:[#allocation6] sm:$0xff] %vm156, %v1752
    %1756 = vst.msk [vmem:[#allocation6 + $0x8] sm:$0xff] %vm156, %v1753
    %1757 = vst.msk [vmem:[#allocation6 + $0x10] sm:$0x3] %vm170, %v1754
    %v1758 = vld [vmem:[#allocation4 + $0x1] sm:$0xff]
    %v1759 = vld [vmem:[#allocation4 + $0x9] sm:$0xff]
    %v1760 = vld [vmem:[#allocation4 + $0x11] sm:$0x3]
    %1764 = vrot.lane.b32.xlu0 %v1758, 32
    %v1765 = vpop.permute.xlu0 %1764
    %1766 = vrot.lane.b32.xlu0 %v1759, 32
    %v1767 = vpop.permute.xlu0 %1766
    %1768 = vrot.lane.b32.xlu0 %v1760, 32
    %v1769 = vpop.permute.xlu0 %1768
    %1773 = vst.msk [vmem:[#allocation6] sm:$0xff] %vm190, %v1765
    %1774 = vst.msk [vmem:[#allocation6 + $0x8] sm:$0xff] %vm190, %v1767
    %1775 = vst.msk [vmem:[#allocation6 + $0x10] sm:$0x3] %vm193, %v1769
    %v1776 = vld [vmem:[#allocation4 + $0x2] sm:$0xff]
    %v1777 = vld [vmem:[#allocation4 + $0xa] sm:$0xff]
    %v1778 = vld [vmem:[#allocation4 + $0x12] sm:$0x3]
    %1782 = vrot.lane.b32.xlu0 %v1776, 64
    %v1783 = vpop.permute.xlu0 %1782
    %1784 = vrot.lane.b32.xlu0 %v1777, 64
    %v1785 = vpop.permute.xlu0 %1784
    %1786 = vrot.lane.b32.xlu0 %v1778, 64
    %v1787 = vpop.permute.xlu0 %1786
    %1791 = vst.msk [vmem:[#allocation6] sm:$0xff] %vm213, %v1783
    %1792 = vst.msk [vmem:[#allocation6 + $0x8] sm:$0xff] %vm213, %v1785
    %1793 = vst.msk [vmem:[#allocation6 + $0x10] sm:$0x3] %vm216, %v1787
    %v1794 = vld [vmem:[#allocation4 + $0x3] sm:$0xff]
    %v1795 = vld [vmem:[#allocation4 + $0xb] sm:$0xff]
    %v1796 = vld [vmem:[#allocation4 + $0x13] sm:$0x3]
    %1800 = vrot.lane.b32.xlu0 %v1794, 96
    %v1801 = vpop.permute.xlu0 %1800
    %1802 = vrot.lane.b32.xlu0 %v1795, 96
    %v1803 = vpop.permute.xlu0 %1802
    %1804 = vrot.lane.b32.xlu0 %v1796, 96
    %v1805 = vpop.permute.xlu0 %1804
    %1809 = vst.msk [vmem:[#allocation6] sm:$0xff] %vm236, %v1801
    %1810 = vst.msk [vmem:[#allocation6 + $0x8] sm:$0xff] %vm236, %v1803
    %1811 = vst.msk [vmem:[#allocation6 + $0x10] sm:$0x3] %vm239, %v1805
    %1812 = vst.msk [vmem:[#allocation4] sm:$0x3] %vm170, 0.0
    %1813 = vst.msk [vmem:[#allocation4 + $0x13] sm:$0x3] %vm170, 0.0
    %vm1816 = vcmask 1046528
    %v1817 = vrot.slane %v1679, 1
    %v1818 = vrot.slane %v1680, 1
    %v1819 = vsel %vm1816, %v1817, %v1818
    %1822 = vst [vmem:[%s1701] ss:$2 sm:$0xff] %v1819
    %1823 = vst [vmem:[%s1703] ss:$2 sm:$0x1] %v1818
    %1824 = vst [vmem:[%s1705] ss:$2 sm:$0xff] %v1698
    %v1825 = vld [vmem:[#allocation4] sm:$0xff]
    %v1826 = vld [vmem:[#allocation4 + $0x8] sm:$0xff]
    %v1827 = vld [vmem:[#allocation4 + $0x10] sm:$0x7]
    %1828 = vst.msk [vmem:[#allocation5 + $0x13] sm:$0xff] %vm156, %v1825
    %1829 = vst.msk [vmem:[#allocation5 + $0x1b] sm:$0xff] %vm156, %v1826
    %1830 = vst.msk [vmem:[#allocation5 + $0x23] sm:$0x7] %vm1712, %v1827
    %v1831 = vld [vmem:[#allocation4 + $0x1] sm:$0xff]
    %v1832 = vld [vmem:[#allocation4 + $0x9] sm:$0xff]
    %v1833 = vld [vmem:[#allocation4 + $0x11] sm:$0x7]
    %1837 = vrot.lane.b32.xlu0 %v1831, 32
    %v1838 = vpop.permute.xlu0 %1837
    %1839 = vrot.lane.b32.xlu0 %v1832, 32
    %v1840 = vpop.permute.xlu0 %1839
    %1841 = vrot.lane.b32.xlu0 %v1833, 32
    %v1842 = vpop.permute.xlu0 %1841
    %1846 = vst.msk [vmem:[#allocation5 + $0x13] sm:$0xff] %vm190, %v1838
    %1847 = vst.msk [vmem:[#allocation5 + $0x1b] sm:$0xff] %vm190, %v1840
    %1848 = vst.msk [vmem:[#allocation5 + $0x23] sm:$0x7] %vm1731, %v1842
    %v1849 = vld [vmem:[#allocation4 + $0x2] sm:$0xff]
    %v1850 = vld [vmem:[#allocation4 + $0xa] sm:$0xff]
    %v1851 = vld [vmem:[#allocation4 + $0x12] sm:$0x7]
    %1855 = vrot.lane.b32.xlu0 %v1849, 64
    %v1856 = vpop.permute.xlu0 %1855
    %1857 = vrot.lane.b32.xlu0 %v1850, 64
    %v1858 = vpop.permute.xlu0 %1857
    %1859 = vrot.lane.b32.xlu0 %v1851, 64
    %v1860 = vpop.permute.xlu0 %1859
    %1864 = vst.msk [vmem:[#allocation5 + $0x13] sm:$0xff] %vm213, %v1856
    %1865 = vst.msk [vmem:[#allocation5 + $0x1b] sm:$0xff] %vm213, %v1858
    %1866 = vst.msk [vmem:[#allocation5 + $0x23] sm:$0x7] %vm1750, %v1860
    %v1867 = vld [vmem:[#allocation4] sm:$0xff]
    %v1868 = vld [vmem:[#allocation4 + $0x8] sm:$0xff]
    %v1869 = vld [vmem:[#allocation4 + $0x10] sm:$0x3]
    %1870 = vst.msk [vmem:[#allocation6 + $0x12] sm:$0xff] %vm156, %v1867
    %1871 = vst.msk [vmem:[#allocation6 + $0x1a] sm:$0xff] %vm156, %v1868
    %1872 = vst.msk [vmem:[#allocation6 + $0x22] sm:$0x3] %vm170, %v1869
    %v1873 = vld [vmem:[#allocation4 + $0x1] sm:$0xff]
    %v1874 = vld [vmem:[#allocation4 + $0x9] sm:$0xff]
    %v1875 = vld [vmem:[#allocation4 + $0x11] sm:$0x3]
    %1879 = vrot.lane.b32.xlu0 %v1873, 32
    %v1880 = vpop.permute.xlu0 %1879
    %1881 = vrot.lane.b32.xlu0 %v1874, 32
    %v1882 = vpop.permute.xlu0 %1881
    %1883 = vrot.lane.b32.xlu0 %v1875, 32
    %v1884 = vpop.permute.xlu0 %1883
    %1888 = vst.msk [vmem:[#allocation6 + $0x12] sm:$0xff] %vm190, %v1880
    %1889 = vst.msk [vmem:[#allocation6 + $0x1a] sm:$0xff] %vm190, %v1882
    %1890 = vst.msk [vmem:[#allocation6 + $0x22] sm:$0x3] %vm193, %v1884
    %v1891 = vld [vmem:[#allocation4 + $0x2] sm:$0xff]
    %v1892 = vld [vmem:[#allocation4 + $0xa] sm:$0xff]
    %v1893 = vld [vmem:[#allocation4 + $0x12] sm:$0x3]
    %1897 = vrot.lane.b32.xlu0 %v1891, 64
    %v1898 = vpop.permute.xlu0 %1897
    %1899 = vrot.lane.b32.xlu0 %v1892, 64
    %v1900 = vpop.permute.xlu0 %1899
    %1901 = vrot.lane.b32.xlu0 %v1893, 64
    %v1902 = vpop.permute.xlu0 %1901
    %1906 = vst.msk [vmem:[#allocation6 + $0x12] sm:$0xff] %vm213, %v1898
    %1907 = vst.msk [vmem:[#allocation6 + $0x1a] sm:$0xff] %vm213, %v1900
    %1908 = vst.msk [vmem:[#allocation6 + $0x22] sm:$0x3] %vm216, %v1902
    %v1909 = vld [vmem:[#allocation4 + $0x3] sm:$0xff]
    %v1910 = vld [vmem:[#allocation4 + $0xb] sm:$0xff]
    %v1911 = vld [vmem:[#allocation4 + $0x13] sm:$0x3]
    %1915 = vrot.lane.b32.xlu0 %v1909, 96
    %v1916 = vpop.permute.xlu0 %1915
    %1917 = vrot.lane.b32.xlu0 %v1910, 96
    %v1918 = vpop.permute.xlu0 %1917
    %1919 = vrot.lane.b32.xlu0 %v1911, 96
    %v1920 = vpop.permute.xlu0 %1919
    %1924 = vst.msk [vmem:[#allocation6 + $0x12] sm:$0xff] %vm236, %v1916
    %1925 = vst.msk [vmem:[#allocation6 + $0x1a] sm:$0xff] %vm236, %v1918
    %1926 = vst.msk [vmem:[#allocation6 + $0x22] sm:$0x3] %vm239, %v1920
    %v1927 = vld [vmem:[#allocation5] sm:$0xff]
    %v1928 = vld [vmem:[#allocation5 + $0x8] sm:$0xff]
    %v1929 = vld [vmem:[#allocation5 + $0x10] sm:$0xff]
    %v1930 = vld [vmem:[#allocation5 + $0x18] sm:$0xff]
    %v1931 = vld [vmem:[#allocation5 + $0x20] sm:$0x3f]
    %v1932 = vld [vmem:[%s3 + $0x168] sm:$0xf]
    %v1933 = vld [vmem:[%s3 + $0x16c] sm:$0xf]
    %v1934 = vld [vmem:[%s3 + $0x170] sm:$0xf]
    %v1935 = vld [vmem:[%s3 + $0x174] sm:$0xf]
    %v1936 = vld [vmem:[%s3 + $0x178] sm:$0xf]
    %v1937 = vld [vmem:[%s3 + $0x17c] sm:$0xf]
    %v1938 = vld [vmem:[%s3 + $0x180] sm:$0xf]
    %v1939 = vld [vmem:[%s3 + $0x184] sm:$0xf]
    %v1940 = vld [vmem:[%s3 + $0x188] sm:$0xf]
    %v1941 = vld [vmem:[%s3 + $0x18c] sm:$0xf]
    %v1942 = vld [vmem:[%s3 + $0x190] sm:$0xf]
    %v1943 = vld [vmem:[%s3 + $0x194] sm:$0xf]
    %v1944 = vpack.c.bf16 %v1928, %v1927
    %v1945 = vpack.c.bf16 %v1930, %v1929
    %v1946 = vpack.c.bf16 %v1931, %v1931
    %v1947 = vld [vmem:[%s4 + $0xc] sm:$0x1]
    %v1948 = vlaneseq
    %v1949 = vshrl.u32 %v1948, 7
    %v1950 = vsub.s32 0, %v1949
    %v1951 = vrot.slane %v1947, %v1950
    %v1964 = vunpack.c.l.b16 %v1932
    %v1965 = vunpack.c.l.b16 %v1933
    %v1966 = vunpack.c.l.b16 %v1934
    %v1967 = vunpack.c.l.b16 %v1935
    %v1968 = vunpack.c.l.b16 %v1936
    %v1969 = vunpack.c.l.b16 %v1937
    %v1970 = vunpack.c.l.b16 %v1938
    %v1971 = vunpack.c.l.b16 %v1939
    %v1972 = vunpack.c.l.b16 %v1940
    %v1973 = vunpack.c.l.b16 %v1941
    %v1974 = vunpack.c.l.b16 %v1942
    %v1975 = vunpack.c.l.b16 %v1943
    %v1976 = vpack.c.b16 %v1965, %v1964
    %v1977 = vpack.c.b16 %v1967, %v1966
    %v1978 = vpack.c.b16 %v1969, %v1968
    %v1979 = vpack.c.b16 %v1971, %v1970
    %v1980 = vpack.c.b16 %v1973, %v1972
    %v1981 = vpack.c.b16 %v1975, %v1974
    %v1989 = vsel %vm590, %v1944, 0
    %v1992 = vsel %vm590, %v1945, 0
    %v1995 = vsel %vm590, %v1946, 0
    %1997 = vmatprep.subr.bf16.mxu0 0
    %1998 = vmatpush1.bf16.msra.mxu0 %v1976
    %1999 = vmatprep.subr.bf16.mxu0 0
    %2000 = vmatpush1.bf16.msra.mxu0 %v1977
    %2001 = vmatprep.subr.bf16.mxu0 0
    %2002 = vmatpush1.bf16.msra.mxu0 %v1978
    %2003 = vmatprep.subr.bf16.mxu0 0
    %2004 = vmatpush1.bf16.msra.mxu0 %v1979
    %2005 = vmatprep.subr.bf16.mxu0 0
    %2006 = vmatpush1.bf16.msra.mxu0 %v1980
    %2007 = vmatprep.subr.bf16.mxu0 0
    %2008 = vmatpush1.bf16.msra.mxu0 %v1981
    %2009 = vmatprep.subr.bf16.mxu0 0
    %2010 = vmatpush1.bf16.msra.mxu0 0
    %2011 = vmatprep.subr.bf16.mxu0 0
    %2012 = vmatpush1.bf16.msra.mxu0 0
    %2013 = vmatprep.subr.bf16.mxu0 0
    %2014 = vmatpush1.bf16.msra.mxu0 0
    %2015 = vmatprep.subr.bf16.mxu0 0
    %2016 = vmatpush1.bf16.msra.mxu0 0
    %2017 = vmatprep.subr.bf16.mxu0 0
    %2018 = vmatpush1.bf16.msra.mxu0 0
    %2019 = vmatprep.subr.bf16.mxu0 0
    %2020 = vmatpush1.bf16.msra.mxu0 0
    %2021 = vmatprep.subr.bf16.mxu0 0
    %2022 = vmatpush1.bf16.msra.mxu0 0
    %2023 = vmatprep.subr.bf16.mxu0 0
    %2024 = vmatpush1.bf16.msra.mxu0 0
    %2025 = vmatprep.subr.bf16.mxu0 0
    %2026 = vmatpush1.bf16.msra.mxu0 0
    %2027 = vmatprep.subr.bf16.mxu0 0
    %2028 = vmatpush1.bf16.msra.mxu0 0
    %2029 = vmatprep.mubr.bf16.mxu0 0
    %2030 = vmatmul.mubr.bf16.gmra.mrb[0].mxu0 %v1989
    %v2031 = vpop.f32.mrb[0].mxu0
    %v2032 = vadd.f32 %v1951, %v2031
    %v2033 = vpop.f32.mrb[0].mxu0
    %v2034 = vpop.f32.mrb[0].mxu0
    %v2035 = vadd.f32 %v1951, %v2034
    %v2036 = vpop.f32.mrb[0].mxu0
    %2037 = vmatprep.mubr.bf16.mxu0 0
    %2038 = vmatmul.mubr.bf16.gmra.mrb[0].mxu0 %v1992
    %v2039 = vpop.f32.mrb[0].mxu0
    %v2040 = vadd.f32 %v1951, %v2039
    %v2041 = vpop.f32.mrb[0].mxu0
    %v2042 = vpop.f32.mrb[0].mxu0
    %v2043 = vadd.f32 %v1951, %v2042
    %v2044 = vpop.f32.mrb[0].mxu0
    %2045 = vmatprep.mubr.bf16.mxu0 0
    %2046 = vmatmul.mubr.bf16.gmra.mrb[0].mxu0 %v1995
    %v2047 = vpop.f32.mrb[0].mxu0
    %v2048 = vadd.f32 %v1951, %v2047
    %v2049 = vpop.f32.mrb[0].mxu0
    %v2050 = vpop.f32.mrb[0].mxu0
    %v2051 = vpop.f32.mrb[0].mxu0
    %2052 = vdwg.mxu0
    %v2053 = vld [vmem:[#allocation6] sm:$0xff]
    %v2054 = vld [vmem:[#allocation6 + $0x8] sm:$0xff]
    %v2055 = vld [vmem:[#allocation6 + $0x10] sm:$0xff]
    %v2056 = vld [vmem:[#allocation6 + $0x18] sm:$0xff]
    %v2057 = vld [vmem:[#allocation6 + $0x20] sm:$0xf]
    %v2058 = vld [vmem:[%s3 + $0x198] sm:$0xf]
    %v2059 = vld [vmem:[%s3 + $0x19c] sm:$0xf]
    %v2060 = vld [vmem:[%s3 + $0x1a0] sm:$0xf]
    %v2061 = vld [vmem:[%s3 + $0x1a4] sm:$0xf]
    %v2062 = vld [vmem:[%s3 + $0x1a8] sm:$0xf]
    %v2063 = vld [vmem:[%s3 + $0x1ac] sm:$0xf]
    %v2064 = vld [vmem:[%s3 + $0x1b0] sm:$0xf]
    %v2065 = vld [vmem:[%s3 + $0x1b4] sm:$0xf]
    %v2066 = vld [vmem:[%s3 + $0x1b8] sm:$0xf]
    %v2067 = vld [vmem:[%s3 + $0x1bc] sm:$0xf]
    %v2068 = vld [vmem:[%s3 + $0x1c0] sm:$0xf]
    %v2069 = vld [vmem:[%s3 + $0x1c4] sm:$0xf]
    %v2070 = vld [vmem:[%s3 + $0x1c8] sm:$0xf]
    %v2071 = vld [vmem:[%s3 + $0x1cc] sm:$0xf]
    %v2072 = vld [vmem:[%s3 + $0x1d0] sm:$0xf]
    %v2073 = vld [vmem:[%s3 + $0x1d4] sm:$0xf]
    %v2074 = vpack.c.bf16 %v2054, %v2053
    %v2075 = vpack.c.bf16 %v2056, %v2055
    %v2076 = vpack.c.bf16 %v2057, %v2057
    %v2093 = vunpack.c.l.b16 %v2058
    %v2094 = vunpack.c.l.b16 %v2059
    %v2095 = vunpack.c.l.b16 %v2060
    %v2096 = vunpack.c.l.b16 %v2061
    %v2097 = vunpack.c.l.b16 %v2062
    %v2098 = vunpack.c.l.b16 %v2063
    %v2099 = vunpack.c.l.b16 %v2064
    %v2100 = vunpack.c.l.b16 %v2065
    %v2101 = vunpack.c.l.b16 %v2066
    %v2102 = vunpack.c.l.b16 %v2067
    %v2103 = vunpack.c.l.b16 %v2068
    %v2104 = vunpack.c.l.b16 %v2069
    %v2105 = vunpack.c.l.b16 %v2070
    %v2106 = vunpack.c.l.b16 %v2071
    %v2107 = vunpack.c.l.b16 %v2072
    %v2108 = vunpack.c.l.b16 %v2073
    %v2109 = vpack.c.b16 %v2094, %v2093
    %v2110 = vpack.c.b16 %v2096, %v2095
    %v2111 = vpack.c.b16 %v2098, %v2097
    %v2112 = vpack.c.b16 %v2100, %v2099
    %v2113 = vpack.c.b16 %v2102, %v2101
    %v2114 = vpack.c.b16 %v2104, %v2103
    %v2115 = vpack.c.b16 %v2106, %v2105
    %v2116 = vpack.c.b16 %v2108, %v2107
    %2125 = vmatprep.subr.bf16.mxu0 0
    %2126 = vmatpush1.bf16.msra.mxu0 %v2109
    %2127 = vmatprep.subr.bf16.mxu0 0
    %2128 = vmatpush1.bf16.msra.mxu0 %v2110
    %2129 = vmatprep.subr.bf16.mxu0 0
    %2130 = vmatpush1.bf16.msra.mxu0 %v2111
    %2131 = vmatprep.subr.bf16.mxu0 0
    %2132 = vmatpush1.bf16.msra.mxu0 %v2112
    %2133 = vmatprep.subr.bf16.mxu0 0
    %2134 = vmatpush1.bf16.msra.mxu0 %v2113
    %2135 = vmatprep.subr.bf16.mxu0 0
    %2136 = vmatpush1.bf16.msra.mxu0 %v2114
    %2137 = vmatprep.subr.bf16.mxu0 0
    %2138 = vmatpush1.bf16.msra.mxu0 %v2115
    %2139 = vmatprep.subr.bf16.mxu0 0
    %2140 = vmatpush1.bf16.msra.mxu0 %v2116
    %2141 = vmatprep.subr.bf16.mxu0 0
    %2142 = vmatpush1.bf16.msra.mxu0 0
    %2143 = vmatprep.subr.bf16.mxu0 0
    %2144 = vmatpush1.bf16.msra.mxu0 0
    %2145 = vmatprep.subr.bf16.mxu0 0
    %2146 = vmatpush1.bf16.msra.mxu0 0
    %2147 = vmatprep.subr.bf16.mxu0 0
    %2148 = vmatpush1.bf16.msra.mxu0 0
    %2149 = vmatprep.subr.bf16.mxu0 0
    %2150 = vmatpush1.bf16.msra.mxu0 0
    %2151 = vmatprep.subr.bf16.mxu0 0
    %2152 = vmatpush1.bf16.msra.mxu0 0
    %2153 = vmatprep.subr.bf16.mxu0 0
    %2154 = vmatpush1.bf16.msra.mxu0 0
    %2155 = vmatprep.subr.bf16.mxu0 0
    %2156 = vmatpush1.bf16.msra.mxu0 0
    %2157 = vmatprep.mubr.bf16.mxu0 0
    %2158 = vmatmul.mubr.bf16.gmra.mrb[0].mxu0 %v2074
    %v2159 = vpop.f32.mrb[0].mxu0
    %v2160 = vadd.f32 %v1951, %v2159
    %v2161 = vpop.f32.mrb[0].mxu0
    %v2162 = vpop.f32.mrb[0].mxu0
    %v2163 = vadd.f32 %v1951, %v2162
    %v2164 = vpop.f32.mrb[0].mxu0
    %2165 = vmatprep.mubr.bf16.mxu0 0
    %2166 = vmatmul.mubr.bf16.gmra.mrb[0].mxu0 %v2075
    %v2167 = vpop.f32.mrb[0].mxu0
    %v2168 = vadd.f32 %v1951, %v2167
    %v2169 = vpop.f32.mrb[0].mxu0
    %v2170 = vpop.f32.mrb[0].mxu0
    %v2171 = vadd.f32 %v1951, %v2170
    %v2172 = vpop.f32.mrb[0].mxu0
    %2173 = vmatprep.mubr.bf16.mxu0 0
    %2174 = vmatmul.mubr.bf16.gmra.mrb[0].mxu0 %v2076
    %v2175 = vpop.f32.mrb[0].mxu0
    %v2176 = vadd.f32 %v1951, %v2175
    %v2177 = vpop.f32.mrb[0].mxu0
    %v2178 = vpop.f32.mrb[0].mxu0
    %v2179 = vpop.f32.mrb[0].mxu0
    %2180 = vdwg.mxu0
    %v2181 = vld [vmem:[%s4 + $0xd] sm:$0x1]
    %v2182 = vld [vmem:[%s4 + $0xe] sm:$0x1]
    %v2183 = vsel %vm156, %v2032, 0.0
    %v2184 = vsel %vm156, %v2035, 0.0
    %v2185 = vadd.f32 %v2183, %v2184
    %v2186 = vsel %vm156, %v2040, 0.0
    %v2187 = vadd.f32 %v2185, %v2186
    %v2188 = vsel %vm156, %v2043, 0.0
    %v2189 = vadd.f32 %v2187, %v2188
    %v2190 = vsel %vm811, %v2048, 0.0
    %v2191 = vadd.f32 %v2189, %v2190
    %v2192 = vrot.slane %v2191, 4
    %v2193 = vadd.f32 %v2191, %v2192
    %v2194 = vrot.slane %v2193, 2
    %v2195 = vadd.f32 %v2193, %v2194
    %v2196 = vrot.slane %v2195, 1
    %v2197 = vadd.f32 %v2195, %v2196
    %v2198 = vadd.f32 %v2197, 0.0
    %v2199 = vsel %vm156, %v2160, 0.0
    %v2200 = vsel %vm156, %v2163, 0.0
    %v2201 = vadd.f32 %v2199, %v2200
    %v2202 = vsel %vm156, %v2168, 0.0
    %v2203 = vadd.f32 %v2201, %v2202
    %v2204 = vsel %vm156, %v2171, 0.0
    %v2205 = vadd.f32 %v2203, %v2204
    %v2206 = vsel %vm317, %v2176, 0.0
    %v2207 = vadd.f32 %v2205, %v2206
    %v2208 = vrot.slane %v2207, 4
    %v2209 = vadd.f32 %v2207, %v2208
    %v2210 = vrot.slane %v2209, 2
    %v2211 = vadd.f32 %v2209, %v2210
    %v2212 = vrot.slane %v2211, 1
    %v2213 = vadd.f32 %v2211, %v2212
    %v2214 = vadd.f32 %v2198, %v2213
    %v2215 = vmul.f32 %v2032, %v2032
    %v2216 = vmul.f32 %v2035, %v2035
    %v2217 = vmul.f32 %v2040, %v2040
    %v2218 = vmul.f32 %v2043, %v2043
    %v2219 = vmul.f32 %v2048, %v2048
    %v2220 = vsel %vm156, %v2215, 0.0
    %v2221 = vsel %vm156, %v2216, 0.0
    %v2222 = vadd.f32 %v2220, %v2221
    %v2223 = vsel %vm156, %v2217, 0.0
    %v2224 = vadd.f32 %v2222, %v2223
    %v2225 = vsel %vm156, %v2218, 0.0
    %v2226 = vadd.f32 %v2224, %v2225
    %v2227 = vsel %vm811, %v2219, 0.0
    %v2228 = vadd.f32 %v2226, %v2227
    %v2229 = vrot.slane %v2228, 4
    %v2230 = vadd.f32 %v2228, %v2229
    %v2231 = vrot.slane %v2230, 2
    %v2232 = vadd.f32 %v2230, %v2231
    %v2233 = vrot.slane %v2232, 1
    %v2234 = vadd.f32 %v2232, %v2233
    %v2235 = vadd.f32 %v2234, 0.0
    %v2236 = vmul.f32 %v2160, %v2160
    %v2237 = vmul.f32 %v2163, %v2163
    %v2238 = vmul.f32 %v2168, %v2168
    %v2239 = vmul.f32 %v2171, %v2171
    %v2240 = vmul.f32 %v2176, %v2176
    %v2241 = vsel %vm156, %v2236, 0.0
    %v2242 = vsel %vm156, %v2237, 0.0
    %v2243 = vadd.f32 %v2241, %v2242
    %v2244 = vsel %vm156, %v2238, 0.0
    %v2245 = vadd.f32 %v2243, %v2244
    %v2246 = vsel %vm156, %v2239, 0.0
    %v2247 = vadd.f32 %v2245, %v2246
    %v2248 = vsel %vm317, %v2240, 0.0
    %v2249 = vadd.f32 %v2247, %v2248
    %v2250 = vrot.slane %v2249, 4
    %v2251 = vadd.f32 %v2249, %v2250
    %v2252 = vrot.slane %v2251, 2
    %v2253 = vadd.f32 %v2251, %v2252
    %v2254 = vrot.slane %v2253, 1
    %v2255 = vadd.f32 %v2253, %v2254
    %v2256 = vadd.f32 %v2235, %v2255
    %v2257 = vmul.f32 %v2214, 0.013513514
    %v2258 = vmul.f32 %v2256, 0.013513514
    %v2259 = vmul.f32 %v2257, %v2257
    %v2260 = vsub.f32 %v2258, %v2259
    %v2261 = vadd.f32 %v2260, 1e-05
    %v2262 = vrsqrt.pop %v2261
    %v2263 = vmul.f32 %v2181, %v2262
    %v2264 = vmul.f32 %v2257, %v2263
    %v2265 = vsub.f32 %v2182, %v2264
    %v2266 = vlaneseq
    %v2267 = vshrl.u32 %v2266, 7
    %v2268 = vsub.s32 0, %v2267
    %v2269 = vrot.slane %v2263, %v2268
    %v2270 = vmul.f32 %v2032, %v2269
    %v2271 = vmul.f32 %v2035, %v2269
    %v2272 = vmul.f32 %v2040, %v2269
    %v2273 = vmul.f32 %v2043, %v2269
    %v2274 = vmul.f32 %v2048, %v2269
    %v2275 = vlaneseq
    %v2276 = vshrl.u32 %v2275, 7
    %v2277 = vsub.s32 0, %v2276
    %v2278 = vrot.slane %v2265, %v2277
    %v2279 = vadd.f32 %v2270, %v2278
    %v2280 = vadd.f32 %v2271, %v2278
    %v2281 = vadd.f32 %v2272, %v2278
    %v2282 = vadd.f32 %v2273, %v2278
    %v2283 = vadd.f32 %v2274, %v2278
    %v2284 = vxor.u32 %v2279, 2147483648
    %v2285 = vxor.u32 %v2280, 2147483648
    %v2286 = vxor.u32 %v2281, 2147483648
    %v2287 = vxor.u32 %v2282, 2147483648
    %v2288 = vxor.u32 %v2283, 2147483648
    %v2289 = vmul.f32 %v2284, 1.442695
    %v2290 = vpow.pop %v2289
    %v2291 = vmul.f32 %v2285, 1.442695
    %v2292 = vpow.pop %v2291
    %v2293 = vmul.f32 %v2286, 1.442695
    %v2294 = vpow.pop %v2293
    %v2295 = vmul.f32 %v2287, 1.442695
    %v2296 = vpow.pop %v2295
    %v2297 = vmul.f32 %v2288, 1.442695
    %v2298 = vpow.pop %v2297
    %v2299 = vadd.f32 %v2290, 1.0
    %v2300 = vadd.f32 %v2292, 1.0
    %v2301 = vadd.f32 %v2294, 1.0
    %v2302 = vadd.f32 %v2296, 1.0
    %v2303 = vadd.f32 %v2298, 1.0
    %v2304 = vrcp.pop %v2299
    %v2305 = vmul.f32 1.0, %v2304
    %v2306 = vrcp.pop %v2300
    %v2307 = vmul.f32 1.0, %v2306
    %v2308 = vrcp.pop %v2301
    %v2309 = vmul.f32 1.0, %v2308
    %v2310 = vrcp.pop %v2302
    %v2311 = vmul.f32 1.0, %v2310
    %v2312 = vrcp.pop %v2303
    %v2313 = vmul.f32 1.0, %v2312
    %v2314 = vmul.f32 %v2279, %v2305
    %v2315 = vmul.f32 %v2280, %v2307
    %v2316 = vmul.f32 %v2281, %v2309
    %v2317 = vmul.f32 %v2282, %v2311
    %v2318 = vmul.f32 %v2283, %v2313
    %v2319 = vmul.f32 %v2160, %v2269
    %v2320 = vmul.f32 %v2163, %v2269
    %v2321 = vmul.f32 %v2168, %v2269
    %v2322 = vmul.f32 %v2171, %v2269
    %v2323 = vmul.f32 %v2176, %v2269
    %v2324 = vadd.f32 %v2319, %v2278
    %v2325 = vadd.f32 %v2320, %v2278
    %v2326 = vadd.f32 %v2321, %v2278
    %v2327 = vadd.f32 %v2322, %v2278
    %v2328 = vadd.f32 %v2323, %v2278
    %v2329 = vxor.u32 %v2324, 2147483648
    %v2330 = vxor.u32 %v2325, 2147483648
    %v2331 = vxor.u32 %v2326, 2147483648
    %v2332 = vxor.u32 %v2327, 2147483648
    %v2333 = vxor.u32 %v2328, 2147483648
    %v2334 = vmul.f32 %v2329, 1.442695
    %v2335 = vpow.pop %v2334
    %v2336 = vmul.f32 %v2330, 1.442695
    %v2337 = vpow.pop %v2336
    %v2338 = vmul.f32 %v2331, 1.442695
    %v2339 = vpow.pop %v2338
    %v2340 = vmul.f32 %v2332, 1.442695
    %v2341 = vpow.pop %v2340
    %v2342 = vmul.f32 %v2333, 1.442695
    %v2343 = vpow.pop %v2342
    %v2344 = vadd.f32 %v2335, 1.0
    %v2345 = vadd.f32 %v2337, 1.0
    %v2346 = vadd.f32 %v2339, 1.0
    %v2347 = vadd.f32 %v2341, 1.0
    %v2348 = vadd.f32 %v2343, 1.0
    %v2349 = vrcp.pop %v2344
    %v2350 = vmul.f32 1.0, %v2349
    %v2351 = vrcp.pop %v2345
    %v2352 = vmul.f32 1.0, %v2351
    %v2353 = vrcp.pop %v2346
    %v2354 = vmul.f32 1.0, %v2353
    %v2355 = vrcp.pop %v2347
    %v2356 = vmul.f32 1.0, %v2355
    %v2357 = vrcp.pop %v2348
    %v2358 = vmul.f32 1.0, %v2357
    %v2359 = vmul.f32 %v2324, %v2350
    %v2360 = vmul.f32 %v2325, %v2352
    %v2361 = vmul.f32 %v2326, %v2354
    %v2362 = vmul.f32 %v2327, %v2356
    %v2363 = vmul.f32 %v2328, %v2358
    %v2364 = vld [vmem:[%s4 + $0xf] sm:$0x1]
    %v2365 = vld [vmem:[%s3 + $0x1d8] sm:$0xf]
    %v2366 = vld [vmem:[%s3 + $0x1dc] sm:$0xf]
    %v2367 = vld [vmem:[%s3 + $0x1e0] sm:$0xf]
    %v2368 = vld [vmem:[%s3 + $0x1e4] sm:$0xf]
    %v2369 = vpack.c.bf16 %v2315, %v2314
    %v2370 = vpack.c.bf16 %v2317, %v2316
    %v2371 = vpack.c.bf16 %v2318, %v2318
    %v2376 = vunpack.c.l.b16 %v2365
    %v2377 = vunpack.c.l.b16 %v2366
    %v2378 = vunpack.c.l.b16 %v2367
    %v2379 = vunpack.c.l.b16 %v2368
    %v2380 = vpack.c.b16 %v2377, %v2376
    %v2381 = vpack.c.b16 %v2379, %v2378
    %v2385 = vsel %vm156, %v2369, 0
    %v2388 = vsel %vm156, %v2370, 0
    %v2391 = vsel %vm156, %v2371, 0
    %2393 = vmatprep.subr.bf16.mxu0 0
    %2394 = vmatpush1.bf16.msra.mxu0 %v2380
    %2395 = vmatprep.subr.bf16.mxu0 0
    %2396 = vmatpush1.bf16.msra.mxu0 %v2381
    %2397 = vmatprep.subr.bf16.mxu0 0
    %2398 = vmatpush1.bf16.msra.mxu0 0
    %2399 = vmatprep.subr.bf16.mxu0 0
    %2400 = vmatpush1.bf16.msra.mxu0 0
    %2401 = vmatprep.subr.bf16.mxu0 0
    %2402 = vmatpush1.bf16.msra.mxu0 0
    %2403 = vmatprep.subr.bf16.mxu0 0
    %2404 = vmatpush1.bf16.msra.mxu0 0
    %2405 = vmatprep.subr.bf16.mxu0 0
    %2406 = vmatpush1.bf16.msra.mxu0 0
    %2407 = vmatprep.subr.bf16.mxu0 0
    %2408 = vmatpush1.bf16.msra.mxu0 0
    %2409 = vmatprep.subr.bf16.mxu0 0
    %2410 = vmatpush1.bf16.msra.mxu0 0
    %2411 = vmatprep.subr.bf16.mxu0 0
    %2412 = vmatpush1.bf16.msra.mxu0 0
    %2413 = vmatprep.subr.bf16.mxu0 0
    %2414 = vmatpush1.bf16.msra.mxu0 0
    %2415 = vmatprep.subr.bf16.mxu0 0
    %2416 = vmatpush1.bf16.msra.mxu0 0
    %2417 = vmatprep.subr.bf16.mxu0 0
    %2418 = vmatpush1.bf16.msra.mxu0 0
    %2419 = vmatprep.subr.bf16.mxu0 0
    %2420 = vmatpush1.bf16.msra.mxu0 0
    %2421 = vmatprep.subr.bf16.mxu0 0
    %2422 = vmatpush1.bf16.msra.mxu0 0
    %2423 = vmatprep.subr.bf16.mxu0 0
    %2424 = vmatpush1.bf16.msra.mxu0 0
    %2425 = vmatprep.mubr.bf16.mxu0 0
    %2426 = vmatmul.mubr.bf16.gmra.mrb[0].mxu0 %v2385
    %v2427 = vpop.f32.mrb[0].mxu0
    %v2428 = vadd.f32 0.0, %v2427
    %v2429 = vpop.f32.mrb[0].mxu0
    %v2430 = vpop.f32.mrb[0].mxu0
    %v2431 = vadd.f32 0.0, %v2430
    %v2432 = vpop.f32.mrb[0].mxu0
    %2433 = vmatprep.mubr.bf16.mxu0 0
    %2434 = vmatmul.mubr.bf16.gmra.mrb[0].mxu0 %v2388
    %v2435 = vpop.f32.mrb[0].mxu0
    %v2436 = vadd.f32 0.0, %v2435
    %v2437 = vpop.f32.mrb[0].mxu0
    %v2438 = vpop.f32.mrb[0].mxu0
    %v2439 = vadd.f32 0.0, %v2438
    %v2440 = vpop.f32.mrb[0].mxu0
    %2441 = vmatprep.mubr.bf16.mxu0 0
    %2442 = vmatmul.mubr.bf16.gmra.mrb[0].mxu0 %v2391
    %v2443 = vpop.f32.mrb[0].mxu0
    %v2444 = vadd.f32 0.0, %v2443
    %v2445 = vpop.f32.mrb[0].mxu0
    %v2446 = vpop.f32.mrb[0].mxu0
    %v2447 = vpop.f32.mrb[0].mxu0
    %2448 = vdwg.mxu0
    %v2449 = vlaneseq
    %v2450 = vshrl.u32 %v2449, 7
    %v2451 = vsub.s32 0, %v2450
    %v2452 = vrot.slane %v2364, %v2451
    %v2453 = vadd.f32 %v2428, %v2452
    %v2454 = vadd.f32 %v2431, %v2452
    %v2455 = vadd.f32 %v2436, %v2452
    %v2456 = vadd.f32 %v2439, %v2452
    %v2457 = vadd.f32 %v2444, %v2452
    %v2458 = vpack.c.bf16 %v2360, %v2359
    %v2459 = vpack.c.bf16 %v2362, %v2361
    %v2460 = vpack.c.bf16 %v2363, %v2363
    %v2462 = vsel %vm156, %v2458, 0
    %v2465 = vsel %vm156, %v2459, 0
    %v2468 = vsel %vm156, %v2460, 0
    %2470 = vmatprep.subr.bf16.mxu0 0
    %2471 = vmatpush1.bf16.msra.mxu0 %v2380
    %2472 = vmatprep.subr.bf16.mxu0 0
    %2473 = vmatpush1.bf16.msra.mxu0 %v2381
    %2474 = vmatprep.subr.bf16.mxu0 0
    %2475 = vmatpush1.bf16.msra.mxu0 0
    %2476 = vmatprep.subr.bf16.mxu0 0
    %2477 = vmatpush1.bf16.msra.mxu0 0
    %2478 = vmatprep.subr.bf16.mxu0 0
    %2479 = vmatpush1.bf16.msra.mxu0 0
    %2480 = vmatprep.subr.bf16.mxu0 0
    %2481 = vmatpush1.bf16.msra.mxu0 0
    %2482 = vmatprep.subr.bf16.mxu0 0
    %2483 = vmatpush1.bf16.msra.mxu0 0
    %2484 = vmatprep.subr.bf16.mxu0 0
    %2485 = vmatpush1.bf16.msra.mxu0 0
    %2486 = vmatprep.subr.bf16.mxu0 0
    %2487 = vmatpush1.bf16.msra.mxu0 0
    %2488 = vmatprep.subr.bf16.mxu0 0
    %2489 = vmatpush1.bf16.msra.mxu0 0
    %2490 = vmatprep.subr.bf16.mxu0 0
    %2491 = vmatpush1.bf16.msra.mxu0 0
    %2492 = vmatprep.subr.bf16.mxu0 0
    %2493 = vmatpush1.bf16.msra.mxu0 0
    %2494 = vmatprep.subr.bf16.mxu0 0
    %2495 = vmatpush1.bf16.msra.mxu0 0
    %2496 = vmatprep.subr.bf16.mxu0 0
    %2497 = vmatpush1.bf16.msra.mxu0 0
    %2498 = vmatprep.subr.bf16.mxu0 0
    %2499 = vmatpush1.bf16.msra.mxu0 0
    %2500 = vmatprep.subr.bf16.mxu0 0
    %2501 = vmatpush1.bf16.msra.mxu0 0
    %2502 = vmatprep.mubr.bf16.mxu0 0
    %2503 = vmatmul.mubr.bf16.gmra.mrb[0].mxu0 %v2462
    %v2504 = vpop.f32.mrb[0].mxu0
    %v2505 = vadd.f32 0.0, %v2504
    %v2506 = vpop.f32.mrb[0].mxu0
    %v2507 = vpop.f32.mrb[0].mxu0
    %v2508 = vadd.f32 0.0, %v2507
    %v2509 = vpop.f32.mrb[0].mxu0
    %2510 = vmatprep.mubr.bf16.mxu0 0
    %2511 = vmatmul.mubr.bf16.gmra.mrb[0].mxu0 %v2465
    %v2512 = vpop.f32.mrb[0].mxu0
    %v2513 = vadd.f32 0.0, %v2512
    %v2514 = vpop.f32.mrb[0].mxu0
    %v2515 = vpop.f32.mrb[0].mxu0
    %v2516 = vadd.f32 0.0, %v2515
    %v2517 = vpop.f32.mrb[0].mxu0
    %2518 = vmatprep.mubr.bf16.mxu0 0
    %2519 = vmatmul.mubr.bf16.gmra.mrb[0].mxu0 %v2468
    %v2520 = vpop.f32.mrb[0].mxu0
    %v2521 = vadd.f32 0.0, %v2520
    %v2522 = vpop.f32.mrb[0].mxu0
    %v2523 = vpop.f32.mrb[0].mxu0
    %v2524 = vpop.f32.mrb[0].mxu0
    %2525 = vdwg.mxu0
    %v2526 = vadd.f32 %v2505, %v2452
    %v2527 = vadd.f32 %v2508, %v2452
    %v2528 = vadd.f32 %v2513, %v2452
    %v2529 = vadd.f32 %v2516, %v2452
    %v2530 = vadd.f32 %v2521, %v2452
    %v2531 = vld [vmem:[%s5] sm:$0xf]
    %v2532 = vld [vmem:[%s5 + $0x4] sm:$0xf]
    %v2533 = vld [vmem:[%s5 + $0x8] sm:$0xf]
    %v2534 = vpack.c.bf16 %v2454, %v2453
    %v2535 = vpack.c.bf16 %v2455, %v2455
    %v2536 = vld [vmem:[%s6] sm:$0xf]
    %v2537 = vld [vmem:[%s6 + $0x4] sm:$0xf]
    %v2538 = vld [vmem:[%s6 + $0x8] sm:$0xf]
    %v2539 = vpack.c.bf16 %v2527, %v2526
    %v2540 = vpack.c.bf16 %v2528, %v2528
    %v2544 = vunpack.c.l.b16 %v2536
    %v2545 = vunpack.c.l.b16 %v2537
    %v2546 = vunpack.c.l.b16 %v2538
    %v2547 = vpack.c.b16 %v2545, %v2544
    %v2548 = vpack.c.b16 %v2546, %v2546
    %vm2549 = vcmask 146432
    %v2551 = vsel %vm2549, %v2547, 0
    %v2554 = vsel %vm2549, %v2548, 0
    %vm2556 = vcmask 1040384
    %v2558 = vsel %vm2556, %v2540, 0
    %2560 = vmatprep.subr.bf16.mxu0 0
    %2561 = vmatpush1.bf16.msra.mxu0 %v2539
    %2562 = vmatprep.subr.bf16.mxu0 0
    %2563 = vmatpush1.bf16.msra.mxu0 %v2558
    %2564 = vmatprep.subr.bf16.mxu0 0
    %2565 = vmatpush1.bf16.msra.mxu0 0
    %2566 = vmatprep.subr.bf16.mxu0 0
    %2567 = vmatpush1.bf16.msra.mxu0 0
    %2568 = vmatprep.subr.bf16.mxu0 0
    %2569 = vmatpush1.bf16.msra.mxu0 0
    %2570 = vmatprep.subr.bf16.mxu0 0
    %2571 = vmatpush1.bf16.msra.mxu0 0
    %2572 = vmatprep.subr.bf16.mxu0 0
    %2573 = vmatpush1.bf16.msra.mxu0 0
    %2574 = vmatprep.subr.bf16.mxu0 0
    %2575 = vmatpush1.bf16.msra.mxu0 0
    %2576 = vmatprep.subr.bf16.mxu0 0
    %2577 = vmatpush1.bf16.msra.mxu0 0
    %2578 = vmatprep.subr.bf16.mxu0 0
    %2579 = vmatpush1.bf16.msra.mxu0 0
    %2580 = vmatprep.subr.bf16.mxu0 0
    %2581 = vmatpush1.bf16.msra.mxu0 0
    %2582 = vmatprep.subr.bf16.mxu0 0
    %2583 = vmatpush1.bf16.msra.mxu0 0
    %2584 = vmatprep.subr.bf16.mxu0 0
    %2585 = vmatpush1.bf16.msra.mxu0 0
    %2586 = vmatprep.subr.bf16.mxu0 0
    %2587 = vmatpush1.bf16.msra.mxu0 0
    %2588 = vmatprep.subr.bf16.mxu0 0
    %2589 = vmatpush1.bf16.msra.mxu0 0
    %2590 = vmatprep.subr.bf16.mxu0 0
    %2591 = vmatpush1.bf16.msra.mxu0 0
    %2592 = vmatprep.mubr.bf16.mxu0 0
    %2593 = vmatmul.mubr.bf16.gmra.mrb[0].mxu0 %v2551
    %v2594 = vpop.f32.mrb[0].mxu0
    %v2595 = vadd.f32 0.0, %v2594
    %v2596 = vpop.f32.mrb[0].mxu0
    %v2597 = vpop.f32.mrb[0].mxu0
    %v2598 = vadd.f32 0.0, %v2597
    %v2599 = vpop.f32.mrb[0].mxu0
    %2600 = vmatprep.mubr.bf16.mxu0 0
    %2601 = vmatmul.mubr.bf16.gmra.mrb[0].mxu0 %v2554
    %v2602 = vpop.f32.mrb[0].mxu0
    %v2603 = vadd.f32 0.0, %v2602
    %v2604 = vpop.f32.mrb[0].mxu0
    %v2605 = vpop.f32.mrb[0].mxu0
    %v2606 = vpop.f32.mrb[0].mxu0
    %2607 = vdwg.mxu0
    %v2611 = vunpack.c.l.b16 %v2531
    %v2612 = vunpack.c.l.b16 %v2532
    %v2613 = vunpack.c.l.b16 %v2533
    %v2614 = vpack.c.b16 %v2612, %v2611
    %v2615 = vpack.c.b16 %v2613, %v2613
    %vm2616 = vcmask 154624
    %v2618 = vsel %vm2616, %v2614, 0
    %v2621 = vsel %vm2616, %v2615, 0
    %v2623 = vsel %vm2556, 4294967295, 65535
    %v2624 = vsel %vm305, %v2623, 0
    %v2626 = vand.u32 %v2535, %v2624
    %2628 = vmatprep.subr.bf16.mxu0 0
    %2629 = vmatpush1.bf16.msra.mxu0 %v2534
    %2630 = vmatprep.subr.bf16.mxu0 0
    %2631 = vmatpush1.bf16.msra.mxu0 %v2626
    %2632 = vmatprep.subr.bf16.mxu0 0
    %2633 = vmatpush1.bf16.msra.mxu0 0
    %2634 = vmatprep.subr.bf16.mxu0 0
    %2635 = vmatpush1.bf16.msra.mxu0 0
    %2636 = vmatprep.subr.bf16.mxu0 0
    %2637 = vmatpush1.bf16.msra.mxu0 0
    %2638 = vmatprep.subr.bf16.mxu0 0
    %2639 = vmatpush1.bf16.msra.mxu0 0
    %2640 = vmatprep.subr.bf16.mxu0 0
    %2641 = vmatpush1.bf16.msra.mxu0 0
    %2642 = vmatprep.subr.bf16.mxu0 0
    %2643 = vmatpush1.bf16.msra.mxu0 0
    %2644 = vmatprep.subr.bf16.mxu0 0
    %2645 = vmatpush1.bf16.msra.mxu0 0
    %2646 = vmatprep.subr.bf16.mxu0 0
    %2647 = vmatpush1.bf16.msra.mxu0 0
    %2648 = vmatprep.subr.bf16.mxu0 0
    %2649 = vmatpush1.bf16.msra.mxu0 0
    %2650 = vmatprep.subr.bf16.mxu0 0
    %2651 = vmatpush1.bf16.msra.mxu0 0
    %2652 = vmatprep.subr.bf16.mxu0 0
    %2653 = vmatpush1.bf16.msra.mxu0 0
    %2654 = vmatprep.subr.bf16.mxu0 0
    %2655 = vmatpush1.bf16.msra.mxu0 0
    %2656 = vmatprep.subr.bf16.mxu0 0
    %2657 = vmatpush1.bf16.msra.mxu0 0
    %2658 = vmatprep.subr.bf16.mxu0 0
    %2659 = vmatpush1.bf16.msra.mxu0 0
    %2660 = vmatprep.mubr.bf16.mxu0 0
    %2661 = vmatmul.mubr.bf16.gmra.mrb[0].mxu0 %v2618
    %v2662 = vpop.f32.mrb[0].mxu0
    %v2663 = vadd.f32 %v2595, %v2662
    %v2664 = vpop.f32.mrb[0].mxu0
    %v2665 = vpop.f32.mrb[0].mxu0
    %v2666 = vadd.f32 %v2598, %v2665
    %v2667 = vpop.f32.mrb[0].mxu0
    %2668 = vmatprep.mubr.bf16.mxu0 0
    %2669 = vmatmul.mubr.bf16.gmra.mrb[0].mxu0 %v2621
    %v2670 = vpop.f32.mrb[0].mxu0
    %v2671 = vadd.f32 %v2603, %v2670
    %v2672 = vpop.f32.mrb[0].mxu0
    %v2673 = vpop.f32.mrb[0].mxu0
    %v2674 = vpop.f32.mrb[0].mxu0
    %2675 = vdwg.mxu0
    %2676 = vst.msk [vmem:[%s7] sm:$0xff] %vm61, %v2663
    %2677 = vst.msk [vmem:[%s7 + $0x8] sm:$0xff] %vm61, %v2666
    %2678 = vst.msk [vmem:[%s7 + $0x10] sm:$0xff] %vm61, %v2671
    %v2679 = vld [vmem:[%s5] sm:$0xf]
    %v2680 = vld [vmem:[%s5 + $0x4] sm:$0xf]
    %v2681 = vld [vmem:[%s5 + $0x8] sm:$0xf]
    %v2682 = vpack.c.bf16 %v2456, %v2455
    %v2683 = vpack.c.bf16 %v2457, %v2457
    %v2684 = vld [vmem:[%s6] sm:$0xf]
    %v2685 = vld [vmem:[%s6 + $0x4] sm:$0xf]
    %v2686 = vld [vmem:[%s6 + $0x8] sm:$0xf]
    %v2687 = vpack.c.bf16 %v2529, %v2528
    %v2688 = vpack.c.bf16 %v2530, %v2530
    %v2692 = vunpack.c.l.b16 %v2684
    %v2693 = vunpack.c.l.b16 %v2685
    %v2694 = vunpack.c.l.b16 %v2686
    %v2695 = vpack.c.b16 %v2693, %v2692
    %v2696 = vpack.c.b16 %v2694, %v2694
    %vm2699 = vcmask 1046528
    %v2700 = vrot.slane %v2687, 1
    %v2701 = vrot.slane %v2688, 1
    %v2702 = vsel %vm2699, %v2700, %v2701
    %v2705 = vsel %vm2549, %v2695, 0
    %v2708 = vsel %vm2549, %v2696, 0
    %v2711 = vsel %vm2556, %v2701, 0
    %2713 = vmatprep.subr.bf16.mxu0 0
    %2714 = vmatpush1.bf16.msra.mxu0 %v2702
    %2715 = vmatprep.subr.bf16.mxu0 0
    %2716 = vmatpush1.bf16.msra.mxu0 %v2711
    %2717 = vmatprep.subr.bf16.mxu0 0
    %2718 = vmatpush1.bf16.msra.mxu0 0
    %2719 = vmatprep.subr.bf16.mxu0 0
    %2720 = vmatpush1.bf16.msra.mxu0 0
    %2721 = vmatprep.subr.bf16.mxu0 0
    %2722 = vmatpush1.bf16.msra.mxu0 0
    %2723 = vmatprep.subr.bf16.mxu0 0
    %2724 = vmatpush1.bf16.msra.mxu0 0
    %2725 = vmatprep.subr.bf16.mxu0 0
    %2726 = vmatpush1.bf16.msra.mxu0 0
    %2727 = vmatprep.subr.bf16.mxu0 0
    %2728 = vmatpush1.bf16.msra.mxu0 0
    %2729 = vmatprep.subr.bf16.mxu0 0
    %2730 = vmatpush1.bf16.msra.mxu0 0
    %2731 = vmatprep.subr.bf16.mxu0 0
    %2732 = vmatpush1.bf16.msra.mxu0 0
    %2733 = vmatprep.subr.bf16.mxu0 0
    %2734 = vmatpush1.bf16.msra.mxu0 0
    %2735 = vmatprep.subr.bf16.mxu0 0
    %2736 = vmatpush1.bf16.msra.mxu0 0
    %2737 = vmatprep.subr.bf16.mxu0 0
    %2738 = vmatpush1.bf16.msra.mxu0 0
    %2739 = vmatprep.subr.bf16.mxu0 0
    %2740 = vmatpush1.bf16.msra.mxu0 0
    %2741 = vmatprep.subr.bf16.mxu0 0
    %2742 = vmatpush1.bf16.msra.mxu0 0
    %2743 = vmatprep.subr.bf16.mxu0 0
    %2744 = vmatpush1.bf16.msra.mxu0 0
    %2745 = vmatprep.mubr.bf16.mxu0 0
    %2746 = vmatmul.mubr.bf16.gmra.mrb[0].mxu0 %v2705
    %v2747 = vpop.f32.mrb[0].mxu0
    %v2748 = vadd.f32 0.0, %v2747
    %v2749 = vpop.f32.mrb[0].mxu0
    %v2750 = vpop.f32.mrb[0].mxu0
    %v2751 = vadd.f32 0.0, %v2750
    %v2752 = vpop.f32.mrb[0].mxu0
    %2753 = vmatprep.mubr.bf16.mxu0 0
    %2754 = vmatmul.mubr.bf16.gmra.mrb[0].mxu0 %v2708
    %v2755 = vpop.f32.mrb[0].mxu0
    %v2756 = vadd.f32 0.0, %v2755
    %v2757 = vpop.f32.mrb[0].mxu0
    %v2758 = vpop.f32.mrb[0].mxu0
    %v2759 = vpop.f32.mrb[0].mxu0
    %2760 = vdwg.mxu0
    %v2764 = vunpack.c.l.b16 %v2679
    %v2765 = vunpack.c.l.b16 %v2680
    %v2766 = vunpack.c.l.b16 %v2681
    %v2767 = vpack.c.b16 %v2765, %v2764
    %v2768 = vpack.c.b16 %v2766, %v2766
    %vm2769 = vsmask.f32 6400
    %v2771 = vshrl.u32 %v2682, 16
    %v2773 = vrot.slane %v2771, 1
    %v2774 = vshll.u32 %v2682, 16
    %v2776 = vrot.slane %v2774, 2
    %v2777 = vor.u32 %v2773, %v2776
    %v2779 = vshrl.u32 %v2683, 16
    %v2781 = vrot.slane %v2779, 1
    %v2782 = vshll.u32 %v2683, 16
    %v2784 = vrot.slane %v2782, 2
    %v2785 = vor.u32 %v2781, %v2784
    %v2786 = vsel %vm2769, %v2777, %v2785
    %v2789 = vsel %vm2616, %v2767, 0
    %v2792 = vsel %vm2616, %v2768, 0
    %v2795 = vand.u32 %v2785, %v2624
    %2797 = vmatprep.subr.bf16.mxu0 0
    %2798 = vmatpush1.bf16.msra.mxu0 %v2786
    %2799 = vmatprep.subr.bf16.mxu0 0
    %2800 = vmatpush1.bf16.msra.mxu0 %v2795
    %2801 = vmatprep.subr.bf16.mxu0 0
    %2802 = vmatpush1.bf16.msra.mxu0 0
    %2803 = vmatprep.subr.bf16.mxu0 0
    %2804 = vmatpush1.bf16.msra.mxu0 0
    %2805 = vmatprep.subr.bf16.mxu0 0
    %2806 = vmatpush1.bf16.msra.mxu0 0
    %2807 = vmatprep.subr.bf16.mxu0 0
    %2808 = vmatpush1.bf16.msra.mxu0 0
    %2809 = vmatprep.subr.bf16.mxu0 0
    %2810 = vmatpush1.bf16.msra.mxu0 0
    %2811 = vmatprep.subr.bf16.mxu0 0
    %2812 = vmatpush1.bf16.msra.mxu0 0
    %2813 = vmatprep.subr.bf16.mxu0 0
    %2814 = vmatpush1.bf16.msra.mxu0 0
    %2815 = vmatprep.subr.bf16.mxu0 0
    %2816 = vmatpush1.bf16.msra.mxu0 0
    %2817 = vmatprep.subr.bf16.mxu0 0
    %2818 = vmatpush1.bf16.msra.mxu0 0
    %2819 = vmatprep.subr.bf16.mxu0 0
    %2820 = vmatpush1.bf16.msra.mxu0 0
    %2821 = vmatprep.subr.bf16.mxu0 0
    %2822 = vmatpush1.bf16.msra.mxu0 0
    %2823 = vmatprep.subr.bf16.mxu0 0
    %2824 = vmatpush1.bf16.msra.mxu0 0
    %2825 = vmatprep.subr.bf16.mxu0 0
    %2826 = vmatpush1.bf16.msra.mxu0 0
    %2827 = vmatprep.subr.bf16.mxu0 0
    %2828 = vmatpush1.bf16.msra.mxu0 0
    %2829 = vmatprep.mubr.bf16.mxu0 0
    %2830 = vmatmul.mubr.bf16.gmra.mrb[0].mxu0 %v2789
    %v2831 = vpop.f32.mrb[0].mxu0
    %v2832 = vadd.f32 %v2748, %v2831
    %v2833 = vpop.f32.mrb[0].mxu0
    %v2834 = vpop.f32.mrb[0].mxu0
    %v2835 = vadd.f32 %v2751, %v2834
    %v2836 = vpop.f32.mrb[0].mxu0
    %2837 = vmatprep.mubr.bf16.mxu0 0
    %2838 = vmatmul.mubr.bf16.gmra.mrb[0].mxu0 %v2792
    %v2839 = vpop.f32.mrb[0].mxu0
    %v2840 = vadd.f32 %v2756, %v2839
    %v2841 = vpop.f32.mrb[0].mxu0
    %v2842 = vpop.f32.mrb[0].mxu0
    %v2843 = vpop.f32.mrb[0].mxu0
    %2844 = vdwg.mxu0
    %2845 = vst.msk [vmem:[%s7 + $0x18] sm:$0xff] %vm61, %v2832
    %2846 = vst.msk [vmem:[%s7 + $0x20] sm:$0xff] %vm61, %v2835
    %2847 = vst.msk [vmem:[%s7 + $0x28] sm:$0xff] %vm61, %v2840
    // Predicated region
    $region34: #{generative_policy_forward.1} parent=1 // pred_check
      _
    $region35: #{generative_policy_forward.1} parent=1 // pred_check_branch
      %2849 = sbr.rel (0) target = $region37
    $region36: #{generative_policy_forward.1} parent=1 // pred_region
      _
    $region37: #{generative_policy_forward.1} parent=1 // pred_fallthru
      _
    // Predicated region
    $region38: #{generative_policy_forward.1} parent=1 // pred_check
      _
    $region39: #{generative_policy_forward.1} parent=1 // pred_check_branch
      %2851 = sbr.rel (0) target = $region41
    $region40: #{generative_policy_forward.1} parent=1 // pred_region
      _
    $region41: #{generative_policy_forward.1} parent=1 // pred_fallthru
      _
    %2852 = vsyncpa [#allocation8], 1

</llo_original>
